<compile_context>
chip_gen: v7x
topology: tpu7x:2x2x1
jax: 0.10.0
libtpu: 0.0.40
codegen_flags: <defaults>
</compile_context>

<pallas_src>
import math
from functools import partial

import numpy as np
import jax
import jax.numpy as jnp
from jax import lax
from jax.experimental import pallas as pl
from jax.experimental.pallas import tpu as pltpu


def refine_kernel(x_ref, mask_ref, w1_ref, w2_ref, ca1_ref, ca2_ref, wlast_ref,
                  o_ref, stk_ref, res_ref, h_ref, *, H, W, C, num_cab):
    """Fused per-batch Refine forward, channel-major (C, N) compute.

    x_ref:     (1, C, N)           channel-major input block (N = H*W)
    mask_ref:  (9, N)              per-tap boundary masks (1.0 = in-bounds)
    w1/w2_ref: (num_cab, C, 9*C)   fused conv weights  W[c_out, t*C + c_in]
    ca1_ref:   (num_cab, C, C//r)  CALayer squeeze weight (transposed)
    ca2_ref:   (num_cab, C, C//r)  CALayer excite weight
    wlast_ref: (C, 9*C)            final conv fused weights
    o_ref:     (1, C, N)           channel-major output block (lane-dense)
    stk_ref:   (9*C, N) VMEM       stacked shifted/masked conv input slabs
    res_ref:   (C, N)   VMEM       running residual / block input
    h_ref:     (C, N)   VMEM       conv intermediate (h1 then h2)
    """
    N = H * W

    def conv3x3(src_ref, w_cat, dst_ref, relu):
        # 3x3 SAME conv as: 9 lane-rolled/masked copies of the (C, N) slab
        # stacked along sublanes, then a single (C, 9C) @ (9C, N) MXU matmul.
        x_cn = src_ref[...]                              # (C, N)
        for t in range(9):
            dh, dw = divmod(t, 3)
            off = (dh - 1) * W + (dw - 1)                # source flat offset
            if off == 0:
                shifted = x_cn                           # center tap: no shift/mask
            else:
                rolled = pltpu.roll(x_cn, shift=(-off) % N, axis=1)
                shifted = rolled * mask_ref[t:t + 1, :]  # zero wrap-around rows/cols
            stk_ref[t * C:(t + 1) * C, :] = shifted      # sublane-aligned store
        acc = jnp.dot(w_cat, stk_ref[...], preferred_element_type=jnp.float32)
        if relu:
            acc = jnp.maximum(acc, 0.0)
        dst_ref[...] = acc

    # Running residual starts as the input (already channel-major, no transpose).
    res_ref[...] = x_ref[0]

    def cab_body(i, carry):
        # Refine_Block body: conv -> ReLU -> conv.
        conv3x3(res_ref, w1_ref[i], h_ref, relu=True)
        conv3x3(h_ref, w2_ref[i], h_ref, relu=False)
        h2 = h_ref[...]                                              # (C, N)
        # CALayer: global average pool + squeeze/excite sigmoid gate.
        y = jnp.mean(h2, axis=1, keepdims=True)                      # (C, 1)
        # squeeze: y1[j] = relu(sum_c ca1[j, c] * y[c])   (sublane reduce)
        y1 = jnp.maximum(jnp.sum(ca1_ref[i] * y, axis=0, keepdims=True), 0.0)  # (1, Cr)
        # excite: z[c] = sum_j ca2[c, j] * y1[j]           (lane reduce)
        z = jnp.sum(ca2_ref[i] * y1, axis=1, keepdims=True)          # (C, 1)
        gate = 1.0 / (1.0 + jnp.exp(-z))                             # sigmoid
        # Channel attention + block residual.
        res_ref[...] = h2 * gate + res_ref[...]
        return carry

    lax.fori_loop(0, num_cab, cab_body, 0)

    # Final conv + outer residual, stored channel-major (lane-dense, no transpose).
    conv3x3(res_ref, wlast_ref[...], h_ref, relu=False)
    o_ref[0] = (h_ref[...] + x_ref[0]).astype(o_ref.dtype)


def refine_forward(x, params, num_cab, reduction):
    """x: (B, C, H, W) NCHW.  Returns (B, C, H, W), matching Refine.forward."""
    B, C, H, W = x.shape
    N = H * W
    Cr = C // reduction

    def pack_conv(w):
        # (C_out, C_in, 3, 3) -> (C_out, 9*C_in) with column index t*C_in + c_in,
        # t = dh*3 + dw — matches the stacked-slab layout in the kernel.
        return jnp.asarray(w).transpose(0, 2, 3, 1).reshape(C, 9 * C)

    w1 = jnp.stack([pack_conv(params["blocks"][i]["w1"]) for i in range(num_cab)])
    w2 = jnp.stack([pack_conv(params["blocks"][i]["w2"]) for i in range(num_cab)])
    # ca1 stored transposed (C, Cr): y1[j] = sum_c ca1_t[c, j] * y[c]
    ca1 = jnp.stack([params["blocks"][i]["ca1"][:, :, 0, 0].T
                     for i in range(num_cab)])                  # (num_cab, C, Cr)
    # ca2 stored as-is (C, Cr):     z[c]  = sum_j ca2[c, j] * y1[j]
    ca2 = jnp.stack([params["blocks"][i]["ca2"][:, :, 0, 0]
                     for i in range(num_cab)])                  # (num_cab, C, Cr)
    wlast = pack_conv(params["wlast"])                          # (C, 9*C)

    # Per-tap boundary masks over the flat spatial index (built once, host-side).
    n_idx = np.arange(N)
    h_idx, w_idx = n_idx // W, n_idx % W
    masks = np.stack([
        (((h_idx + dh - 1) >= 0) & ((h_idx + dh - 1) < H) &
         ((w_idx + dw - 1) >= 0) & ((w_idx + dw - 1) < W)).astype(np.float32)
        for dh in range(3) for dw in range(3)
    ])                                                          # (9, N)
    masks = jnp.asarray(masks)

    x_cn = x.reshape(B, C, N)   # free reshape, channel-major (lane-dense N)

    kernel = partial(refine_kernel, H=H, W=W, C=C, num_cab=num_cab)

    out = pl.pallas_call(
        kernel,
        out_shape=jax.ShapeDtypeStruct((B, C, N), jnp.float32),
        grid=(B,),
        in_specs=[
            pl.BlockSpec((1, C, N), lambda b: (b, 0, 0)),
            pl.BlockSpec((9, N), lambda b: (0, 0)),
            pl.BlockSpec((num_cab, C, 9 * C), lambda b: (0, 0, 0)),
            pl.BlockSpec((num_cab, C, 9 * C), lambda b: (0, 0, 0)),
            pl.BlockSpec((num_cab, C, Cr), lambda b: (0, 0, 0)),
            pl.BlockSpec((num_cab, C, Cr), lambda b: (0, 0, 0)),
            pl.BlockSpec((C, 9 * C), lambda b: (0, 0)),
        ],
        out_specs=pl.BlockSpec((1, C, N), lambda b: (b, 0, 0)),
        scratch_shapes=[
            pltpu.VMEM((9 * C, N), jnp.float32),   # stacked shifted slabs
            pltpu.VMEM((C, N), jnp.float32),       # running residual
            pltpu.VMEM((C, N), jnp.float32),       # conv intermediate
        ],
        compiler_params=pltpu.CompilerParams(
            dimension_semantics=("parallel",),
            # explicit budget (safe on v5e/v6e/v7x); revisit if H*W/num_cab grow.
            vmem_limit_bytes=32 * 1024 * 1024,
        ),
    )(x_cn, masks, w1, w2, ca1, ca2, wlast)

    return out.reshape(B, C, H, W)


def reference_forward(x, params, num_cab, reduction):
    """Plain-JAX NCHW reference mirroring the PyTorch forward (act = ReLU)."""
    def conv3(inp, w):
        return jax.lax.conv_general_dilated(inp, w, (1, 1), "SAME")

    res = x
    for i in range(num_cab):
        blk = params["blocks"][i]
        h = jax.nn.relu(conv3(res, blk["w1"]))
        h = conv3(h, blk["w2"])
        y = jnp.mean(h, axis=(2, 3), keepdims=True)
        y = jax.nn.relu(jax.lax.conv_general_dilated(y, blk["ca1"], (1, 1), "VALID"))
        y = jax.nn.sigmoid(jax.lax.conv_general_dilated(y, blk["ca2"], (1, 1), "VALID"))
        res = h * y + res
    return conv3(res, params["wlast"]) + x


def init_params(key, C, num_cab, reduction):
    """Deterministic init with Conv2d-like fan-out scaling (bias=False)."""
    keys = jax.random.split(key, 4 * num_cab + 1)
    std3 = math.sqrt(2.0 / (9 * C))
    params = {"blocks": []}
    for i in range(num_cab):
        k1, k2, k3, k4 = keys[4 * i:4 * i + 4]
        params["blocks"].append({
            "w1": std3 * jax.random.normal(k1, (C, C, 3, 3), jnp.float32),
            "w2": std3 * jax.random.normal(k2, (C, C, 3, 3), jnp.float32),
            "ca1": math.sqrt(2.0 / C)
                   * jax.random.normal(k3, (C // reduction, C, 1, 1), jnp.float32),
            "ca2": math.sqrt(2.0 / (C // reduction))
                   * jax.random.normal(k4, (C, C // reduction, 1, 1), jnp.float32),
        })
    params["wlast"] = std3 * jax.random.normal(keys[-1], (C, C, 3, 3), jnp.float32)
    return params


if __name__ == "__main__":
    B, C, H, W = 2, 32, 16, 16
    num_cab, reduction = 2, 4

    key = jax.random.PRNGKey(0)
    kx, kp = jax.random.split(key)
    x = jax.random.normal(kx, (B, C, H, W), jnp.float32)
    params = init_params(kp, C, num_cab, reduction)

    out = jax.block_until_ready(refine_forward(x, params, num_cab, reduction))
    ref = jax.block_until_ready(reference_forward(x, params, num_cab, reduction))

    assert out.shape == (B, C, H, W), out.shape
    max_err = float(jnp.max(jnp.abs(out - ref)))
    assert jnp.allclose(out, ref, atol=1e-3, rtol=1e-3), max_err

    print("KERNEL_OK")
</pallas_src>

<mosaic_0001>
module attributes {stable_mosaic.version = 11 : i64} {
  func.func @refine_kernel(%arg0: i32, %arg1: memref<1x32x256xf32, #tpu.memory_space<vmem>>, %arg2: memref<9x256xf32, #tpu.memory_space<vmem>>, %arg3: memref<2x32x288xf32, #tpu.memory_space<vmem>>, %arg4: memref<2x32x288xf32, #tpu.memory_space<vmem>>, %arg5: memref<2x32x8xf32, #tpu.memory_space<vmem>>, %arg6: memref<2x32x8xf32, #tpu.memory_space<vmem>>, %arg7: memref<32x288xf32, #tpu.memory_space<vmem>>, %arg8: memref<1x32x256xf32, #tpu.memory_space<vmem>>, %arg9: memref<288x256xf32, #tpu.memory_space<vmem>>, %arg10: memref<32x256xf32, #tpu.memory_space<vmem>>, %arg11: memref<32x256xf32, #tpu.memory_space<vmem>>) attributes {dimension_semantics = [#tpu.dimension_semantics<parallel>], iteration_bounds = array<i64: 2>, scalar_prefetch = 0 : i64, scratch_operands = 3 : i64, tpu.core_type = #tpu.core_type<tc>, window_params = [{transform_indices = @transform_0, window_bounds = array<i64: 1, 32, 256>}, {pipeline_mode = #tpu.pipeline_mode<synchronous>, transform_indices = @transform_1, window_bounds = array<i64: 9, 256>}, {pipeline_mode = #tpu.pipeline_mode<synchronous>, transform_indices = @transform_2, window_bounds = array<i64: 2, 32, 288>}, {pipeline_mode = #tpu.pipeline_mode<synchronous>, transform_indices = @transform_3, window_bounds = array<i64: 2, 32, 288>}, {pipeline_mode = #tpu.pipeline_mode<synchronous>, transform_indices = @transform_4, window_bounds = array<i64: 2, 32, 8>}, {pipeline_mode = #tpu.pipeline_mode<synchronous>, transform_indices = @transform_5, window_bounds = array<i64: 2, 32, 8>}, {pipeline_mode = #tpu.pipeline_mode<synchronous>, transform_indices = @transform_6, window_bounds = array<i64: 32, 288>}, {transform_indices = @transform_7, window_bounds = array<i64: 1, 32, 256>}]} {
    %c0 = arith.constant 0 : index
    %c0_0 = arith.constant 0 : index
    %c0_1 = arith.constant 0 : index
    %0 = vector.load %arg1[%c0, %c0_0, %c0_1] : memref<1x32x256xf32, #tpu.memory_space<vmem>>, vector<1x32x256xf32>
    %1 = vector.shape_cast %0 : vector<1x32x256xf32> to vector<32x256xf32>
    %c0_2 = arith.constant 0 : index
    %c0_3 = arith.constant 0 : index
    %2 = vector.load %arg10[%c0_2, %c0_3] : memref<32x256xf32, #tpu.memory_space<vmem>>, vector<32x256xf32>
    tpu.vector_store %arg10[%c0_2, %c0_3], %1 {strides = array<i32>} : memref<32x256xf32, #tpu.memory_space<vmem>>, vector<32x256xf32>,
    %c0_i32 = arith.constant 0 : i32
    %c2_i32 = arith.constant 2 : i32
    %3 = arith.addi %c0_i32, %c2_i32 : i32
    %c1_i32 = arith.constant 1 : i32
    scf.for %arg12 = %c0_i32 to %3 step %c1_i32  : i32 {
      %57 = arith.index_cast %arg12 : i32 to index
      %c0_41 = arith.constant 0 : index
      %c0_42 = arith.constant 0 : index
      %58 = vector.load %arg3[%57, %c0_41, %c0_42] : memref<2x32x288xf32, #tpu.memory_space<vmem>>, vector<1x32x288xf32>
      %59 = vector.shape_cast %58 : vector<1x32x288xf32> to vector<32x288xf32>
      %c0_43 = arith.constant 0 : index
      %c0_44 = arith.constant 0 : index
      %60 = vector.load %arg10[%c0_43, %c0_44] : memref<32x256xf32, #tpu.memory_space<vmem>>, vector<32x256xf32>
      %c17_i32_45 = arith.constant 17 : i32
      %61 = tpu.dynamic_rotate %60 by %c17_i32_45 dim 1 : vector<32x256xf32>, i32 -> vector<32x256xf32>
      %c0_46 = arith.constant 0 : index
      %c0_47 = arith.constant 0 : index
      %62 = vector.load %arg2[%c0_46, %c0_47] : memref<9x256xf32, #tpu.memory_space<vmem>>, vector<1x256xf32>
      %63 = vector.broadcast %62 : vector<1x256xf32> to vector<32x256xf32>
      %64 = arith.mulf %61, %63 : vector<32x256xf32>
      %c0_48 = arith.constant 0 : index
      %c0_49 = arith.constant 0 : index
      %65 = vector.load %arg9[%c0_48, %c0_49] : memref<288x256xf32, #tpu.memory_space<vmem>>, vector<32x256xf32>
      tpu.vector_store %arg9[%c0_48, %c0_49], %64 {strides = array<i32>} : memref<288x256xf32, #tpu.memory_space<vmem>>, vector<32x256xf32>,
      %c16_i32_50 = arith.constant 16 : i32
      %66 = tpu.dynamic_rotate %60 by %c16_i32_50 dim 1 : vector<32x256xf32>, i32 -> vector<32x256xf32>
      %c1_51 = arith.constant 1 : index
      %c0_52 = arith.constant 0 : index
      %67 = vector.load %arg2[%c1_51, %c0_52] : memref<9x256xf32, #tpu.memory_space<vmem>>, vector<1x256xf32>
      %68 = vector.broadcast %67 : vector<1x256xf32> to vector<32x256xf32>
      %69 = arith.mulf %66, %68 : vector<32x256xf32>
      %c32_53 = arith.constant 32 : index
      %c0_54 = arith.constant 0 : index
      %70 = vector.load %arg9[%c32_53, %c0_54] : memref<288x256xf32, #tpu.memory_space<vmem>>, vector<32x256xf32>
      tpu.vector_store %arg9[%c32_53, %c0_54], %69 {strides = array<i32>} : memref<288x256xf32, #tpu.memory_space<vmem>>, vector<32x256xf32>,
      %c15_i32_55 = arith.constant 15 : i32
      %71 = tpu.dynamic_rotate %60 by %c15_i32_55 dim 1 : vector<32x256xf32>, i32 -> vector<32x256xf32>
      %c2_56 = arith.constant 2 : index
      %c0_57 = arith.constant 0 : index
      %72 = vector.load %arg2[%c2_56, %c0_57] : memref<9x256xf32, #tpu.memory_space<vmem>>, vector<1x256xf32>
      %73 = vector.broadcast %72 : vector<1x256xf32> to vector<32x256xf32>
      %74 = arith.mulf %71, %73 : vector<32x256xf32>
      %c64_58 = arith.constant 64 : index
      %c0_59 = arith.constant 0 : index
      %75 = vector.load %arg9[%c64_58, %c0_59] : memref<288x256xf32, #tpu.memory_space<vmem>>, vector<32x256xf32>
      tpu.vector_store %arg9[%c64_58, %c0_59], %74 {strides = array<i32>} : memref<288x256xf32, #tpu.memory_space<vmem>>, vector<32x256xf32>,
      %c1_i32_60 = arith.constant 1 : i32
      %76 = tpu.dynamic_rotate %60 by %c1_i32_60 dim 1 : vector<32x256xf32>, i32 -> vector<32x256xf32>
      %c3_61 = arith.constant 3 : index
      %c0_62 = arith.constant 0 : index
      %77 = vector.load %arg2[%c3_61, %c0_62] : memref<9x256xf32, #tpu.memory_space<vmem>>, vector<1x256xf32>
      %78 = vector.broadcast %77 : vector<1x256xf32> to vector<32x256xf32>
      %79 = arith.mulf %76, %78 : vector<32x256xf32>
      %c96_63 = arith.constant 96 : index
      %c0_64 = arith.constant 0 : index
      %80 = vector.load %arg9[%c96_63, %c0_64] : memref<288x256xf32, #tpu.memory_space<vmem>>, vector<32x256xf32>
      tpu.vector_store %arg9[%c96_63, %c0_64], %79 {strides = array<i32>} : memref<288x256xf32, #tpu.memory_space<vmem>>, vector<32x256xf32>,
      %c128_65 = arith.constant 128 : index
      %c0_66 = arith.constant 0 : index
      %81 = vector.load %arg9[%c128_65, %c0_66] : memref<288x256xf32, #tpu.memory_space<vmem>>, vector<32x256xf32>
      tpu.vector_store %arg9[%c128_65, %c0_66], %60 {strides = array<i32>} : memref<288x256xf32, #tpu.memory_space<vmem>>, vector<32x256xf32>,
      %c255_i32_67 = arith.constant 255 : i32
      %82 = tpu.dynamic_rotate %60 by %c255_i32_67 dim 1 : vector<32x256xf32>, i32 -> vector<32x256xf32>
      %c5_68 = arith.constant 5 : index
      %c0_69 = arith.constant 0 : index
      %83 = vector.load %arg2[%c5_68, %c0_69] : memref<9x256xf32, #tpu.memory_space<vmem>>, vector<1x256xf32>
      %84 = vector.broadcast %83 : vector<1x256xf32> to vector<32x256xf32>
      %85 = arith.mulf %82, %84 : vector<32x256xf32>
      %c160_70 = arith.constant 160 : index
      %c0_71 = arith.constant 0 : index
      %86 = vector.load %arg9[%c160_70, %c0_71] : memref<288x256xf32, #tpu.memory_space<vmem>>, vector<32x256xf32>
      tpu.vector_store %arg9[%c160_70, %c0_71], %85 {strides = array<i32>} : memref<288x256xf32, #tpu.memory_space<vmem>>, vector<32x256xf32>,
      %c241_i32_72 = arith.constant 241 : i32
      %87 = tpu.dynamic_rotate %60 by %c241_i32_72 dim 1 : vector<32x256xf32>, i32 -> vector<32x256xf32>
      %c6_73 = arith.constant 6 : index
      %c0_74 = arith.constant 0 : index
      %88 = vector.load %arg2[%c6_73, %c0_74] : memref<9x256xf32, #tpu.memory_space<vmem>>, vector<1x256xf32>
      %89 = vector.broadcast %88 : vector<1x256xf32> to vector<32x256xf32>
      %90 = arith.mulf %87, %89 : vector<32x256xf32>
      %c192_75 = arith.constant 192 : index
      %c0_76 = arith.constant 0 : index
      %91 = vector.load %arg9[%c192_75, %c0_76] : memref<288x256xf32, #tpu.memory_space<vmem>>, vector<32x256xf32>
      tpu.vector_store %arg9[%c192_75, %c0_76], %90 {strides = array<i32>} : memref<288x256xf32, #tpu.memory_space<vmem>>, vector<32x256xf32>,
      %c240_i32_77 = arith.constant 240 : i32
      %92 = tpu.dynamic_rotate %60 by %c240_i32_77 dim 1 : vector<32x256xf32>, i32 -> vector<32x256xf32>
      %c7_78 = arith.constant 7 : index
      %c0_79 = arith.constant 0 : index
      %93 = vector.load %arg2[%c7_78, %c0_79] : memref<9x256xf32, #tpu.memory_space<vmem>>, vector<1x256xf32>
      %94 = vector.broadcast %93 : vector<1x256xf32> to vector<32x256xf32>
      %95 = arith.mulf %92, %94 : vector<32x256xf32>
      %c224_80 = arith.constant 224 : index
      %c0_81 = arith.constant 0 : index
      %96 = vector.load %arg9[%c224_80, %c0_81] : memref<288x256xf32, #tpu.memory_space<vmem>>, vector<32x256xf32>
      tpu.vector_store %arg9[%c224_80, %c0_81], %95 {strides = array<i32>} : memref<288x256xf32, #tpu.memory_space<vmem>>, vector<32x256xf32>,
      %c239_i32_82 = arith.constant 239 : i32
      %97 = tpu.dynamic_rotate %60 by %c239_i32_82 dim 1 : vector<32x256xf32>, i32 -> vector<32x256xf32>
      %c8_83 = arith.constant 8 : index
      %c0_84 = arith.constant 0 : index
      %98 = vector.load %arg2[%c8_83, %c0_84] : memref<9x256xf32, #tpu.memory_space<vmem>>, vector<1x256xf32>
      %99 = vector.broadcast %98 : vector<1x256xf32> to vector<32x256xf32>
      %100 = arith.mulf %97, %99 : vector<32x256xf32>
      %c256_85 = arith.constant 256 : index
      %c0_86 = arith.constant 0 : index
      %101 = vector.load %arg9[%c256_85, %c0_86] : memref<288x256xf32, #tpu.memory_space<vmem>>, vector<32x256xf32>
      tpu.vector_store %arg9[%c256_85, %c0_86], %100 {strides = array<i32>} : memref<288x256xf32, #tpu.memory_space<vmem>>, vector<32x256xf32>,
      %c0_87 = arith.constant 0 : index
      %c0_88 = arith.constant 0 : index
      %102 = vector.load %arg9[%c0_87, %c0_88] : memref<288x256xf32, #tpu.memory_space<vmem>>, vector<288x256xf32>
      %cst_89 = arith.constant dense<0.000000e+00> : vector<32x256xf32>
      %103 = tpu.matmul %59, %102, %cst_89 {dimension_numbers = #tpu.dot_dimension_numbers<[1], [0], [0], [1], [0, 0, 1, 1], [], []>} : vector<32x288xf32>, vector<288x256xf32>, vector<32x256xf32> -> vector<32x256xf32>
      %cst_90 = arith.constant 0.000000e+00 : f32
      %104 = vector.broadcast %cst_90 : f32 to vector<32x256xf32>
      %105 = arith.maximumf %103, %104 : vector<32x256xf32>
      %c0_91 = arith.constant 0 : index
      %c0_92 = arith.constant 0 : index
      %106 = vector.load %arg11[%c0_91, %c0_92] : memref<32x256xf32, #tpu.memory_space<vmem>>, vector<32x256xf32>
      tpu.vector_store %arg11[%c0_91, %c0_92], %105 {strides = array<i32>} : memref<32x256xf32, #tpu.memory_space<vmem>>, vector<32x256xf32>,
      %107 = arith.index_cast %arg12 : i32 to index
      %c0_93 = arith.constant 0 : index
      %c0_94 = arith.constant 0 : index
      %108 = vector.load %arg4[%107, %c0_93, %c0_94] : memref<2x32x288xf32, #tpu.memory_space<vmem>>, vector<1x32x288xf32>
      %109 = vector.shape_cast %108 : vector<1x32x288xf32> to vector<32x288xf32>
      %c0_95 = arith.constant 0 : index
      %c0_96 = arith.constant 0 : index
      %110 = vector.load %arg11[%c0_95, %c0_96] : memref<32x256xf32, #tpu.memory_space<vmem>>, vector<32x256xf32>
      %c17_i32_97 = arith.constant 17 : i32
      %111 = tpu.dynamic_rotate %110 by %c17_i32_97 dim 1 : vector<32x256xf32>, i32 -> vector<32x256xf32>
      %c0_98 = arith.constant 0 : index
      %c0_99 = arith.constant 0 : index
      %112 = vector.load %arg2[%c0_98, %c0_99] : memref<9x256xf32, #tpu.memory_space<vmem>>, vector<1x256xf32>
      %113 = vector.broadcast %112 : vector<1x256xf32> to vector<32x256xf32>
      %114 = arith.mulf %111, %113 : vector<32x256xf32>
      %c0_100 = arith.constant 0 : index
      %c0_101 = arith.constant 0 : index
      %115 = vector.load %arg9[%c0_100, %c0_101] : memref<288x256xf32, #tpu.memory_space<vmem>>, vector<32x256xf32>
      tpu.vector_store %arg9[%c0_100, %c0_101], %114 {strides = array<i32>} : memref<288x256xf32, #tpu.memory_space<vmem>>, vector<32x256xf32>,
      %c16_i32_102 = arith.constant 16 : i32
      %116 = tpu.dynamic_rotate %110 by %c16_i32_102 dim 1 : vector<32x256xf32>, i32 -> vector<32x256xf32>
      %c1_103 = arith.constant 1 : index
      %c0_104 = arith.constant 0 : index
      %117 = vector.load %arg2[%c1_103, %c0_104] : memref<9x256xf32, #tpu.memory_space<vmem>>, vector<1x256xf32>
      %118 = vector.broadcast %117 : vector<1x256xf32> to vector<32x256xf32>
      %119 = arith.mulf %116, %118 : vector<32x256xf32>
      %c32_105 = arith.constant 32 : index
      %c0_106 = arith.constant 0 : index
      %120 = vector.load %arg9[%c32_105, %c0_106] : memref<288x256xf32, #tpu.memory_space<vmem>>, vector<32x256xf32>
      tpu.vector_store %arg9[%c32_105, %c0_106], %119 {strides = array<i32>} : memref<288x256xf32, #tpu.memory_space<vmem>>, vector<32x256xf32>,
      %c15_i32_107 = arith.constant 15 : i32
      %121 = tpu.dynamic_rotate %110 by %c15_i32_107 dim 1 : vector<32x256xf32>, i32 -> vector<32x256xf32>
      %c2_108 = arith.constant 2 : index
      %c0_109 = arith.constant 0 : index
      %122 = vector.load %arg2[%c2_108, %c0_109] : memref<9x256xf32, #tpu.memory_space<vmem>>, vector<1x256xf32>
      %123 = vector.broadcast %122 : vector<1x256xf32> to vector<32x256xf32>
      %124 = arith.mulf %121, %123 : vector<32x256xf32>
      %c64_110 = arith.constant 64 : index
      %c0_111 = arith.constant 0 : index
      %125 = vector.load %arg9[%c64_110, %c0_111] : memref<288x256xf32, #tpu.memory_space<vmem>>, vector<32x256xf32>
      tpu.vector_store %arg9[%c64_110, %c0_111], %124 {strides = array<i32>} : memref<288x256xf32, #tpu.memory_space<vmem>>, vector<32x256xf32>,
      %c1_i32_112 = arith.constant 1 : i32
      %126 = tpu.dynamic_rotate %110 by %c1_i32_112 dim 1 : vector<32x256xf32>, i32 -> vector<32x256xf32>
      %c3_113 = arith.constant 3 : index
      %c0_114 = arith.constant 0 : index
      %127 = vector.load %arg2[%c3_113, %c0_114] : memref<9x256xf32, #tpu.memory_space<vmem>>, vector<1x256xf32>
      %128 = vector.broadcast %127 : vector<1x256xf32> to vector<32x256xf32>
      %129 = arith.mulf %126, %128 : vector<32x256xf32>
      %c96_115 = arith.constant 96 : index
      %c0_116 = arith.constant 0 : index
      %130 = vector.load %arg9[%c96_115, %c0_116] : memref<288x256xf32, #tpu.memory_space<vmem>>, vector<32x256xf32>
      tpu.vector_store %arg9[%c96_115, %c0_116], %129 {strides = array<i32>} : memref<288x256xf32, #tpu.memory_space<vmem>>, vector<32x256xf32>,
      %c128_117 = arith.constant 128 : index
      %c0_118 = arith.constant 0 : index
      %131 = vector.load %arg9[%c128_117, %c0_118] : memref<288x256xf32, #tpu.memory_space<vmem>>, vector<32x256xf32>
      tpu.vector_store %arg9[%c128_117, %c0_118], %110 {strides = array<i32>} : memref<288x256xf32, #tpu.memory_space<vmem>>, vector<32x256xf32>,
      %c255_i32_119 = arith.constant 255 : i32
      %132 = tpu.dynamic_rotate %110 by %c255_i32_119 dim 1 : vector<32x256xf32>, i32 -> vector<32x256xf32>
      %c5_120 = arith.constant 5 : index
      %c0_121 = arith.constant 0 : index
      %133 = vector.load %arg2[%c5_120, %c0_121] : memref<9x256xf32, #tpu.memory_space<vmem>>, vector<1x256xf32>
      %134 = vector.broadcast %133 : vector<1x256xf32> to vector<32x256xf32>
      %135 = arith.mulf %132, %134 : vector<32x256xf32>
      %c160_122 = arith.constant 160 : index
      %c0_123 = arith.constant 0 : index
      %136 = vector.load %arg9[%c160_122, %c0_123] : memref<288x256xf32, #tpu.memory_space<vmem>>, vector<32x256xf32>
      tpu.vector_store %arg9[%c160_122, %c0_123], %135 {strides = array<i32>} : memref<288x256xf32, #tpu.memory_space<vmem>>, vector<32x256xf32>,
      %c241_i32_124 = arith.constant 241 : i32
      %137 = tpu.dynamic_rotate %110 by %c241_i32_124 dim 1 : vector<32x256xf32>, i32 -> vector<32x256xf32>
      %c6_125 = arith.constant 6 : index
      %c0_126 = arith.constant 0 : index
      %138 = vector.load %arg2[%c6_125, %c0_126] : memref<9x256xf32, #tpu.memory_space<vmem>>, vector<1x256xf32>
      %139 = vector.broadcast %138 : vector<1x256xf32> to vector<32x256xf32>
      %140 = arith.mulf %137, %139 : vector<32x256xf32>
      %c192_127 = arith.constant 192 : index
      %c0_128 = arith.constant 0 : index
      %141 = vector.load %arg9[%c192_127, %c0_128] : memref<288x256xf32, #tpu.memory_space<vmem>>, vector<32x256xf32>
      tpu.vector_store %arg9[%c192_127, %c0_128], %140 {strides = array<i32>} : memref<288x256xf32, #tpu.memory_space<vmem>>, vector<32x256xf32>,
      %c240_i32_129 = arith.constant 240 : i32
      %142 = tpu.dynamic_rotate %110 by %c240_i32_129 dim 1 : vector<32x256xf32>, i32 -> vector<32x256xf32>
      %c7_130 = arith.constant 7 : index
      %c0_131 = arith.constant 0 : index
      %143 = vector.load %arg2[%c7_130, %c0_131] : memref<9x256xf32, #tpu.memory_space<vmem>>, vector<1x256xf32>
      %144 = vector.broadcast %143 : vector<1x256xf32> to vector<32x256xf32>
      %145 = arith.mulf %142, %144 : vector<32x256xf32>
      %c224_132 = arith.constant 224 : index
      %c0_133 = arith.constant 0 : index
      %146 = vector.load %arg9[%c224_132, %c0_133] : memref<288x256xf32, #tpu.memory_space<vmem>>, vector<32x256xf32>
      tpu.vector_store %arg9[%c224_132, %c0_133], %145 {strides = array<i32>} : memref<288x256xf32, #tpu.memory_space<vmem>>, vector<32x256xf32>,
      %c239_i32_134 = arith.constant 239 : i32
      %147 = tpu.dynamic_rotate %110 by %c239_i32_134 dim 1 : vector<32x256xf32>, i32 -> vector<32x256xf32>
      %c8_135 = arith.constant 8 : index
      %c0_136 = arith.constant 0 : index
      %148 = vector.load %arg2[%c8_135, %c0_136] : memref<9x256xf32, #tpu.memory_space<vmem>>, vector<1x256xf32>
      %149 = vector.broadcast %148 : vector<1x256xf32> to vector<32x256xf32>
      %150 = arith.mulf %147, %149 : vector<32x256xf32>
      %c256_137 = arith.constant 256 : index
      %c0_138 = arith.constant 0 : index
      %151 = vector.load %arg9[%c256_137, %c0_138] : memref<288x256xf32, #tpu.memory_space<vmem>>, vector<32x256xf32>
      tpu.vector_store %arg9[%c256_137, %c0_138], %150 {strides = array<i32>} : memref<288x256xf32, #tpu.memory_space<vmem>>, vector<32x256xf32>,
      %c0_139 = arith.constant 0 : index
      %c0_140 = arith.constant 0 : index
      %152 = vector.load %arg9[%c0_139, %c0_140] : memref<288x256xf32, #tpu.memory_space<vmem>>, vector<288x256xf32>
      %cst_141 = arith.constant dense<0.000000e+00> : vector<32x256xf32>
      %153 = tpu.matmul %109, %152, %cst_141 {dimension_numbers = #tpu.dot_dimension_numbers<[1], [0], [0], [1], [0, 0, 1, 1], [], []>} : vector<32x288xf32>, vector<288x256xf32>, vector<32x256xf32> -> vector<32x256xf32>
      %c0_142 = arith.constant 0 : index
      %c0_143 = arith.constant 0 : index
      %154 = vector.load %arg11[%c0_142, %c0_143] : memref<32x256xf32, #tpu.memory_space<vmem>>, vector<32x256xf32>
      tpu.vector_store %arg11[%c0_142, %c0_143], %153 {strides = array<i32>} : memref<32x256xf32, #tpu.memory_space<vmem>>, vector<32x256xf32>,
      %c0_144 = arith.constant 0 : index
      %c0_145 = arith.constant 0 : index
      %155 = vector.load %arg11[%c0_144, %c0_145] : memref<32x256xf32, #tpu.memory_space<vmem>>, vector<32x256xf32>
      %cst_146 = arith.constant dense<0.000000e+00> : vector<32xf32>
      %156 = vector.multi_reduction <add>, %155, %cst_146 [1] : vector<32x256xf32> to vector<32xf32>
      %157 = vector.shape_cast %156 : vector<32xf32> to vector<32x1xf32>
      %cst_147 = arith.constant 2.560000e+02 : f32
      %158 = vector.broadcast %cst_147 : f32 to vector<32x1xf32>
      %159 = arith.divf %157, %158 : vector<32x1xf32>
      %160 = arith.index_cast %arg12 : i32 to index
      %c0_148 = arith.constant 0 : index
      %c0_149 = arith.constant 0 : index
      %161 = vector.load %arg5[%160, %c0_148, %c0_149] : memref<2x32x8xf32, #tpu.memory_space<vmem>>, vector<1x32x8xf32>
      %162 = vector.shape_cast %161 : vector<1x32x8xf32> to vector<32x8xf32>
      %163 = vector.broadcast %159 : vector<32x1xf32> to vector<32x8xf32>
      %164 = arith.mulf %162, %163 : vector<32x8xf32>
      %cst_150 = arith.constant dense<0.000000e+00> : vector<8xf32>
      %165 = vector.multi_reduction <add>, %164, %cst_150 [0] : vector<32x8xf32> to vector<8xf32>
      %166 = vector.shape_cast %165 : vector<8xf32> to vector<1x8xf32>
      %cst_151 = arith.constant 0.000000e+00 : f32
      %167 = vector.broadcast %cst_151 : f32 to vector<1x8xf32>
      %168 = arith.maximumf %166, %167 : vector<1x8xf32>
      %169 = arith.index_cast %arg12 : i32 to index
      %c0_152 = arith.constant 0 : index
      %c0_153 = arith.constant 0 : index
      %170 = vector.load %arg6[%169, %c0_152, %c0_153] : memref<2x32x8xf32, #tpu.memory_space<vmem>>, vector<1x32x8xf32>
      %171 = vector.shape_cast %170 : vector<1x32x8xf32> to vector<32x8xf32>
      %172 = vector.broadcast %168 : vector<1x8xf32> to vector<32x8xf32>
      %173 = arith.mulf %171, %172 : vector<32x8xf32>
      %cst_154 = arith.constant dense<0.000000e+00> : vector<32xf32>
      %174 = vector.multi_reduction <add>, %173, %cst_154 [1] : vector<32x8xf32> to vector<32xf32>
      %175 = vector.shape_cast %174 : vector<32xf32> to vector<32x1xf32>
      %cst_155 = arith.constant 0.000000e+00 : f32
      %176 = vector.broadcast %cst_155 : f32 to vector<32x1xf32>
      %177 = arith.subf %176, %175 : vector<32x1xf32>
      %178 = math.exp %177 : vector<32x1xf32>
      %cst_156 = arith.constant 1.000000e+00 : f32
      %179 = vector.broadcast %cst_156 : f32 to vector<32x1xf32>
      %180 = arith.addf %179, %178 : vector<32x1xf32>
      %cst_157 = arith.constant 1.000000e+00 : f32
      %181 = vector.broadcast %cst_157 : f32 to vector<32x1xf32>
      %182 = arith.divf %181, %180 : vector<32x1xf32>
      %183 = vector.broadcast %182 : vector<32x1xf32> to vector<32x256xf32>
      %184 = arith.mulf %155, %183 : vector<32x256xf32>
      %c0_158 = arith.constant 0 : index
      %c0_159 = arith.constant 0 : index
      %185 = vector.load %arg10[%c0_158, %c0_159] : memref<32x256xf32, #tpu.memory_space<vmem>>, vector<32x256xf32>
      %186 = arith.addf %184, %185 : vector<32x256xf32>
      %c0_160 = arith.constant 0 : index
      %c0_161 = arith.constant 0 : index
      %187 = vector.load %arg10[%c0_160, %c0_161] : memref<32x256xf32, #tpu.memory_space<vmem>>, vector<32x256xf32>
      tpu.vector_store %arg10[%c0_160, %c0_161], %186 {strides = array<i32>} : memref<32x256xf32, #tpu.memory_space<vmem>>, vector<32x256xf32>,
    }
    %c2_i32_4 = arith.constant 2 : i32
    %c0_5 = arith.constant 0 : index
    %c0_6 = arith.constant 0 : index
    %4 = vector.load %arg7[%c0_5, %c0_6] : memref<32x288xf32, #tpu.memory_space<vmem>>, vector<32x288xf32>
    %c0_7 = arith.constant 0 : index
    %c0_8 = arith.constant 0 : index
    %5 = vector.load %arg10[%c0_7, %c0_8] : memref<32x256xf32, #tpu.memory_space<vmem>>, vector<32x256xf32>
    %c17_i32 = arith.constant 17 : i32
    %6 = tpu.dynamic_rotate %5 by %c17_i32 dim 1 : vector<32x256xf32>, i32 -> vector<32x256xf32>
    %c0_9 = arith.constant 0 : index
    %c0_10 = arith.constant 0 : index
    %7 = vector.load %arg2[%c0_9, %c0_10] : memref<9x256xf32, #tpu.memory_space<vmem>>, vector<1x256xf32>
    %8 = vector.broadcast %7 : vector<1x256xf32> to vector<32x256xf32>
    %9 = arith.mulf %6, %8 : vector<32x256xf32>
    %c0_11 = arith.constant 0 : index
    %c0_12 = arith.constant 0 : index
    %10 = vector.load %arg9[%c0_11, %c0_12] : memref<288x256xf32, #tpu.memory_space<vmem>>, vector<32x256xf32>
    tpu.vector_store %arg9[%c0_11, %c0_12], %9 {strides = array<i32>} : memref<288x256xf32, #tpu.memory_space<vmem>>, vector<32x256xf32>,
    %c16_i32 = arith.constant 16 : i32
    %11 = tpu.dynamic_rotate %5 by %c16_i32 dim 1 : vector<32x256xf32>, i32 -> vector<32x256xf32>
    %c1 = arith.constant 1 : index
    %c0_13 = arith.constant 0 : index
    %12 = vector.load %arg2[%c1, %c0_13] : memref<9x256xf32, #tpu.memory_space<vmem>>, vector<1x256xf32>
    %13 = vector.broadcast %12 : vector<1x256xf32> to vector<32x256xf32>
    %14 = arith.mulf %11, %13 : vector<32x256xf32>
    %c32 = arith.constant 32 : index
    %c0_14 = arith.constant 0 : index
    %15 = vector.load %arg9[%c32, %c0_14] : memref<288x256xf32, #tpu.memory_space<vmem>>, vector<32x256xf32>
    tpu.vector_store %arg9[%c32, %c0_14], %14 {strides = array<i32>} : memref<288x256xf32, #tpu.memory_space<vmem>>, vector<32x256xf32>,
    %c15_i32 = arith.constant 15 : i32
    %16 = tpu.dynamic_rotate %5 by %c15_i32 dim 1 : vector<32x256xf32>, i32 -> vector<32x256xf32>
    %c2 = arith.constant 2 : index
    %c0_15 = arith.constant 0 : index
    %17 = vector.load %arg2[%c2, %c0_15] : memref<9x256xf32, #tpu.memory_space<vmem>>, vector<1x256xf32>
    %18 = vector.broadcast %17 : vector<1x256xf32> to vector<32x256xf32>
    %19 = arith.mulf %16, %18 : vector<32x256xf32>
    %c64 = arith.constant 64 : index
    %c0_16 = arith.constant 0 : index
    %20 = vector.load %arg9[%c64, %c0_16] : memref<288x256xf32, #tpu.memory_space<vmem>>, vector<32x256xf32>
    tpu.vector_store %arg9[%c64, %c0_16], %19 {strides = array<i32>} : memref<288x256xf32, #tpu.memory_space<vmem>>, vector<32x256xf32>,
    %c1_i32_17 = arith.constant 1 : i32
    %21 = tpu.dynamic_rotate %5 by %c1_i32_17 dim 1 : vector<32x256xf32>, i32 -> vector<32x256xf32>
    %c3 = arith.constant 3 : index
    %c0_18 = arith.constant 0 : index
    %22 = vector.load %arg2[%c3, %c0_18] : memref<9x256xf32, #tpu.memory_space<vmem>>, vector<1x256xf32>
    %23 = vector.broadcast %22 : vector<1x256xf32> to vector<32x256xf32>
    %24 = arith.mulf %21, %23 : vector<32x256xf32>
    %c96 = arith.constant 96 : index
    %c0_19 = arith.constant 0 : index
    %25 = vector.load %arg9[%c96, %c0_19] : memref<288x256xf32, #tpu.memory_space<vmem>>, vector<32x256xf32>
    tpu.vector_store %arg9[%c96, %c0_19], %24 {strides = array<i32>} : memref<288x256xf32, #tpu.memory_space<vmem>>, vector<32x256xf32>,
    %c128 = arith.constant 128 : index
    %c0_20 = arith.constant 0 : index
    %26 = vector.load %arg9[%c128, %c0_20] : memref<288x256xf32, #tpu.memory_space<vmem>>, vector<32x256xf32>
    tpu.vector_store %arg9[%c128, %c0_20], %5 {strides = array<i32>} : memref<288x256xf32, #tpu.memory_space<vmem>>, vector<32x256xf32>,
    %c255_i32 = arith.constant 255 : i32
    %27 = tpu.dynamic_rotate %5 by %c255_i32 dim 1 : vector<32x256xf32>, i32 -> vector<32x256xf32>
    %c5 = arith.constant 5 : index
    %c0_21 = arith.constant 0 : index
    %28 = vector.load %arg2[%c5, %c0_21] : memref<9x256xf32, #tpu.memory_space<vmem>>, vector<1x256xf32>
    %29 = vector.broadcast %28 : vector<1x256xf32> to vector<32x256xf32>
    %30 = arith.mulf %27, %29 : vector<32x256xf32>
    %c160 = arith.constant 160 : index
    %c0_22 = arith.constant 0 : index
    %31 = vector.load %arg9[%c160, %c0_22] : memref<288x256xf32, #tpu.memory_space<vmem>>, vector<32x256xf32>
    tpu.vector_store %arg9[%c160, %c0_22], %30 {strides = array<i32>} : memref<288x256xf32, #tpu.memory_space<vmem>>, vector<32x256xf32>,
    %c241_i32 = arith.constant 241 : i32
    %32 = tpu.dynamic_rotate %5 by %c241_i32 dim 1 : vector<32x256xf32>, i32 -> vector<32x256xf32>
    %c6 = arith.constant 6 : index
    %c0_23 = arith.constant 0 : index
    %33 = vector.load %arg2[%c6, %c0_23] : memref<9x256xf32, #tpu.memory_space<vmem>>, vector<1x256xf32>
    %34 = vector.broadcast %33 : vector<1x256xf32> to vector<32x256xf32>
    %35 = arith.mulf %32, %34 : vector<32x256xf32>
    %c192 = arith.constant 192 : index
    %c0_24 = arith.constant 0 : index
    %36 = vector.load %arg9[%c192, %c0_24] : memref<288x256xf32, #tpu.memory_space<vmem>>, vector<32x256xf32>
    tpu.vector_store %arg9[%c192, %c0_24], %35 {strides = array<i32>} : memref<288x256xf32, #tpu.memory_space<vmem>>, vector<32x256xf32>,
    %c240_i32 = arith.constant 240 : i32
    %37 = tpu.dynamic_rotate %5 by %c240_i32 dim 1 : vector<32x256xf32>, i32 -> vector<32x256xf32>
    %c7 = arith.constant 7 : index
    %c0_25 = arith.constant 0 : index
    %38 = vector.load %arg2[%c7, %c0_25] : memref<9x256xf32, #tpu.memory_space<vmem>>, vector<1x256xf32>
    %39 = vector.broadcast %38 : vector<1x256xf32> to vector<32x256xf32>
    %40 = arith.mulf %37, %39 : vector<32x256xf32>
    %c224 = arith.constant 224 : index
    %c0_26 = arith.constant 0 : index
    %41 = vector.load %arg9[%c224, %c0_26] : memref<288x256xf32, #tpu.memory_space<vmem>>, vector<32x256xf32>
    tpu.vector_store %arg9[%c224, %c0_26], %40 {strides = array<i32>} : memref<288x256xf32, #tpu.memory_space<vmem>>, vector<32x256xf32>,
    %c239_i32 = arith.constant 239 : i32
    %42 = tpu.dynamic_rotate %5 by %c239_i32 dim 1 : vector<32x256xf32>, i32 -> vector<32x256xf32>
    %c8 = arith.constant 8 : index
    %c0_27 = arith.constant 0 : index
    %43 = vector.load %arg2[%c8, %c0_27] : memref<9x256xf32, #tpu.memory_space<vmem>>, vector<1x256xf32>
    %44 = vector.broadcast %43 : vector<1x256xf32> to vector<32x256xf32>
    %45 = arith.mulf %42, %44 : vector<32x256xf32>
    %c256 = arith.constant 256 : index
    %c0_28 = arith.constant 0 : index
    %46 = vector.load %arg9[%c256, %c0_28] : memref<288x256xf32, #tpu.memory_space<vmem>>, vector<32x256xf32>
    tpu.vector_store %arg9[%c256, %c0_28], %45 {strides = array<i32>} : memref<288x256xf32, #tpu.memory_space<vmem>>, vector<32x256xf32>,
    %c0_29 = arith.constant 0 : index
    %c0_30 = arith.constant 0 : index
    %47 = vector.load %arg9[%c0_29, %c0_30] : memref<288x256xf32, #tpu.memory_space<vmem>>, vector<288x256xf32>
    %cst = arith.constant dense<0.000000e+00> : vector<32x256xf32>
    %48 = tpu.matmul %4, %47, %cst {dimension_numbers = #tpu.dot_dimension_numbers<[1], [0], [0], [1], [0, 0, 1, 1], [], []>} : vector<32x288xf32>, vector<288x256xf32>, vector<32x256xf32> -> vector<32x256xf32>
    %c0_31 = arith.constant 0 : index
    %c0_32 = arith.constant 0 : index
    %49 = vector.load %arg11[%c0_31, %c0_32] : memref<32x256xf32, #tpu.memory_space<vmem>>, vector<32x256xf32>
    tpu.vector_store %arg11[%c0_31, %c0_32], %48 {strides = array<i32>} : memref<32x256xf32, #tpu.memory_space<vmem>>, vector<32x256xf32>,
    %c0_33 = arith.constant 0 : index
    %c0_34 = arith.constant 0 : index
    %50 = vector.load %arg11[%c0_33, %c0_34] : memref<32x256xf32, #tpu.memory_space<vmem>>, vector<32x256xf32>
    %c0_35 = arith.constant 0 : index
    %c0_36 = arith.constant 0 : index
    %c0_37 = arith.constant 0 : index
    %51 = vector.load %arg1[%c0_35, %c0_36, %c0_37] : memref<1x32x256xf32, #tpu.memory_space<vmem>>, vector<1x32x256xf32>
    %52 = vector.shape_cast %51 : vector<1x32x256xf32> to vector<32x256xf32>
    %53 = arith.addf %50, %52 : vector<32x256xf32>
    %c0_38 = arith.constant 0 : index
    %c0_39 = arith.constant 0 : index
    %c0_40 = arith.constant 0 : index
    %54 = vector.load %arg8[%c0_38, %c0_39, %c0_40] : memref<1x32x256xf32, #tpu.memory_space<vmem>>, vector<1x32x256xf32>
    %55 = vector.shape_cast %54 : vector<1x32x256xf32> to vector<32x256xf32>
    %56 = vector.shape_cast %53 : vector<32x256xf32> to vector<1x32x256xf32>
    tpu.vector_store %arg8[%c0_38, %c0_39, %c0_40], %56 {strides = array<i32>} : memref<1x32x256xf32, #tpu.memory_space<vmem>>, vector<1x32x256xf32>,
    return
  }
  func.func @transform_0(%arg0: i32) -> (i32, i32, i32) {
    %c0_i32 = arith.constant 0 : i32
    %c0_i32_0 = arith.constant 0 : i32
    %c0_i32_1 = arith.constant 0 : i32
    return %arg0, %c0_i32, %c0_i32_0 : i32, i32, i32
  }
  func.func @transform_1(%arg0: i32) -> (i32, i32) {
    %c0_i32 = arith.constant 0 : i32
    %c0_i32_0 = arith.constant 0 : i32
    %c0_i32_1 = arith.constant 0 : i32
    return %c0_i32, %c0_i32_0 : i32, i32
  }
  func.func @transform_2(%arg0: i32) -> (i32, i32, i32) {
    %c0_i32 = arith.constant 0 : i32
    %c0_i32_0 = arith.constant 0 : i32
    %c0_i32_1 = arith.constant 0 : i32
    %c0_i32_2 = arith.constant 0 : i32
    return %c0_i32, %c0_i32_0, %c0_i32_1 : i32, i32, i32
  }
  func.func @transform_3(%arg0: i32) -> (i32, i32, i32) {
    %c0_i32 = arith.constant 0 : i32
    %c0_i32_0 = arith.constant 0 : i32
    %c0_i32_1 = arith.constant 0 : i32
    %c0_i32_2 = arith.constant 0 : i32
    return %c0_i32, %c0_i32_0, %c0_i32_1 : i32, i32, i32
  }
  func.func @transform_4(%arg0: i32) -> (i32, i32, i32) {
    %c0_i32 = arith.constant 0 : i32
    %c0_i32_0 = arith.constant 0 : i32
    %c0_i32_1 = arith.constant 0 : i32
    %c0_i32_2 = arith.constant 0 : i32
    return %c0_i32, %c0_i32_0, %c0_i32_1 : i32, i32, i32
  }
  func.func @transform_5(%arg0: i32) -> (i32, i32, i32) {
    %c0_i32 = arith.constant 0 : i32
    %c0_i32_0 = arith.constant 0 : i32
    %c0_i32_1 = arith.constant 0 : i32
    %c0_i32_2 = arith.constant 0 : i32
    return %c0_i32, %c0_i32_0, %c0_i32_1 : i32, i32, i32
  }
  func.func @transform_6(%arg0: i32) -> (i32, i32) {
    %c0_i32 = arith.constant 0 : i32
    %c0_i32_0 = arith.constant 0 : i32
    %c0_i32_1 = arith.constant 0 : i32
    return %c0_i32, %c0_i32_0 : i32, i32
  }
  func.func @transform_7(%arg0: i32) -> (i32, i32, i32) {
    %c0_i32 = arith.constant 0 : i32
    %c0_i32_0 = arith.constant 0 : i32
    %c0_i32_1 = arith.constant 0 : i32
    return %arg0, %c0_i32, %c0_i32_0 : i32, i32, i32
  }
}

</mosaic_0001>

<llo_original>
// kernel: tpu_custom_call.1
$region0: #{tpu_custom_call.1}
  #allocation0 [shape = 'u32[]', space=smem, size = 0x4, offset = 0x4, fixed_abs, tag = 'smem constant byte address 0x4 - core index']
  #allocation1 [shape = 'u32[144,128]{1,0:T(1,128)}', space=vmem, size = 0x12000, scoped, tag = 'internal scratch']
  #allocation2 [shape = 'f32[288,256]{1,0:T(8,128)}', space=vmem, size = 0x48000, scoped, tag = 'scratch operand']
  #allocation3 [shape = 'f32[32,256]{1,0:T(8,128)}', space=vmem, size = 0x8000, scoped, tag = 'scratch operand']
  #allocation4 [shape = 'f32[32,256]{1,0:T(8,128)}', space=vmem, size = 0x8000, scoped, tag = 'scratch operand']
  %s0 = inlined_call_operand.vmem [shape: f32[2,32,256], index: 0, kind: input, shape index: {}]
  %s1 = inlined_call_operand.vmem [shape: f32[9,256], index: 1, kind: input, shape index: {}]
  %s2 = inlined_call_operand.hbm [shape: f32[2,32,288], index: 2, kind: input, shape index: {}]
  %s3 = inlined_call_operand.hbm [shape: f32[2,32,288], index: 3, kind: input, shape index: {}]
  %s4 = inlined_call_operand.vmem [shape: f32[2,32,8], index: 4, kind: input, shape index: {}]
  %s5 = inlined_call_operand.vmem [shape: f32[2,32,8], index: 5, kind: input, shape index: {}]
  %s6 = inlined_call_operand.hbm [shape: f32[32,288], index: 6, kind: input, shape index: {}]
  %s7 = inlined_call_operand.hbm [shape: f32[2,32,256], index: 7, kind: output, shape index: {}]
  %s8 = sld [smem:[#allocation0]]
  $region80: #{tpu_custom_call.1} parent=0
    _
  %s10 = ssub.s32 1, %s8
  %s11 = scalar_select 0, %s10, %s8
  $region1: #{tpu_custom_call.1} parent=0
    #allocation5 [shape = 'u8[98304]{0}', space=vmem, size = 0x18000, scoped, tag = 'input window, operand 2, single buffered']
    #allocation6 [shape = 's32[2]{0}', space=sflag, size = 0x8, scoped, tag = 'scoped memory for tpu_custom_call.1']
    #allocation7 [shape = 's32[2]{0}', space=sflag, size = 0x8, scoped, tag = 'scoped memory for tpu_custom_call.1']
    #allocation8 [shape = 'u8[98304]{0}', space=vmem, size = 0x18000, scoped, tag = 'input window, operand 3, single buffered']
    #allocation9 [shape = 's32[1]{0}', space=sflag, size = 0x4, scoped, tag = 'scoped memory for tpu_custom_call.1']
    #allocation10 [shape = 'u8[49152]{0}', space=vmem, size = 0xc000, scoped, tag = 'input window, operand 6, single buffered']
    #allocation11 [shape = 'u8[65536]{0}', space=vmem, size = 0x10000, scoped, tag = 'output window, operand 0']
    %12 = vsyncpa [#allocation6], 0
    %13 = vsyncpa [#allocation9], 0
    %14 = vsyncpa [#allocation7], 0
    %s15 = scalar_lea.sflag [#allocation7], 1
    %16 = vsyncpa %s15, 0
    loop: start=0, step=1, limit=4
    $region2: #{tpu_custom_call.1} parent=1 // loop_pre_header
      _
    $region3: #{tpu_custom_call.1} parent=1 // loop_header
      %s18 = sphi 0, %s22
      %p19 = scmp.ge.s32.totalorder %s18, 4
      %s28 = sphi 0, %s30
      %s31 = sphi 0, %s28
      %s32 = sphi 0, %s31
      %s48 = sphi 0, %s32
      %s52 = sphi 0, %s52
      %s54 = sphi 0, %s52
      %s55 = sphi 0, %s54
      %s69 = sphi 0, %s55
      %s73 = sphi 0, %s73
      %s75 = sphi 0, %s73
      %s76 = sphi 0, %s75
      %s90 = sphi 0, %s76
      %s94 = sphi 0, %s94
      %s96 = sphi 0, %s94
      %s97 = sphi 0, %s96
      %s111 = sphi 0, %s97
      %s115 = sphi 0, %s115
      %s117 = sphi 0, %s115
      %s118 = sphi 0, %s117
      %s132 = sphi 0, %s118
      %s136 = sphi 0, %s136
      %s138 = sphi 0, %s136
      %s139 = sphi 0, %s138
      %s153 = sphi 0, %s139
      %s157 = sphi 0, %s157
      %s159 = sphi 0, %s157
      %s160 = sphi 0, %s159
      %s174 = sphi 0, %s160
      %s180 = sphi 0, %s182
      %s183 = sphi 0, %s180
      %s184 = sphi 0, %s183
      %s200 = sphi 0, %s184
    $region4: #{tpu_custom_call.1} parent=1 // loop_header_branch
      %21 = sbr.rel (%p19) target = $region8
    $region5: #{tpu_custom_call.1} parent=1 // loop_body
      %s23 = ssub.s32 %s18, 1
      %s24 = ssub.s32 %s18, 2
      %s25 = sadd.s32 %s18, 1
      %s26 = ssub.s32 %s18, %s25
      %p27 = scmp.eq.s32.totalorder %s26, 0
      %s29 = sadd.s32 %s28, 1
      %s30 = scalar_select %p27, %s28, %s29
      %p33 = pneg %p27
      %p34 = scmp.eq.s32.totalorder %s18, 1
      %p35 = por %p33, %p34
      %p36 = scmp.ne.s32.totalorder %s28, %s31
      %p37 = scmp.eq.s32.totalorder %s18, 0
      %p38 = por %p36, %p37
      %p39 = scmp.ne.s32.totalorder %s28, %s31
      %p40 = scmp.eq.s32.totalorder %s23, 1
      %p41 = por %p39, %p40
      %p42 = scmp.ne.s32.totalorder %s31, %s32
      %p43 = scmp.eq.s32.totalorder %s23, 0
      %p44 = por %p42, %p43
      %p45 = scmp.ne.s32.totalorder %s31, %s32
      %p46 = scmp.eq.s32.totalorder %s24, 1
      %p47 = por %p45, %p46
      %p49 = scmp.ne.s32.totalorder %s32, %s48
      %p50 = scmp.eq.s32.totalorder %s24, 0
      %p51 = por %p49, %p50
      %s53 = sadd.s32 %s52, 1
      %p56 = scmp.eq.s32.totalorder %s18, 1
      %p57 = scmp.ne.s32.totalorder %s52, %s54
      %p58 = scmp.eq.s32.totalorder %s18, 0
      %p59 = por %p57, %p58
      %p60 = scmp.ne.s32.totalorder %s52, %s54
      %p61 = scmp.eq.s32.totalorder %s23, 1
      %p62 = por %p60, %p61
      %p63 = scmp.ne.s32.totalorder %s54, %s55
      %p64 = scmp.eq.s32.totalorder %s23, 0
      %p65 = por %p63, %p64
      %p66 = scmp.ne.s32.totalorder %s54, %s55
      %p67 = scmp.eq.s32.totalorder %s24, 1
      %p68 = por %p66, %p67
      %p70 = scmp.ne.s32.totalorder %s55, %s69
      %p71 = scmp.eq.s32.totalorder %s24, 0
      %p72 = por %p70, %p71
      %s74 = sadd.s32 %s73, 1
      %p77 = scmp.eq.s32.totalorder %s18, 1
      %p78 = scmp.ne.s32.totalorder %s73, %s75
      %p79 = scmp.eq.s32.totalorder %s18, 0
      %p80 = por %p78, %p79
      %p81 = scmp.ne.s32.totalorder %s73, %s75
      %p82 = scmp.eq.s32.totalorder %s23, 1
      %p83 = por %p81, %p82
      %p84 = scmp.ne.s32.totalorder %s75, %s76
      %p85 = scmp.eq.s32.totalorder %s23, 0
      %p86 = por %p84, %p85
      %p87 = scmp.ne.s32.totalorder %s75, %s76
      %p88 = scmp.eq.s32.totalorder %s24, 1
      %p89 = por %p87, %p88
      %p91 = scmp.ne.s32.totalorder %s76, %s90
      %p92 = scmp.eq.s32.totalorder %s24, 0
      %p93 = por %p91, %p92
      %s95 = sadd.s32 %s94, 1
      %p98 = scmp.eq.s32.totalorder %s18, 1
      %p99 = scmp.ne.s32.totalorder %s94, %s96
      %p100 = scmp.eq.s32.totalorder %s18, 0
      %p101 = por %p99, %p100
      %p102 = scmp.ne.s32.totalorder %s94, %s96
      %p103 = scmp.eq.s32.totalorder %s23, 1
      %p104 = por %p102, %p103
      %p105 = scmp.ne.s32.totalorder %s96, %s97
      %p106 = scmp.eq.s32.totalorder %s23, 0
      %p107 = por %p105, %p106
      %p108 = scmp.ne.s32.totalorder %s96, %s97
      %p109 = scmp.eq.s32.totalorder %s24, 1
      %p110 = por %p108, %p109
      %p112 = scmp.ne.s32.totalorder %s97, %s111
      %p113 = scmp.eq.s32.totalorder %s24, 0
      %p114 = por %p112, %p113
      %s116 = sadd.s32 %s115, 1
      %p119 = scmp.eq.s32.totalorder %s18, 1
      %p120 = scmp.ne.s32.totalorder %s115, %s117
      %p121 = scmp.eq.s32.totalorder %s18, 0
      %p122 = por %p120, %p121
      %p123 = scmp.ne.s32.totalorder %s115, %s117
      %p124 = scmp.eq.s32.totalorder %s23, 1
      %p125 = por %p123, %p124
      %p126 = scmp.ne.s32.totalorder %s117, %s118
      %p127 = scmp.eq.s32.totalorder %s23, 0
      %p128 = por %p126, %p127
      %p129 = scmp.ne.s32.totalorder %s117, %s118
      %p130 = scmp.eq.s32.totalorder %s24, 1
      %p131 = por %p129, %p130
      %p133 = scmp.ne.s32.totalorder %s118, %s132
      %p134 = scmp.eq.s32.totalorder %s24, 0
      %p135 = por %p133, %p134
      %s137 = sadd.s32 %s136, 1
      %p140 = scmp.eq.s32.totalorder %s18, 1
      %p141 = scmp.ne.s32.totalorder %s136, %s138
      %p142 = scmp.eq.s32.totalorder %s18, 0
      %p143 = por %p141, %p142
      %p144 = scmp.ne.s32.totalorder %s136, %s138
      %p145 = scmp.eq.s32.totalorder %s23, 1
      %p146 = por %p144, %p145
      %p147 = scmp.ne.s32.totalorder %s138, %s139
      %p148 = scmp.eq.s32.totalorder %s23, 0
      %p149 = por %p147, %p148
      %p150 = scmp.ne.s32.totalorder %s138, %s139
      %p151 = scmp.eq.s32.totalorder %s24, 1
      %p152 = por %p150, %p151
      %p154 = scmp.ne.s32.totalorder %s139, %s153
      %p155 = scmp.eq.s32.totalorder %s24, 0
      %p156 = por %p154, %p155
      %s158 = sadd.s32 %s157, 1
      %p161 = scmp.eq.s32.totalorder %s18, 1
      %p162 = scmp.ne.s32.totalorder %s157, %s159
      %p163 = scmp.eq.s32.totalorder %s18, 0
      %p164 = por %p162, %p163
      %p165 = scmp.ne.s32.totalorder %s157, %s159
      %p166 = scmp.eq.s32.totalorder %s23, 1
      %p167 = por %p165, %p166
      %p168 = scmp.ne.s32.totalorder %s159, %s160
      %p169 = scmp.eq.s32.totalorder %s23, 0
      %p170 = por %p168, %p169
      %p171 = scmp.ne.s32.totalorder %s159, %s160
      %p172 = scmp.eq.s32.totalorder %s24, 1
      %p173 = por %p171, %p172
      %p175 = scmp.ne.s32.totalorder %s160, %s174
      %p176 = scmp.eq.s32.totalorder %s24, 0
      %p177 = por %p175, %p176
      %s178 = ssub.s32 %s18, %s25
      %p179 = scmp.eq.s32.totalorder %s178, 0
      %s181 = sadd.s32 %s180, 1
      %s182 = scalar_select %p179, %s180, %s181
      %p185 = pneg %p179
      %p186 = scmp.eq.s32.totalorder %s18, 1
      %p187 = por %p185, %p186
      %p188 = scmp.ne.s32.totalorder %s180, %s183
      %p189 = scmp.eq.s32.totalorder %s18, 0
      %p190 = por %p188, %p189
      %p191 = scmp.ne.s32.totalorder %s180, %s183
      %p192 = scmp.eq.s32.totalorder %s23, 1
      %p193 = por %p191, %p192
      %p194 = scmp.ne.s32.totalorder %s183, %s184
      %p195 = scmp.eq.s32.totalorder %s23, 0
      %p196 = por %p194, %p195
      %p197 = scmp.ne.s32.totalorder %s183, %s184
      %p198 = scmp.eq.s32.totalorder %s24, 1
      %p199 = por %p197, %p198
      %p201 = scmp.ne.s32.totalorder %s184, %s200
      %p202 = scmp.eq.s32.totalorder %s24, 0
      %p203 = por %p201, %p202
      %p204 = scmp.le.s32.totalorder 1, %s18
      %p205 = scmp.lt.s32.totalorder %s18, 3
      %p206 = pnand %p204, %p205
      %p207 = pneg %p206
      // Predicated region
      $region9: #{tpu_custom_call.1} parent=5 // pred_check
        _
      $region10: #{tpu_custom_call.1} parent=5 // pred_check_branch
        %209 = sbr.rel (%p206) target = $region12
      $region11: #{tpu_custom_call.1} parent=5 // pred_region
        %s210 = ssub.s32 %s18, 1
        // Predicated region
        $region13: #{tpu_custom_call.1} parent=11 // pred_check
          %p211 = pneg %p65
        $region14: #{tpu_custom_call.1} parent=11 // pred_check_branch
          %213 = sbr.rel (%p211) target = $region16
        $region15: #{tpu_custom_call.1} parent=11 // pred_region
          _
        $region16: #{tpu_custom_call.1} parent=11 // pred_fallthru
          _
        // Predicated region
        $region17: #{tpu_custom_call.1} parent=11 // pred_check
          %p214 = pneg %p86
        $region18: #{tpu_custom_call.1} parent=11 // pred_check_branch
          %216 = sbr.rel (%p214) target = $region20
        $region19: #{tpu_custom_call.1} parent=11 // pred_region
          %s218 = ssub.s32 3072, 3072
          %219 = vsyncadd [#allocation6], %s218
          %s220 = sshll.u32 [#allocation5], 4
          %s221 = int_to_ptr.vmem [resolvable:$true] %s220
          %226 = dma.hbm_to_vmem [thread:$0]  %s2, 3072, %s221, [#allocation6], 384, 384, 24
        $region20: #{tpu_custom_call.1} parent=11 // pred_fallthru
          _
        // Predicated region
        $region21: #{tpu_custom_call.1} parent=11 // pred_check
          %p227 = pneg %p107
        $region22: #{tpu_custom_call.1} parent=11 // pred_check_branch
          %229 = sbr.rel (%p227) target = $region24
        $region23: #{tpu_custom_call.1} parent=11 // pred_region
          %s231 = ssub.s32 3072, 3072
          %232 = vsyncadd [#allocation9], %s231
          %s233 = sshll.u32 [#allocation8], 4
          %s234 = int_to_ptr.vmem [resolvable:$true] %s233
          %239 = dma.hbm_to_vmem [thread:$0]  %s3, 3072, %s234, [#allocation9], 384, 384, 24
        $region24: #{tpu_custom_call.1} parent=11 // pred_fallthru
          _
        // Predicated region
        $region25: #{tpu_custom_call.1} parent=11 // pred_check
          %p240 = pneg %p128
        $region26: #{tpu_custom_call.1} parent=11 // pred_check_branch
          %242 = sbr.rel (%p240) target = $region28
        $region27: #{tpu_custom_call.1} parent=11 // pred_region
          _
        $region28: #{tpu_custom_call.1} parent=11 // pred_fallthru
          _
        // Predicated region
        $region29: #{tpu_custom_call.1} parent=11 // pred_check
          %p243 = pneg %p149
        $region30: #{tpu_custom_call.1} parent=11 // pred_check_branch
          %245 = sbr.rel (%p243) target = $region32
        $region31: #{tpu_custom_call.1} parent=11 // pred_region
          _
        $region32: #{tpu_custom_call.1} parent=11 // pred_fallthru
          _
        // Predicated region
        $region33: #{tpu_custom_call.1} parent=11 // pred_check
          %p246 = pneg %p170
        $region34: #{tpu_custom_call.1} parent=11 // pred_check_branch
          %248 = sbr.rel (%p246) target = $region36
        $region35: #{tpu_custom_call.1} parent=11 // pred_region
          %s250 = ssub.s32 1536, 1536
          %251 = vsyncadd [#allocation9], %s250
          %s252 = sshll.u32 [#allocation10], 4
          %s253 = int_to_ptr.vmem [resolvable:$true] %s252
          %258 = dma.hbm_to_vmem [thread:$0]  %s6, 1536, %s253, [#allocation9], 384, 384, 24
        $region36: #{tpu_custom_call.1} parent=11 // pred_fallthru
          _
      $region12: #{tpu_custom_call.1} parent=5 // pred_fallthru
        _
      %p259 = scmp.lt.s32.totalorder %s18, 2
      // Predicated region
      $region37: #{tpu_custom_call.1} parent=5 // pred_check
        %p260 = pneg %p259
      $region38: #{tpu_custom_call.1} parent=5 // pred_check_branch
        %262 = sbr.rel (%p260) target = $region40
      $region39: #{tpu_custom_call.1} parent=5 // pred_region
        // Predicated region
        $region41: #{tpu_custom_call.1} parent=39 // pred_check
          %p263 = pneg %p38
        $region42: #{tpu_custom_call.1} parent=39 // pred_check_branch
          %265 = sbr.rel (%p263) target = $region44
        $region43: #{tpu_custom_call.1} parent=39 // pred_region
          %p266 = scmp.lt.s32.totalorder %s18, 1
          %s267 = scalar_select %p266, %s18, 1
          %s268 = smul.addr %s267, 8
          %s269 = smul.addr %s268, 8
          %s270 = scalar_lea.vmem %s0, %s269
        $region44: #{tpu_custom_call.1} parent=39 // pred_fallthru
          _
      $region40: #{tpu_custom_call.1} parent=5 // pred_fallthru
        _
      %p271 = scmp.le.s32.totalorder 1, %s18
      %p272 = scmp.lt.s32.totalorder %s18, 3
      %p273 = pnand %p271, %p272
      %p274 = pneg %p273
      // Predicated region
      $region45: #{tpu_custom_call.1} parent=5 // pred_check
        _
      $region46: #{tpu_custom_call.1} parent=5 // pred_check_branch
        %276 = sbr.rel (%p273) target = $region48
      $region47: #{tpu_custom_call.1} parent=5 // pred_region
        %s277 = ssub.s32 %s18, 1
        // Predicated region
        $region49: #{tpu_custom_call.1} parent=47 // pred_check
          %p278 = pneg %p86
        $region50: #{tpu_custom_call.1} parent=47 // pred_check_branch
          %280 = sbr.rel (%p278) target = $region52
        $region51: #{tpu_custom_call.1} parent=47 // pred_region
          %281 = dma.done [#allocation6], 3072
        $region52: #{tpu_custom_call.1} parent=47 // pred_fallthru
          _
        // Predicated region
        $region53: #{tpu_custom_call.1} parent=47 // pred_check
          %p282 = pneg %p107
        $region54: #{tpu_custom_call.1} parent=47 // pred_check_branch
          %284 = sbr.rel (%p282) target = $region56
        $region55: #{tpu_custom_call.1} parent=47 // pred_region
          %285 = dma.done [#allocation9], 3072
        $region56: #{tpu_custom_call.1} parent=47 // pred_fallthru
          _
        // Predicated region
        $region57: #{tpu_custom_call.1} parent=47 // pred_check
          %p286 = pneg %p170
        $region58: #{tpu_custom_call.1} parent=47 // pred_check_branch
          %288 = sbr.rel (%p286) target = $region60
        $region59: #{tpu_custom_call.1} parent=47 // pred_region
          %289 = dma.done [#allocation9], 1536
        $region60: #{tpu_custom_call.1} parent=47 // pred_fallthru
          _
        %p290 = scmp.lt.s32.totalorder %s23, 1
        %s291 = scalar_select %p290, %s23, 1
        %s292 = smul.addr %s291, 8
        %s293 = smul.addr %s292, 8
        %s294 = scalar_lea.vmem %s0, %s293
        %p295 = pneg %p44
        %p296 = pneg %p41
        %p297 = pneg %p65
        %p298 = pneg %p62
        %p299 = pneg %p86
        %p300 = pneg %p83
        %p301 = pneg %p107
        %p302 = pneg %p104
        %p303 = pneg %p128
        %p304 = pneg %p125
        %p305 = pneg %p149
        %p306 = pneg %p146
        %p307 = pneg %p170
        %p308 = pneg %p167
        %p309 = pneg %p196
        %p310 = pneg %p193
        %s311 = sand.u32 %s183, 1
        %s312 = scalar_lea.sflag [#allocation7], %s311
        %s313 = sand.u32 %s183, 1
        %s314 = smul.addr %s313, 64
        %s315 = scalar_lea.vmem [#allocation11], %s314
        %p316 = scmp.lt.s32.totalorder %s23, 1
        %s317 = scalar_select %p316, %s23, 1
        %s318 = smul.addr %s317, 8
        %s319 = smul.addr %s318, 8
        %s320 = scalar_lea.vmem %s0, %s319
        %v321 = vld [vmem:[%s320] sm:$0xff]
        %v322 = vld [vmem:[%s320 + $0x8] sm:$0xff]
        %v323 = vld [vmem:[%s320 + $0x10] sm:$0xff]
        %v324 = vld [vmem:[%s320 + $0x18] sm:$0xff]
        %v325 = vld [vmem:[%s320 + $0x20] sm:$0xff]
        %v326 = vld [vmem:[%s320 + $0x28] sm:$0xff]
        %v327 = vld [vmem:[%s320 + $0x30] sm:$0xff]
        %v328 = vld [vmem:[%s320 + $0x38] sm:$0xff]
        %329 = vst [vmem:[#allocation3] sm:$0xff] %v321
        %330 = vst [vmem:[#allocation3 + $0x8] sm:$0xff] %v322
        %331 = vst [vmem:[#allocation3 + $0x10] sm:$0xff] %v323
        %332 = vst [vmem:[#allocation3 + $0x18] sm:$0xff] %v324
        %333 = vst [vmem:[#allocation3 + $0x20] sm:$0xff] %v325
        %334 = vst [vmem:[#allocation3 + $0x28] sm:$0xff] %v326
        %335 = vst [vmem:[#allocation3 + $0x30] sm:$0xff] %v327
        %336 = vst [vmem:[#allocation3 + $0x38] sm:$0xff] %v328
        loop: start=0, step=1, limit=2
        $region61: #{tpu_custom_call.1} parent=47 // loop_pre_header
          _
        $region62: #{tpu_custom_call.1} parent=47 // loop_header
          %s338 = sphi 0, %s342
          %p339 = scmp.ge.s32.totalorder %s338, 2
        $region63: #{tpu_custom_call.1} parent=47 // loop_header_branch
          %341 = sbr.rel (%p339) target = $region67
        $region64: #{tpu_custom_call.1} parent=47 // loop_body
          %s343 = smul.u32 %s338, 12
          %s344 = smul.addr %s343, 8
          %s345 = scalar_lea.vmem [#allocation5], %s344
          %v346 = vld [vmem:[%s345] sm:$0xff]
          %v347 = vld [vmem:[%s345 + $0x8] sm:$0xff]
          %v348 = vld [vmem:[%s345 + $0x10] sm:$0xff]
          %v349 = vld [vmem:[%s345 + $0x18] sm:$0xff]
          %v350 = vld [vmem:[%s345 + $0x20] sm:$0xff]
          %v351 = vld [vmem:[%s345 + $0x28] sm:$0xff]
          %v352 = vld [vmem:[%s345 + $0x30] sm:$0xff]
          %v353 = vld [vmem:[%s345 + $0x38] sm:$0xff]
          %v354 = vld [vmem:[%s345 + $0x40] sm:$0xff]
          %v355 = vld [vmem:[%s345 + $0x48] sm:$0xff]
          %v356 = vld [vmem:[%s345 + $0x50] sm:$0xff]
          %v357 = vld [vmem:[%s345 + $0x58] sm:$0xff]
          %v358 = vld [vmem:[#allocation3] sm:$0xff]
          %v359 = vld [vmem:[#allocation3 + $0x8] sm:$0xff]
          %v360 = vld [vmem:[#allocation3 + $0x10] sm:$0xff]
          %v361 = vld [vmem:[#allocation3 + $0x18] sm:$0xff]
          %v362 = vld [vmem:[#allocation3 + $0x20] sm:$0xff]
          %v363 = vld [vmem:[#allocation3 + $0x28] sm:$0xff]
          %v364 = vld [vmem:[#allocation3 + $0x30] sm:$0xff]
          %v365 = vld [vmem:[#allocation3 + $0x38] sm:$0xff]
          %366 = vrot.lane.b32.xlu0 %v358, 17
          %v367 = vpop.permute.xlu0 %366
          %368 = vrot.lane.b32.xlu0 %v360, 17
          %v369 = vpop.permute.xlu0 %368
          %370 = vrot.lane.b32.xlu0 %v362, 17
          %v371 = vpop.permute.xlu0 %370
          %372 = vrot.lane.b32.xlu0 %v364, 17
          %v373 = vpop.permute.xlu0 %372
          %374 = vrot.lane.b32.xlu0 %v359, 17
          %v375 = vpop.permute.xlu0 %374
          %376 = vrot.lane.b32.xlu0 %v361, 17
          %v377 = vpop.permute.xlu0 %376
          %378 = vrot.lane.b32.xlu0 %v363, 17
          %v379 = vpop.permute.xlu0 %378
          %380 = vrot.lane.b32.xlu0 %v365, 17
          %v381 = vpop.permute.xlu0 %380
          %v382 = vlaneseq
          %v383 = vand.u32 %v382, 127
          %vm384 = vcmp.lt.s32.totalorder %v383, 17
          %v385 = vsel %vm384, %v367, %v375
          %v386 = vsel %vm384, %v369, %v377
          %v387 = vsel %vm384, %v371, %v379
          %v388 = vsel %vm384, %v373, %v381
          %v389 = vsel %vm384, %v375, %v367
          %v390 = vsel %vm384, %v377, %v369
          %v391 = vsel %vm384, %v379, %v371
          %v392 = vsel %vm384, %v381, %v373
          %v393 = vld [vmem:[%s1] ss:$8 sm:$0x3]
          %v395 = vlaneseq
          %v396 = vshrl.u32 %v395, 7
          %v397 = vsub.s32 0, %v396
          %v398 = vrot.slane %v393, %v397
          %v399 = vlaneseq
          %v400 = vshrl.u32 %v399, 7
          %v401 = vsub.s32 1, %v400
          %v402 = vrot.slane %v393, %v401
          %v405 = vmul.f32 %v389, %v398
          %v406 = vmul.f32 %v385, %v402
          %v407 = vmul.f32 %v390, %v398
          %v408 = vmul.f32 %v386, %v402
          %v409 = vmul.f32 %v391, %v398
          %v410 = vmul.f32 %v387, %v402
          %v411 = vmul.f32 %v392, %v398
          %v412 = vmul.f32 %v388, %v402
          %413 = vst [vmem:[#allocation2] sm:$0xff] %v405
          %414 = vst [vmem:[#allocation2 + $0x8] sm:$0xff] %v406
          %415 = vst [vmem:[#allocation2 + $0x10] sm:$0xff] %v407
          %416 = vst [vmem:[#allocation2 + $0x18] sm:$0xff] %v408
          %417 = vst [vmem:[#allocation2 + $0x20] sm:$0xff] %v409
          %418 = vst [vmem:[#allocation2 + $0x28] sm:$0xff] %v410
          %419 = vst [vmem:[#allocation2 + $0x30] sm:$0xff] %v411
          %420 = vst [vmem:[#allocation2 + $0x38] sm:$0xff] %v412
          %421 = vrot.lane.b32.xlu0 %v358, 16
          %v422 = vpop.permute.xlu0 %421
          %423 = vrot.lane.b32.xlu0 %v360, 16
          %v424 = vpop.permute.xlu0 %423
          %425 = vrot.lane.b32.xlu0 %v362, 16
          %v426 = vpop.permute.xlu0 %425
          %427 = vrot.lane.b32.xlu0 %v364, 16
          %v428 = vpop.permute.xlu0 %427
          %429 = vrot.lane.b32.xlu0 %v359, 16
          %v430 = vpop.permute.xlu0 %429
          %431 = vrot.lane.b32.xlu0 %v361, 16
          %v432 = vpop.permute.xlu0 %431
          %433 = vrot.lane.b32.xlu0 %v363, 16
          %v434 = vpop.permute.xlu0 %433
          %435 = vrot.lane.b32.xlu0 %v365, 16
          %v436 = vpop.permute.xlu0 %435
          %vm437 = vcmp.lt.s32.totalorder %v383, 16
          %v438 = vsel %vm437, %v422, %v430
          %v439 = vsel %vm437, %v424, %v432
          %v440 = vsel %vm437, %v426, %v434
          %v441 = vsel %vm437, %v428, %v436
          %v442 = vsel %vm437, %v430, %v422
          %v443 = vsel %vm437, %v432, %v424
          %v444 = vsel %vm437, %v434, %v426
          %v445 = vsel %vm437, %v436, %v428
          %s446 = scalar_lea.vmem %s1, 1
          %v447 = vld [vmem:[%s446] ss:$8 sm:$0x3]
          %v449 = vlaneseq
          %v450 = vshrl.u32 %v449, 7
          %v451 = vsub.s32 0, %v450
          %v452 = vrot.slane %v447, %v451
          %v453 = vlaneseq
          %v454 = vshrl.u32 %v453, 7
          %v455 = vsub.s32 1, %v454
          %v456 = vrot.slane %v447, %v455
          %v459 = vmul.f32 %v442, %v452
          %v460 = vmul.f32 %v438, %v456
          %v461 = vmul.f32 %v443, %v452
          %v462 = vmul.f32 %v439, %v456
          %v463 = vmul.f32 %v444, %v452
          %v464 = vmul.f32 %v440, %v456
          %v465 = vmul.f32 %v445, %v452
          %v466 = vmul.f32 %v441, %v456
          %467 = vst [vmem:[#allocation2 + $0x40] sm:$0xff] %v459
          %468 = vst [vmem:[#allocation2 + $0x48] sm:$0xff] %v460
          %469 = vst [vmem:[#allocation2 + $0x50] sm:$0xff] %v461
          %470 = vst [vmem:[#allocation2 + $0x58] sm:$0xff] %v462
          %471 = vst [vmem:[#allocation2 + $0x60] sm:$0xff] %v463
          %472 = vst [vmem:[#allocation2 + $0x68] sm:$0xff] %v464
          %473 = vst [vmem:[#allocation2 + $0x70] sm:$0xff] %v465
          %474 = vst [vmem:[#allocation2 + $0x78] sm:$0xff] %v466
          %475 = vrot.lane.b32.xlu0 %v358, 15
          %v476 = vpop.permute.xlu0 %475
          %477 = vrot.lane.b32.xlu0 %v360, 15
          %v478 = vpop.permute.xlu0 %477
          %479 = vrot.lane.b32.xlu0 %v362, 15
          %v480 = vpop.permute.xlu0 %479
          %481 = vrot.lane.b32.xlu0 %v364, 15
          %v482 = vpop.permute.xlu0 %481
          %483 = vrot.lane.b32.xlu0 %v359, 15
          %v484 = vpop.permute.xlu0 %483
          %485 = vrot.lane.b32.xlu0 %v361, 15
          %v486 = vpop.permute.xlu0 %485
          %487 = vrot.lane.b32.xlu0 %v363, 15
          %v488 = vpop.permute.xlu0 %487
          %489 = vrot.lane.b32.xlu0 %v365, 15
          %v490 = vpop.permute.xlu0 %489
          %vm491 = vcmp.lt.s32.totalorder %v383, 15
          %v492 = vsel %vm491, %v476, %v484
          %v493 = vsel %vm491, %v478, %v486
          %v494 = vsel %vm491, %v480, %v488
          %v495 = vsel %vm491, %v482, %v490
          %v496 = vsel %vm491, %v484, %v476
          %v497 = vsel %vm491, %v486, %v478
          %v498 = vsel %vm491, %v488, %v480
          %v499 = vsel %vm491, %v490, %v482
          %s500 = scalar_lea.vmem %s1, 2
          %v501 = vld [vmem:[%s500] ss:$8 sm:$0x3]
          %v503 = vlaneseq
          %v504 = vshrl.u32 %v503, 7
          %v505 = vsub.s32 0, %v504
          %v506 = vrot.slane %v501, %v505
          %v507 = vlaneseq
          %v508 = vshrl.u32 %v507, 7
          %v509 = vsub.s32 1, %v508
          %v510 = vrot.slane %v501, %v509
          %v513 = vmul.f32 %v496, %v506
          %v514 = vmul.f32 %v492, %v510
          %v515 = vmul.f32 %v497, %v506
          %v516 = vmul.f32 %v493, %v510
          %v517 = vmul.f32 %v498, %v506
          %v518 = vmul.f32 %v494, %v510
          %v519 = vmul.f32 %v499, %v506
          %v520 = vmul.f32 %v495, %v510
          %521 = vst [vmem:[#allocation2 + $0x80] sm:$0xff] %v513
          %522 = vst [vmem:[#allocation2 + $0x88] sm:$0xff] %v514
          %523 = vst [vmem:[#allocation2 + $0x90] sm:$0xff] %v515
          %524 = vst [vmem:[#allocation2 + $0x98] sm:$0xff] %v516
          %525 = vst [vmem:[#allocation2 + $0xa0] sm:$0xff] %v517
          %526 = vst [vmem:[#allocation2 + $0xa8] sm:$0xff] %v518
          %527 = vst [vmem:[#allocation2 + $0xb0] sm:$0xff] %v519
          %528 = vst [vmem:[#allocation2 + $0xb8] sm:$0xff] %v520
          %529 = vrot.lane.b32.xlu0 %v358, 1
          %v530 = vpop.permute.xlu0 %529
          %531 = vrot.lane.b32.xlu0 %v360, 1
          %v532 = vpop.permute.xlu0 %531
          %533 = vrot.lane.b32.xlu0 %v362, 1
          %v534 = vpop.permute.xlu0 %533
          %535 = vrot.lane.b32.xlu0 %v364, 1
          %v536 = vpop.permute.xlu0 %535
          %537 = vrot.lane.b32.xlu0 %v359, 1
          %v538 = vpop.permute.xlu0 %537
          %539 = vrot.lane.b32.xlu0 %v361, 1
          %v540 = vpop.permute.xlu0 %539
          %541 = vrot.lane.b32.xlu0 %v363, 1
          %v542 = vpop.permute.xlu0 %541
          %543 = vrot.lane.b32.xlu0 %v365, 1
          %v544 = vpop.permute.xlu0 %543
          %vm545 = vcmp.lt.s32.totalorder %v383, 1
          %v546 = vsel %vm545, %v530, %v538
          %v547 = vsel %vm545, %v532, %v540
          %v548 = vsel %vm545, %v534, %v542
          %v549 = vsel %vm545, %v536, %v544
          %v550 = vsel %vm545, %v538, %v530
          %v551 = vsel %vm545, %v540, %v532
          %v552 = vsel %vm545, %v542, %v534
          %v553 = vsel %vm545, %v544, %v536
          %s554 = scalar_lea.vmem %s1, 3
          %v555 = vld [vmem:[%s554] ss:$8 sm:$0x3]
          %v557 = vlaneseq
          %v558 = vshrl.u32 %v557, 7
          %v559 = vsub.s32 0, %v558
          %v560 = vrot.slane %v555, %v559
          %v561 = vlaneseq
          %v562 = vshrl.u32 %v561, 7
          %v563 = vsub.s32 1, %v562
          %v564 = vrot.slane %v555, %v563
          %v567 = vmul.f32 %v550, %v560
          %v568 = vmul.f32 %v546, %v564
          %v569 = vmul.f32 %v551, %v560
          %v570 = vmul.f32 %v547, %v564
          %v571 = vmul.f32 %v552, %v560
          %v572 = vmul.f32 %v548, %v564
          %v573 = vmul.f32 %v553, %v560
          %v574 = vmul.f32 %v549, %v564
          %575 = vst [vmem:[#allocation2 + $0xc0] sm:$0xff] %v567
          %576 = vst [vmem:[#allocation2 + $0xc8] sm:$0xff] %v568
          %577 = vst [vmem:[#allocation2 + $0xd0] sm:$0xff] %v569
          %578 = vst [vmem:[#allocation2 + $0xd8] sm:$0xff] %v570
          %579 = vst [vmem:[#allocation2 + $0xe0] sm:$0xff] %v571
          %580 = vst [vmem:[#allocation2 + $0xe8] sm:$0xff] %v572
          %581 = vst [vmem:[#allocation2 + $0xf0] sm:$0xff] %v573
          %582 = vst [vmem:[#allocation2 + $0xf8] sm:$0xff] %v574
          %583 = vst [vmem:[#allocation2 + $0x100] sm:$0xff] %v358
          %584 = vst [vmem:[#allocation2 + $0x108] sm:$0xff] %v359
          %585 = vst [vmem:[#allocation2 + $0x110] sm:$0xff] %v360
          %586 = vst [vmem:[#allocation2 + $0x118] sm:$0xff] %v361
          %587 = vst [vmem:[#allocation2 + $0x120] sm:$0xff] %v362
          %588 = vst [vmem:[#allocation2 + $0x128] sm:$0xff] %v363
          %589 = vst [vmem:[#allocation2 + $0x130] sm:$0xff] %v364
          %590 = vst [vmem:[#allocation2 + $0x138] sm:$0xff] %v365
          %591 = vrot.lane.b32.xlu0 %v358, 127
          %v592 = vpop.permute.xlu0 %591
          %593 = vrot.lane.b32.xlu0 %v360, 127
          %v594 = vpop.permute.xlu0 %593
          %595 = vrot.lane.b32.xlu0 %v362, 127
          %v596 = vpop.permute.xlu0 %595
          %597 = vrot.lane.b32.xlu0 %v364, 127
          %v598 = vpop.permute.xlu0 %597
          %599 = vrot.lane.b32.xlu0 %v359, 127
          %v600 = vpop.permute.xlu0 %599
          %601 = vrot.lane.b32.xlu0 %v361, 127
          %v602 = vpop.permute.xlu0 %601
          %603 = vrot.lane.b32.xlu0 %v363, 127
          %v604 = vpop.permute.xlu0 %603
          %605 = vrot.lane.b32.xlu0 %v365, 127
          %v606 = vpop.permute.xlu0 %605
          %vm607 = vcmp.lt.s32.totalorder %v383, 127
          %v608 = vsel %vm607, %v592, %v600
          %v609 = vsel %vm607, %v594, %v602
          %v610 = vsel %vm607, %v596, %v604
          %v611 = vsel %vm607, %v598, %v606
          %v612 = vsel %vm607, %v600, %v592
          %v613 = vsel %vm607, %v602, %v594
          %v614 = vsel %vm607, %v604, %v596
          %v615 = vsel %vm607, %v606, %v598
          %s616 = scalar_lea.vmem %s1, 5
          %v617 = vld [vmem:[%s616] ss:$8 sm:$0x3]
          %v619 = vlaneseq
          %v620 = vshrl.u32 %v619, 7
          %v621 = vsub.s32 0, %v620
          %v622 = vrot.slane %v617, %v621
          %v623 = vlaneseq
          %v624 = vshrl.u32 %v623, 7
          %v625 = vsub.s32 1, %v624
          %v626 = vrot.slane %v617, %v625
          %v629 = vmul.f32 %v608, %v622
          %v630 = vmul.f32 %v612, %v626
          %v631 = vmul.f32 %v609, %v622
          %v632 = vmul.f32 %v613, %v626
          %v633 = vmul.f32 %v610, %v622
          %v634 = vmul.f32 %v614, %v626
          %v635 = vmul.f32 %v611, %v622
          %v636 = vmul.f32 %v615, %v626
          %637 = vst [vmem:[#allocation2 + $0x140] sm:$0xff] %v629
          %638 = vst [vmem:[#allocation2 + $0x148] sm:$0xff] %v630
          %639 = vst [vmem:[#allocation2 + $0x150] sm:$0xff] %v631
          %640 = vst [vmem:[#allocation2 + $0x158] sm:$0xff] %v632
          %641 = vst [vmem:[#allocation2 + $0x160] sm:$0xff] %v633
          %642 = vst [vmem:[#allocation2 + $0x168] sm:$0xff] %v634
          %643 = vst [vmem:[#allocation2 + $0x170] sm:$0xff] %v635
          %644 = vst [vmem:[#allocation2 + $0x178] sm:$0xff] %v636
          %645 = vrot.lane.b32.xlu0 %v358, 113
          %v646 = vpop.permute.xlu0 %645
          %647 = vrot.lane.b32.xlu0 %v360, 113
          %v648 = vpop.permute.xlu0 %647
          %649 = vrot.lane.b32.xlu0 %v362, 113
          %v650 = vpop.permute.xlu0 %649
          %651 = vrot.lane.b32.xlu0 %v364, 113
          %v652 = vpop.permute.xlu0 %651
          %653 = vrot.lane.b32.xlu0 %v359, 113
          %v654 = vpop.permute.xlu0 %653
          %655 = vrot.lane.b32.xlu0 %v361, 113
          %v656 = vpop.permute.xlu0 %655
          %657 = vrot.lane.b32.xlu0 %v363, 113
          %v658 = vpop.permute.xlu0 %657
          %659 = vrot.lane.b32.xlu0 %v365, 113
          %v660 = vpop.permute.xlu0 %659
          %vm661 = vcmp.lt.s32.totalorder %v383, 113
          %v662 = vsel %vm661, %v646, %v654
          %v663 = vsel %vm661, %v648, %v656
          %v664 = vsel %vm661, %v650, %v658
          %v665 = vsel %vm661, %v652, %v660
          %v666 = vsel %vm661, %v654, %v646
          %v667 = vsel %vm661, %v656, %v648
          %v668 = vsel %vm661, %v658, %v650
          %v669 = vsel %vm661, %v660, %v652
          %s670 = scalar_lea.vmem %s1, 6
          %v671 = vld [vmem:[%s670] ss:$8 sm:$0x3]
          %v673 = vlaneseq
          %v674 = vshrl.u32 %v673, 7
          %v675 = vsub.s32 0, %v674
          %v676 = vrot.slane %v671, %v675
          %v677 = vlaneseq
          %v678 = vshrl.u32 %v677, 7
          %v679 = vsub.s32 1, %v678
          %v680 = vrot.slane %v671, %v679
          %v683 = vmul.f32 %v662, %v676
          %v684 = vmul.f32 %v666, %v680
          %v685 = vmul.f32 %v663, %v676
          %v686 = vmul.f32 %v667, %v680
          %v687 = vmul.f32 %v664, %v676
          %v688 = vmul.f32 %v668, %v680
          %v689 = vmul.f32 %v665, %v676
          %v690 = vmul.f32 %v669, %v680
          %691 = vst [vmem:[#allocation2 + $0x180] sm:$0xff] %v683
          %692 = vst [vmem:[#allocation2 + $0x188] sm:$0xff] %v684
          %693 = vst [vmem:[#allocation2 + $0x190] sm:$0xff] %v685
          %694 = vst [vmem:[#allocation2 + $0x198] sm:$0xff] %v686
          %695 = vst [vmem:[#allocation2 + $0x1a0] sm:$0xff] %v687
          %696 = vst [vmem:[#allocation2 + $0x1a8] sm:$0xff] %v688
          %697 = vst [vmem:[#allocation2 + $0x1b0] sm:$0xff] %v689
          %698 = vst [vmem:[#allocation2 + $0x1b8] sm:$0xff] %v690
          %699 = vrot.lane.b32.xlu0 %v358, 112
          %v700 = vpop.permute.xlu0 %699
          %701 = vrot.lane.b32.xlu0 %v360, 112
          %v702 = vpop.permute.xlu0 %701
          %703 = vrot.lane.b32.xlu0 %v362, 112
          %v704 = vpop.permute.xlu0 %703
          %705 = vrot.lane.b32.xlu0 %v364, 112
          %v706 = vpop.permute.xlu0 %705
          %707 = vrot.lane.b32.xlu0 %v359, 112
          %v708 = vpop.permute.xlu0 %707
          %709 = vrot.lane.b32.xlu0 %v361, 112
          %v710 = vpop.permute.xlu0 %709
          %711 = vrot.lane.b32.xlu0 %v363, 112
          %v712 = vpop.permute.xlu0 %711
          %713 = vrot.lane.b32.xlu0 %v365, 112
          %v714 = vpop.permute.xlu0 %713
          %vm715 = vcmp.lt.s32.totalorder %v383, 112
          %v716 = vsel %vm715, %v700, %v708
          %v717 = vsel %vm715, %v702, %v710
          %v718 = vsel %vm715, %v704, %v712
          %v719 = vsel %vm715, %v706, %v714
          %v720 = vsel %vm715, %v708, %v700
          %v721 = vsel %vm715, %v710, %v702
          %v722 = vsel %vm715, %v712, %v704
          %v723 = vsel %vm715, %v714, %v706
          %s724 = scalar_lea.vmem %s1, 7
          %v725 = vld [vmem:[%s724] ss:$8 sm:$0x3]
          %v727 = vlaneseq
          %v728 = vshrl.u32 %v727, 7
          %v729 = vsub.s32 0, %v728
          %v730 = vrot.slane %v725, %v729
          %v731 = vlaneseq
          %v732 = vshrl.u32 %v731, 7
          %v733 = vsub.s32 1, %v732
          %v734 = vrot.slane %v725, %v733
          %v737 = vmul.f32 %v716, %v730
          %v738 = vmul.f32 %v720, %v734
          %v739 = vmul.f32 %v717, %v730
          %v740 = vmul.f32 %v721, %v734
          %v741 = vmul.f32 %v718, %v730
          %v742 = vmul.f32 %v722, %v734
          %v743 = vmul.f32 %v719, %v730
          %v744 = vmul.f32 %v723, %v734
          %745 = vst [vmem:[#allocation2 + $0x1c0] sm:$0xff] %v737
          %746 = vst [vmem:[#allocation2 + $0x1c8] sm:$0xff] %v738
          %747 = vst [vmem:[#allocation2 + $0x1d0] sm:$0xff] %v739
          %748 = vst [vmem:[#allocation2 + $0x1d8] sm:$0xff] %v740
          %749 = vst [vmem:[#allocation2 + $0x1e0] sm:$0xff] %v741
          %750 = vst [vmem:[#allocation2 + $0x1e8] sm:$0xff] %v742
          %751 = vst [vmem:[#allocation2 + $0x1f0] sm:$0xff] %v743
          %752 = vst [vmem:[#allocation2 + $0x1f8] sm:$0xff] %v744
          %753 = vrot.lane.b32.xlu0 %v358, 111
          %v754 = vpop.permute.xlu0 %753
          %755 = vrot.lane.b32.xlu0 %v360, 111
          %v756 = vpop.permute.xlu0 %755
          %757 = vrot.lane.b32.xlu0 %v362, 111
          %v758 = vpop.permute.xlu0 %757
          %759 = vrot.lane.b32.xlu0 %v364, 111
          %v760 = vpop.permute.xlu0 %759
          %761 = vrot.lane.b32.xlu0 %v359, 111
          %v762 = vpop.permute.xlu0 %761
          %763 = vrot.lane.b32.xlu0 %v361, 111
          %v764 = vpop.permute.xlu0 %763
          %765 = vrot.lane.b32.xlu0 %v363, 111
          %v766 = vpop.permute.xlu0 %765
          %767 = vrot.lane.b32.xlu0 %v365, 111
          %v768 = vpop.permute.xlu0 %767
          %vm769 = vcmp.lt.s32.totalorder %v383, 111
          %v770 = vsel %vm769, %v754, %v762
          %v771 = vsel %vm769, %v756, %v764
          %v772 = vsel %vm769, %v758, %v766
          %v773 = vsel %vm769, %v760, %v768
          %v774 = vsel %vm769, %v762, %v754
          %v775 = vsel %vm769, %v764, %v756
          %v776 = vsel %vm769, %v766, %v758
          %v777 = vsel %vm769, %v768, %v760
          %s778 = scalar_lea.vmem %s1, 16
          %v779 = vld [vmem:[%s778] ss:$8 sm:$0x3]
          %v781 = vlaneseq
          %v782 = vshrl.u32 %v781, 7
          %v783 = vsub.s32 0, %v782
          %v784 = vrot.slane %v779, %v783
          %v785 = vlaneseq
          %v786 = vshrl.u32 %v785, 7
          %v787 = vsub.s32 1, %v786
          %v788 = vrot.slane %v779, %v787
          %v791 = vmul.f32 %v770, %v784
          %v792 = vmul.f32 %v774, %v788
          %v793 = vmul.f32 %v771, %v784
          %v794 = vmul.f32 %v775, %v788
          %v795 = vmul.f32 %v772, %v784
          %v796 = vmul.f32 %v776, %v788
          %v797 = vmul.f32 %v773, %v784
          %v798 = vmul.f32 %v777, %v788
          %799 = vst [vmem:[#allocation2 + $0x200] sm:$0xff] %v791
          %800 = vst [vmem:[#allocation2 + $0x208] sm:$0xff] %v792
          %801 = vst [vmem:[#allocation2 + $0x210] sm:$0xff] %v793
          %802 = vst [vmem:[#allocation2 + $0x218] sm:$0xff] %v794
          %803 = vst [vmem:[#allocation2 + $0x220] sm:$0xff] %v795
          %804 = vst [vmem:[#allocation2 + $0x228] sm:$0xff] %v796
          %805 = vst [vmem:[#allocation2 + $0x230] sm:$0xff] %v797
          %806 = vst [vmem:[#allocation2 + $0x238] sm:$0xff] %v798
          %v807 = vld [vmem:[#allocation2] sm:$0xff]
          %v808 = vld [vmem:[#allocation2 + $0x8] sm:$0xff]
          %v809 = vld [vmem:[#allocation2 + $0x10] sm:$0xff]
          %v810 = vld [vmem:[#allocation2 + $0x18] sm:$0xff]
          %v811 = vld [vmem:[#allocation2 + $0x20] sm:$0xff]
          %v812 = vld [vmem:[#allocation2 + $0x28] sm:$0xff]
          %v813 = vld [vmem:[#allocation2 + $0x30] sm:$0xff]
          %v814 = vld [vmem:[#allocation2 + $0x38] sm:$0xff]
          %v815 = vld [vmem:[#allocation2 + $0x40] sm:$0xff]
          %v816 = vld [vmem:[#allocation2 + $0x48] sm:$0xff]
          %v817 = vld [vmem:[#allocation2 + $0x50] sm:$0xff]
          %v818 = vld [vmem:[#allocation2 + $0x58] sm:$0xff]
          %v819 = vld [vmem:[#allocation2 + $0x60] sm:$0xff]
          %v820 = vld [vmem:[#allocation2 + $0x68] sm:$0xff]
          %v821 = vld [vmem:[#allocation2 + $0x70] sm:$0xff]
          %v822 = vld [vmem:[#allocation2 + $0x78] sm:$0xff]
          %v823 = vld [vmem:[#allocation2 + $0x80] sm:$0xff]
          %v824 = vld [vmem:[#allocation2 + $0x88] sm:$0xff]
          %v825 = vld [vmem:[#allocation2 + $0x90] sm:$0xff]
          %v826 = vld [vmem:[#allocation2 + $0x98] sm:$0xff]
          %v827 = vld [vmem:[#allocation2 + $0xa0] sm:$0xff]
          %v828 = vld [vmem:[#allocation2 + $0xa8] sm:$0xff]
          %v829 = vld [vmem:[#allocation2 + $0xb0] sm:$0xff]
          %v830 = vld [vmem:[#allocation2 + $0xb8] sm:$0xff]
          %v831 = vld [vmem:[#allocation2 + $0xc0] sm:$0xff]
          %v832 = vld [vmem:[#allocation2 + $0xc8] sm:$0xff]
          %v833 = vld [vmem:[#allocation2 + $0xd0] sm:$0xff]
          %v834 = vld [vmem:[#allocation2 + $0xd8] sm:$0xff]
          %v835 = vld [vmem:[#allocation2 + $0xe0] sm:$0xff]
          %v836 = vld [vmem:[#allocation2 + $0xe8] sm:$0xff]
          %v837 = vld [vmem:[#allocation2 + $0xf0] sm:$0xff]
          %v838 = vld [vmem:[#allocation2 + $0xf8] sm:$0xff]
          %v839 = vld [vmem:[#allocation2 + $0x100] sm:$0xff]
          %v840 = vld [vmem:[#allocation2 + $0x108] sm:$0xff]
          %v841 = vld [vmem:[#allocation2 + $0x110] sm:$0xff]
          %v842 = vld [vmem:[#allocation2 + $0x118] sm:$0xff]
          %v843 = vld [vmem:[#allocation2 + $0x120] sm:$0xff]
          %v844 = vld [vmem:[#allocation2 + $0x128] sm:$0xff]
          %v845 = vld [vmem:[#allocation2 + $0x130] sm:$0xff]
          %v846 = vld [vmem:[#allocation2 + $0x138] sm:$0xff]
          %v847 = vld [vmem:[#allocation2 + $0x140] sm:$0xff]
          %v848 = vld [vmem:[#allocation2 + $0x148] sm:$0xff]
          %v849 = vld [vmem:[#allocation2 + $0x150] sm:$0xff]
          %v850 = vld [vmem:[#allocation2 + $0x158] sm:$0xff]
          %v851 = vld [vmem:[#allocation2 + $0x160] sm:$0xff]
          %v852 = vld [vmem:[#allocation2 + $0x168] sm:$0xff]
          %v853 = vld [vmem:[#allocation2 + $0x170] sm:$0xff]
          %v854 = vld [vmem:[#allocation2 + $0x178] sm:$0xff]
          %v855 = vld [vmem:[#allocation2 + $0x180] sm:$0xff]
          %v856 = vld [vmem:[#allocation2 + $0x188] sm:$0xff]
          %v857 = vld [vmem:[#allocation2 + $0x190] sm:$0xff]
          %v858 = vld [vmem:[#allocation2 + $0x198] sm:$0xff]
          %v859 = vld [vmem:[#allocation2 + $0x1a0] sm:$0xff]
          %v860 = vld [vmem:[#allocation2 + $0x1a8] sm:$0xff]
          %v861 = vld [vmem:[#allocation2 + $0x1b0] sm:$0xff]
          %v862 = vld [vmem:[#allocation2 + $0x1b8] sm:$0xff]
          %v863 = vld [vmem:[#allocation2 + $0x1c0] sm:$0xff]
          %v864 = vld [vmem:[#allocation2 + $0x1c8] sm:$0xff]
          %v865 = vld [vmem:[#allocation2 + $0x1d0] sm:$0xff]
          %v866 = vld [vmem:[#allocation2 + $0x1d8] sm:$0xff]
          %v867 = vld [vmem:[#allocation2 + $0x1e0] sm:$0xff]
          %v868 = vld [vmem:[#allocation2 + $0x1e8] sm:$0xff]
          %v869 = vld [vmem:[#allocation2 + $0x1f0] sm:$0xff]
          %v870 = vld [vmem:[#allocation2 + $0x1f8] sm:$0xff]
          %v871 = vld [vmem:[#allocation2 + $0x200] sm:$0xff]
          %v872 = vld [vmem:[#allocation2 + $0x208] sm:$0xff]
          %v873 = vld [vmem:[#allocation2 + $0x210] sm:$0xff]
          %v874 = vld [vmem:[#allocation2 + $0x218] sm:$0xff]
          %v875 = vld [vmem:[#allocation2 + $0x220] sm:$0xff]
          %v876 = vld [vmem:[#allocation2 + $0x228] sm:$0xff]
          %v877 = vld [vmem:[#allocation2 + $0x230] sm:$0xff]
          %v878 = vld [vmem:[#allocation2 + $0x238] sm:$0xff]
          %vm879 = vcmask 261120
          %v881 = vsel %vm879, %v348, 0
          %v884 = vsel %vm879, %v351, 0
          %v887 = vsel %vm879, %v354, 0
          %v890 = vsel %vm879, %v357, 0
          %892 = vmatprep.subr.mxu0 %v808
          %893 = vmatpush1.msra.mxu0 %v807
          %894 = vmatprep.subr.mxu0 %v810
          %895 = vmatpush1.msra.mxu0 %v809
          %896 = vmatprep.subr.mxu0 %v812
          %897 = vmatpush1.msra.mxu0 %v811
          %898 = vmatprep.subr.mxu0 %v814
          %899 = vmatpush1.msra.mxu0 %v813
          %900 = vmatprep.subr.mxu0 %v816
          %901 = vmatpush1.msra.mxu0 %v815
          %902 = vmatprep.subr.mxu0 %v818
          %903 = vmatpush1.msra.mxu0 %v817
          %904 = vmatprep.subr.mxu0 %v820
          %905 = vmatpush1.msra.mxu0 %v819
          %906 = vmatprep.subr.mxu0 %v822
          %907 = vmatpush1.msra.mxu0 %v821
          %908 = vmatprep.subr.mxu0 %v824
          %909 = vmatpush1.msra.mxu0 %v823
          %910 = vmatprep.subr.mxu0 %v826
          %911 = vmatpush1.msra.mxu0 %v825
          %912 = vmatprep.subr.mxu0 %v828
          %913 = vmatpush1.msra.mxu0 %v827
          %914 = vmatprep.subr.mxu0 %v830
          %915 = vmatpush1.msra.mxu0 %v829
          %916 = vmatprep.subr.mxu0 %v832
          %917 = vmatpush1.msra.mxu0 %v831
          %918 = vmatprep.subr.mxu0 %v834
          %919 = vmatpush1.msra.mxu0 %v833
          %920 = vmatprep.subr.mxu0 %v836
          %921 = vmatpush1.msra.mxu0 %v835
          %922 = vmatprep.subr.mxu0 %v838
          %923 = vmatpush1.msra.mxu0 %v837
          %924 = vmatprep.subr.mxu0 %v840
          %925 = vmatpush1.msra.mxu0 %v839
          %926 = vmatprep.subr.mxu0 %v842
          %927 = vmatpush1.msra.mxu0 %v841
          %928 = vmatprep.subr.mxu0 %v844
          %929 = vmatpush1.msra.mxu0 %v843
          %930 = vmatprep.subr.mxu0 %v846
          %931 = vmatpush1.msra.mxu0 %v845
          %932 = vmatprep.subr.mxu0 %v848
          %933 = vmatpush1.msra.mxu0 %v847
          %934 = vmatprep.subr.mxu0 %v850
          %935 = vmatpush1.msra.mxu0 %v849
          %936 = vmatprep.subr.mxu0 %v852
          %937 = vmatpush1.msra.mxu0 %v851
          %938 = vmatprep.subr.mxu0 %v854
          %939 = vmatpush1.msra.mxu0 %v853
          %940 = vmatprep.subr.mxu0 %v856
          %941 = vmatpush1.msra.mxu0 %v855
          %942 = vmatprep.subr.mxu0 %v858
          %943 = vmatpush1.msra.mxu0 %v857
          %944 = vmatprep.subr.mxu0 %v860
          %945 = vmatpush1.msra.mxu0 %v859
          %946 = vmatprep.subr.mxu0 %v862
          %947 = vmatpush1.msra.mxu0 %v861
          %948 = vmatprep.subr.mxu0 %v864
          %949 = vmatpush1.msra.mxu0 %v863
          %950 = vmatprep.subr.mxu0 %v866
          %951 = vmatpush1.msra.mxu0 %v865
          %952 = vmatprep.subr.mxu0 %v868
          %953 = vmatpush1.msra.mxu0 %v867
          %954 = vmatprep.subr.mxu0 %v870
          %955 = vmatpush1.msra.mxu0 %v869
          %956 = vmatprep.mubr.f32.mxu0 %v347
          %957 = vmatmul.mubr.f32.gmra.mrb[0].mxu0 %v346
          %v958 = vpop.f32.mrb[0].mxu0
          %v959 = vadd.f32 0.0, %v958
          %v960 = vpop.f32.mrb[0].mxu0
          %v961 = vadd.f32 0.0, %v960
          %962 = vmatprep.mubr.f32.mxu0 %v350
          %963 = vmatmul.mubr.f32.gmra.mrb[0].mxu0 %v349
          %v964 = vpop.f32.mrb[0].mxu0
          %v965 = vadd.f32 0.0, %v964
          %v966 = vpop.f32.mrb[0].mxu0
          %v967 = vadd.f32 0.0, %v966
          %968 = vmatprep.mubr.f32.mxu0 %v353
          %969 = vmatmul.mubr.f32.gmra.mrb[0].mxu0 %v352
          %v970 = vpop.f32.mrb[0].mxu0
          %v971 = vadd.f32 0.0, %v970
          %v972 = vpop.f32.mrb[0].mxu0
          %v973 = vadd.f32 0.0, %v972
          %974 = vmatprep.mubr.f32.mxu0 %v356
          %975 = vmatmul.mubr.f32.gmra.mrb[0].mxu0 %v355
          %v976 = vpop.f32.mrb[0].mxu0
          %v977 = vadd.f32 0.0, %v976
          %v978 = vpop.f32.mrb[0].mxu0
          %v979 = vadd.f32 0.0, %v978
          %980 = vdwg.mxu0
          %981 = vmatprep.subr.mxu0 %v872
          %982 = vmatpush1.msra.mxu0 %v871
          %983 = vmatprep.subr.mxu0 %v874
          %984 = vmatpush1.msra.mxu0 %v873
          %985 = vmatprep.subr.mxu0 %v876
          %986 = vmatpush1.msra.mxu0 %v875
          %987 = vmatprep.subr.mxu0 %v878
          %988 = vmatpush1.msra.mxu0 %v877
          %989 = vmatprep.subr.mxu0 0.0
          %990 = vmatpush1.msra.mxu0 0.0
          %991 = vmatprep.subr.mxu0 0.0
          %992 = vmatpush1.msra.mxu0 0.0
          %993 = vmatprep.subr.mxu0 0.0
          %994 = vmatpush1.msra.mxu0 0.0
          %995 = vmatprep.subr.mxu0 0.0
          %996 = vmatpush1.msra.mxu0 0.0
          %997 = vmatprep.subr.mxu0 0.0
          %998 = vmatpush1.msra.mxu0 0.0
          %999 = vmatprep.subr.mxu0 0.0
          %1000 = vmatpush1.msra.mxu0 0.0
          %1001 = vmatprep.subr.mxu0 0.0
          %1002 = vmatpush1.msra.mxu0 0.0
          %1003 = vmatprep.subr.mxu0 0.0
          %1004 = vmatpush1.msra.mxu0 0.0
          %1005 = vmatprep.subr.mxu0 0.0
          %1006 = vmatpush1.msra.mxu0 0.0
          %1007 = vmatprep.subr.mxu0 0.0
          %1008 = vmatpush1.msra.mxu0 0.0
          %1009 = vmatprep.subr.mxu0 0.0
          %1010 = vmatpush1.msra.mxu0 0.0
          %1011 = vmatprep.subr.mxu0 0.0
          %1012 = vmatpush1.msra.mxu0 0.0
          %1013 = vmatprep.subr.mxu0 0.0
          %1014 = vmatpush1.msra.mxu0 0.0
          %1015 = vmatprep.subr.mxu0 0.0
          %1016 = vmatpush1.msra.mxu0 0.0
          %1017 = vmatprep.subr.mxu0 0.0
          %1018 = vmatpush1.msra.mxu0 0.0
          %1019 = vmatprep.subr.mxu0 0.0
          %1020 = vmatpush1.msra.mxu0 0.0
          %1021 = vmatprep.subr.mxu0 0.0
          %1022 = vmatpush1.msra.mxu0 0.0
          %1023 = vmatprep.subr.mxu0 0.0
          %1024 = vmatpush1.msra.mxu0 0.0
          %1025 = vmatprep.subr.mxu0 0.0
          %1026 = vmatpush1.msra.mxu0 0.0
          %1027 = vmatprep.subr.mxu0 0.0
          %1028 = vmatpush1.msra.mxu0 0.0
          %1029 = vmatprep.subr.mxu0 0.0
          %1030 = vmatpush1.msra.mxu0 0.0
          %1031 = vmatprep.subr.mxu0 0.0
          %1032 = vmatpush1.msra.mxu0 0.0
          %1033 = vmatprep.subr.mxu0 0.0
          %1034 = vmatpush1.msra.mxu0 0.0
          %1035 = vmatprep.subr.mxu0 0.0
          %1036 = vmatpush1.msra.mxu0 0.0
          %1037 = vmatprep.subr.mxu0 0.0
          %1038 = vmatpush1.msra.mxu0 0.0
          %1039 = vmatprep.subr.mxu0 0.0
          %1040 = vmatpush1.msra.mxu0 0.0
          %1041 = vmatprep.subr.mxu0 0.0
          %1042 = vmatpush1.msra.mxu0 0.0
          %1043 = vmatprep.subr.mxu0 0.0
          %1044 = vmatpush1.msra.mxu0 0.0
          %1045 = vmatprep.mubr.f32.mxu0 0.0
          %1046 = vmatmul.mubr.f32.gmra.mrb[0].mxu0 %v881
          %v1047 = vpop.f32.mrb[0].mxu0
          %v1048 = vadd.f32 %v959, %v1047
          %v1049 = vpop.f32.mrb[0].mxu0
          %v1050 = vadd.f32 %v961, %v1049
          %1051 = vmatprep.mubr.f32.mxu0 0.0
          %1052 = vmatmul.mubr.f32.gmra.mrb[0].mxu0 %v884
          %v1053 = vpop.f32.mrb[0].mxu0
          %v1054 = vadd.f32 %v965, %v1053
          %v1055 = vpop.f32.mrb[0].mxu0
          %v1056 = vadd.f32 %v967, %v1055
          %1057 = vmatprep.mubr.f32.mxu0 0.0
          %1058 = vmatmul.mubr.f32.gmra.mrb[0].mxu0 %v887
          %v1059 = vpop.f32.mrb[0].mxu0
          %v1060 = vadd.f32 %v971, %v1059
          %v1061 = vpop.f32.mrb[0].mxu0
          %v1062 = vadd.f32 %v973, %v1061
          %1063 = vmatprep.mubr.f32.mxu0 0.0
          %1064 = vmatmul.mubr.f32.gmra.mrb[0].mxu0 %v890
          %v1065 = vpop.f32.mrb[0].mxu0
          %v1066 = vadd.f32 %v977, %v1065
          %v1067 = vpop.f32.mrb[0].mxu0
          %v1068 = vadd.f32 %v979, %v1067
          %1069 = vdwg.mxu0
          %v1070 = vmax.f32 %v1048, 0.0
          %v1071 = vmax.f32 %v1050, 0.0
          %v1072 = vmax.f32 %v1054, 0.0
          %v1073 = vmax.f32 %v1056, 0.0
          %v1074 = vmax.f32 %v1060, 0.0
          %v1075 = vmax.f32 %v1062, 0.0
          %v1076 = vmax.f32 %v1066, 0.0
          %v1077 = vmax.f32 %v1068, 0.0
          %1078 = vst [vmem:[#allocation4] sm:$0xff] %v1070
          %1079 = vst [vmem:[#allocation4 + $0x8] sm:$0xff] %v1071
          %1080 = vst [vmem:[#allocation4 + $0x10] sm:$0xff] %v1072
          %1081 = vst [vmem:[#allocation4 + $0x18] sm:$0xff] %v1073
          %1082 = vst [vmem:[#allocation4 + $0x20] sm:$0xff] %v1074
          %1083 = vst [vmem:[#allocation4 + $0x28] sm:$0xff] %v1075
          %1084 = vst [vmem:[#allocation4 + $0x30] sm:$0xff] %v1076
          %1085 = vst [vmem:[#allocation4 + $0x38] sm:$0xff] %v1077
          %s1086 = smul.addr %s343, 8
          %s1087 = scalar_lea.vmem [#allocation8], %s1086
          %v1088 = vld [vmem:[%s1087] sm:$0xff]
          %v1089 = vld [vmem:[%s1087 + $0x8] sm:$0xff]
          %v1090 = vld [vmem:[%s1087 + $0x10] sm:$0xff]
          %v1091 = vld [vmem:[%s1087 + $0x18] sm:$0xff]
          %v1092 = vld [vmem:[%s1087 + $0x20] sm:$0xff]
          %v1093 = vld [vmem:[%s1087 + $0x28] sm:$0xff]
          %v1094 = vld [vmem:[%s1087 + $0x30] sm:$0xff]
          %v1095 = vld [vmem:[%s1087 + $0x38] sm:$0xff]
          %v1096 = vld [vmem:[%s1087 + $0x40] sm:$0xff]
          %v1097 = vld [vmem:[%s1087 + $0x48] sm:$0xff]
          %v1098 = vld [vmem:[%s1087 + $0x50] sm:$0xff]
          %v1099 = vld [vmem:[%s1087 + $0x58] sm:$0xff]
          %v1100 = vld [vmem:[#allocation4] sm:$0xff]
          %v1101 = vld [vmem:[#allocation4 + $0x8] sm:$0xff]
          %v1102 = vld [vmem:[#allocation4 + $0x10] sm:$0xff]
          %v1103 = vld [vmem:[#allocation4 + $0x18] sm:$0xff]
          %v1104 = vld [vmem:[#allocation4 + $0x20] sm:$0xff]
          %v1105 = vld [vmem:[#allocation4 + $0x28] sm:$0xff]
          %v1106 = vld [vmem:[#allocation4 + $0x30] sm:$0xff]
          %v1107 = vld [vmem:[#allocation4 + $0x38] sm:$0xff]
          %1108 = vrot.lane.b32.xlu0 %v1100, 17
          %v1109 = vpop.permute.xlu0 %1108
          %1110 = vrot.lane.b32.xlu0 %v1102, 17
          %v1111 = vpop.permute.xlu0 %1110
          %1112 = vrot.lane.b32.xlu0 %v1104, 17
          %v1113 = vpop.permute.xlu0 %1112
          %1114 = vrot.lane.b32.xlu0 %v1106, 17
          %v1115 = vpop.permute.xlu0 %1114
          %1116 = vrot.lane.b32.xlu0 %v1101, 17
          %v1117 = vpop.permute.xlu0 %1116
          %1118 = vrot.lane.b32.xlu0 %v1103, 17
          %v1119 = vpop.permute.xlu0 %1118
          %1120 = vrot.lane.b32.xlu0 %v1105, 17
          %v1121 = vpop.permute.xlu0 %1120
          %1122 = vrot.lane.b32.xlu0 %v1107, 17
          %v1123 = vpop.permute.xlu0 %1122
          %v1124 = vsel %vm384, %v1109, %v1117
          %v1125 = vsel %vm384, %v1111, %v1119
          %v1126 = vsel %vm384, %v1113, %v1121
          %v1127 = vsel %vm384, %v1115, %v1123
          %v1128 = vsel %vm384, %v1117, %v1109
          %v1129 = vsel %vm384, %v1119, %v1111
          %v1130 = vsel %vm384, %v1121, %v1113
          %v1131 = vsel %vm384, %v1123, %v1115
          %v1132 = vld [vmem:[%s1] ss:$8 sm:$0x3]
          %v1134 = vlaneseq
          %v1135 = vshrl.u32 %v1134, 7
          %v1136 = vsub.s32 0, %v1135
          %v1137 = vrot.slane %v1132, %v1136
          %v1138 = vlaneseq
          %v1139 = vshrl.u32 %v1138, 7
          %v1140 = vsub.s32 1, %v1139
          %v1141 = vrot.slane %v1132, %v1140
          %v1144 = vmul.f32 %v1128, %v1137
          %v1145 = vmul.f32 %v1124, %v1141
          %v1146 = vmul.f32 %v1129, %v1137
          %v1147 = vmul.f32 %v1125, %v1141
          %v1148 = vmul.f32 %v1130, %v1137
          %v1149 = vmul.f32 %v1126, %v1141
          %v1150 = vmul.f32 %v1131, %v1137
          %v1151 = vmul.f32 %v1127, %v1141
          %1152 = vst [vmem:[#allocation2] sm:$0xff] %v1144
          %1153 = vst [vmem:[#allocation2 + $0x8] sm:$0xff] %v1145
          %1154 = vst [vmem:[#allocation2 + $0x10] sm:$0xff] %v1146
          %1155 = vst [vmem:[#allocation2 + $0x18] sm:$0xff] %v1147
          %1156 = vst [vmem:[#allocation2 + $0x20] sm:$0xff] %v1148
          %1157 = vst [vmem:[#allocation2 + $0x28] sm:$0xff] %v1149
          %1158 = vst [vmem:[#allocation2 + $0x30] sm:$0xff] %v1150
          %1159 = vst [vmem:[#allocation2 + $0x38] sm:$0xff] %v1151
          %1160 = vrot.lane.b32.xlu0 %v1100, 16
          %v1161 = vpop.permute.xlu0 %1160
          %1162 = vrot.lane.b32.xlu0 %v1102, 16
          %v1163 = vpop.permute.xlu0 %1162
          %1164 = vrot.lane.b32.xlu0 %v1104, 16
          %v1165 = vpop.permute.xlu0 %1164
          %1166 = vrot.lane.b32.xlu0 %v1106, 16
          %v1167 = vpop.permute.xlu0 %1166
          %1168 = vrot.lane.b32.xlu0 %v1101, 16
          %v1169 = vpop.permute.xlu0 %1168
          %1170 = vrot.lane.b32.xlu0 %v1103, 16
          %v1171 = vpop.permute.xlu0 %1170
          %1172 = vrot.lane.b32.xlu0 %v1105, 16
          %v1173 = vpop.permute.xlu0 %1172
          %1174 = vrot.lane.b32.xlu0 %v1107, 16
          %v1175 = vpop.permute.xlu0 %1174
          %v1176 = vsel %vm437, %v1161, %v1169
          %v1177 = vsel %vm437, %v1163, %v1171
          %v1178 = vsel %vm437, %v1165, %v1173
          %v1179 = vsel %vm437, %v1167, %v1175
          %v1180 = vsel %vm437, %v1169, %v1161
          %v1181 = vsel %vm437, %v1171, %v1163
          %v1182 = vsel %vm437, %v1173, %v1165
          %v1183 = vsel %vm437, %v1175, %v1167
          %v1184 = vld [vmem:[%s446] ss:$8 sm:$0x3]
          %v1186 = vlaneseq
          %v1187 = vshrl.u32 %v1186, 7
          %v1188 = vsub.s32 0, %v1187
          %v1189 = vrot.slane %v1184, %v1188
          %v1190 = vlaneseq
          %v1191 = vshrl.u32 %v1190, 7
          %v1192 = vsub.s32 1, %v1191
          %v1193 = vrot.slane %v1184, %v1192
          %v1196 = vmul.f32 %v1180, %v1189
          %v1197 = vmul.f32 %v1176, %v1193
          %v1198 = vmul.f32 %v1181, %v1189
          %v1199 = vmul.f32 %v1177, %v1193
          %v1200 = vmul.f32 %v1182, %v1189
          %v1201 = vmul.f32 %v1178, %v1193
          %v1202 = vmul.f32 %v1183, %v1189
          %v1203 = vmul.f32 %v1179, %v1193
          %1204 = vst [vmem:[#allocation2 + $0x40] sm:$0xff] %v1196
          %1205 = vst [vmem:[#allocation2 + $0x48] sm:$0xff] %v1197
          %1206 = vst [vmem:[#allocation2 + $0x50] sm:$0xff] %v1198
          %1207 = vst [vmem:[#allocation2 + $0x58] sm:$0xff] %v1199
          %1208 = vst [vmem:[#allocation2 + $0x60] sm:$0xff] %v1200
          %1209 = vst [vmem:[#allocation2 + $0x68] sm:$0xff] %v1201
          %1210 = vst [vmem:[#allocation2 + $0x70] sm:$0xff] %v1202
          %1211 = vst [vmem:[#allocation2 + $0x78] sm:$0xff] %v1203
          %1212 = vrot.lane.b32.xlu0 %v1100, 15
          %v1213 = vpop.permute.xlu0 %1212
          %1214 = vrot.lane.b32.xlu0 %v1102, 15
          %v1215 = vpop.permute.xlu0 %1214
          %1216 = vrot.lane.b32.xlu0 %v1104, 15
          %v1217 = vpop.permute.xlu0 %1216
          %1218 = vrot.lane.b32.xlu0 %v1106, 15
          %v1219 = vpop.permute.xlu0 %1218
          %1220 = vrot.lane.b32.xlu0 %v1101, 15
          %v1221 = vpop.permute.xlu0 %1220
          %1222 = vrot.lane.b32.xlu0 %v1103, 15
          %v1223 = vpop.permute.xlu0 %1222
          %1224 = vrot.lane.b32.xlu0 %v1105, 15
          %v1225 = vpop.permute.xlu0 %1224
          %1226 = vrot.lane.b32.xlu0 %v1107, 15
          %v1227 = vpop.permute.xlu0 %1226
          %v1228 = vsel %vm491, %v1213, %v1221
          %v1229 = vsel %vm491, %v1215, %v1223
          %v1230 = vsel %vm491, %v1217, %v1225
          %v1231 = vsel %vm491, %v1219, %v1227
          %v1232 = vsel %vm491, %v1221, %v1213
          %v1233 = vsel %vm491, %v1223, %v1215
          %v1234 = vsel %vm491, %v1225, %v1217
          %v1235 = vsel %vm491, %v1227, %v1219
          %v1236 = vld [vmem:[%s500] ss:$8 sm:$0x3]
          %v1238 = vlaneseq
          %v1239 = vshrl.u32 %v1238, 7
          %v1240 = vsub.s32 0, %v1239
          %v1241 = vrot.slane %v1236, %v1240
          %v1242 = vlaneseq
          %v1243 = vshrl.u32 %v1242, 7
          %v1244 = vsub.s32 1, %v1243
          %v1245 = vrot.slane %v1236, %v1244
          %v1248 = vmul.f32 %v1232, %v1241
          %v1249 = vmul.f32 %v1228, %v1245
          %v1250 = vmul.f32 %v1233, %v1241
          %v1251 = vmul.f32 %v1229, %v1245
          %v1252 = vmul.f32 %v1234, %v1241
          %v1253 = vmul.f32 %v1230, %v1245
          %v1254 = vmul.f32 %v1235, %v1241
          %v1255 = vmul.f32 %v1231, %v1245
          %1256 = vst [vmem:[#allocation2 + $0x80] sm:$0xff] %v1248
          %1257 = vst [vmem:[#allocation2 + $0x88] sm:$0xff] %v1249
          %1258 = vst [vmem:[#allocation2 + $0x90] sm:$0xff] %v1250
          %1259 = vst [vmem:[#allocation2 + $0x98] sm:$0xff] %v1251
          %1260 = vst [vmem:[#allocation2 + $0xa0] sm:$0xff] %v1252
          %1261 = vst [vmem:[#allocation2 + $0xa8] sm:$0xff] %v1253
          %1262 = vst [vmem:[#allocation2 + $0xb0] sm:$0xff] %v1254
          %1263 = vst [vmem:[#allocation2 + $0xb8] sm:$0xff] %v1255
          %1264 = vrot.lane.b32.xlu0 %v1100, 1
          %v1265 = vpop.permute.xlu0 %1264
          %1266 = vrot.lane.b32.xlu0 %v1102, 1
          %v1267 = vpop.permute.xlu0 %1266
          %1268 = vrot.lane.b32.xlu0 %v1104, 1
          %v1269 = vpop.permute.xlu0 %1268
          %1270 = vrot.lane.b32.xlu0 %v1106, 1
          %v1271 = vpop.permute.xlu0 %1270
          %1272 = vrot.lane.b32.xlu0 %v1101, 1
          %v1273 = vpop.permute.xlu0 %1272
          %1274 = vrot.lane.b32.xlu0 %v1103, 1
          %v1275 = vpop.permute.xlu0 %1274
          %1276 = vrot.lane.b32.xlu0 %v1105, 1
          %v1277 = vpop.permute.xlu0 %1276
          %1278 = vrot.lane.b32.xlu0 %v1107, 1
          %v1279 = vpop.permute.xlu0 %1278
          %v1280 = vsel %vm545, %v1265, %v1273
          %v1281 = vsel %vm545, %v1267, %v1275
          %v1282 = vsel %vm545, %v1269, %v1277
          %v1283 = vsel %vm545, %v1271, %v1279
          %v1284 = vsel %vm545, %v1273, %v1265
          %v1285 = vsel %vm545, %v1275, %v1267
          %v1286 = vsel %vm545, %v1277, %v1269
          %v1287 = vsel %vm545, %v1279, %v1271
          %v1288 = vld [vmem:[%s554] ss:$8 sm:$0x3]
          %v1290 = vlaneseq
          %v1291 = vshrl.u32 %v1290, 7
          %v1292 = vsub.s32 0, %v1291
          %v1293 = vrot.slane %v1288, %v1292
          %v1294 = vlaneseq
          %v1295 = vshrl.u32 %v1294, 7
          %v1296 = vsub.s32 1, %v1295
          %v1297 = vrot.slane %v1288, %v1296
          %v1300 = vmul.f32 %v1284, %v1293
          %v1301 = vmul.f32 %v1280, %v1297
          %v1302 = vmul.f32 %v1285, %v1293
          %v1303 = vmul.f32 %v1281, %v1297
          %v1304 = vmul.f32 %v1286, %v1293
          %v1305 = vmul.f32 %v1282, %v1297
          %v1306 = vmul.f32 %v1287, %v1293
          %v1307 = vmul.f32 %v1283, %v1297
          %1308 = vst [vmem:[#allocation2 + $0xc0] sm:$0xff] %v1300
          %1309 = vst [vmem:[#allocation2 + $0xc8] sm:$0xff] %v1301
          %1310 = vst [vmem:[#allocation2 + $0xd0] sm:$0xff] %v1302
          %1311 = vst [vmem:[#allocation2 + $0xd8] sm:$0xff] %v1303
          %1312 = vst [vmem:[#allocation2 + $0xe0] sm:$0xff] %v1304
          %1313 = vst [vmem:[#allocation2 + $0xe8] sm:$0xff] %v1305
          %1314 = vst [vmem:[#allocation2 + $0xf0] sm:$0xff] %v1306
          %1315 = vst [vmem:[#allocation2 + $0xf8] sm:$0xff] %v1307
          %1316 = vst [vmem:[#allocation2 + $0x100] sm:$0xff] %v1100
          %1317 = vst [vmem:[#allocation2 + $0x108] sm:$0xff] %v1101
          %1318 = vst [vmem:[#allocation2 + $0x110] sm:$0xff] %v1102
          %1319 = vst [vmem:[#allocation2 + $0x118] sm:$0xff] %v1103
          %1320 = vst [vmem:[#allocation2 + $0x120] sm:$0xff] %v1104
          %1321 = vst [vmem:[#allocation2 + $0x128] sm:$0xff] %v1105
          %1322 = vst [vmem:[#allocation2 + $0x130] sm:$0xff] %v1106
          %1323 = vst [vmem:[#allocation2 + $0x138] sm:$0xff] %v1107
          %1324 = vrot.lane.b32.xlu0 %v1100, 127
          %v1325 = vpop.permute.xlu0 %1324
          %1326 = vrot.lane.b32.xlu0 %v1102, 127
          %v1327 = vpop.permute.xlu0 %1326
          %1328 = vrot.lane.b32.xlu0 %v1104, 127
          %v1329 = vpop.permute.xlu0 %1328
          %1330 = vrot.lane.b32.xlu0 %v1106, 127
          %v1331 = vpop.permute.xlu0 %1330
          %1332 = vrot.lane.b32.xlu0 %v1101, 127
          %v1333 = vpop.permute.xlu0 %1332
          %1334 = vrot.lane.b32.xlu0 %v1103, 127
          %v1335 = vpop.permute.xlu0 %1334
          %1336 = vrot.lane.b32.xlu0 %v1105, 127
          %v1337 = vpop.permute.xlu0 %1336
          %1338 = vrot.lane.b32.xlu0 %v1107, 127
          %v1339 = vpop.permute.xlu0 %1338
          %v1340 = vsel %vm607, %v1325, %v1333
          %v1341 = vsel %vm607, %v1327, %v1335
          %v1342 = vsel %vm607, %v1329, %v1337
          %v1343 = vsel %vm607, %v1331, %v1339
          %v1344 = vsel %vm607, %v1333, %v1325
          %v1345 = vsel %vm607, %v1335, %v1327
          %v1346 = vsel %vm607, %v1337, %v1329
          %v1347 = vsel %vm607, %v1339, %v1331
          %v1348 = vld [vmem:[%s616] ss:$8 sm:$0x3]
          %v1350 = vlaneseq
          %v1351 = vshrl.u32 %v1350, 7
          %v1352 = vsub.s32 0, %v1351
          %v1353 = vrot.slane %v1348, %v1352
          %v1354 = vlaneseq
          %v1355 = vshrl.u32 %v1354, 7
          %v1356 = vsub.s32 1, %v1355
          %v1357 = vrot.slane %v1348, %v1356
          %v1360 = vmul.f32 %v1340, %v1353
          %v1361 = vmul.f32 %v1344, %v1357
          %v1362 = vmul.f32 %v1341, %v1353
          %v1363 = vmul.f32 %v1345, %v1357
          %v1364 = vmul.f32 %v1342, %v1353
          %v1365 = vmul.f32 %v1346, %v1357
          %v1366 = vmul.f32 %v1343, %v1353
          %v1367 = vmul.f32 %v1347, %v1357
          %1368 = vst [vmem:[#allocation2 + $0x140] sm:$0xff] %v1360
          %1369 = vst [vmem:[#allocation2 + $0x148] sm:$0xff] %v1361
          %1370 = vst [vmem:[#allocation2 + $0x150] sm:$0xff] %v1362
          %1371 = vst [vmem:[#allocation2 + $0x158] sm:$0xff] %v1363
          %1372 = vst [vmem:[#allocation2 + $0x160] sm:$0xff] %v1364
          %1373 = vst [vmem:[#allocation2 + $0x168] sm:$0xff] %v1365
          %1374 = vst [vmem:[#allocation2 + $0x170] sm:$0xff] %v1366
          %1375 = vst [vmem:[#allocation2 + $0x178] sm:$0xff] %v1367
          %1376 = vrot.lane.b32.xlu0 %v1100, 113
          %v1377 = vpop.permute.xlu0 %1376
          %1378 = vrot.lane.b32.xlu0 %v1102, 113
          %v1379 = vpop.permute.xlu0 %1378
          %1380 = vrot.lane.b32.xlu0 %v1104, 113
          %v1381 = vpop.permute.xlu0 %1380
          %1382 = vrot.lane.b32.xlu0 %v1106, 113
          %v1383 = vpop.permute.xlu0 %1382
          %1384 = vrot.lane.b32.xlu0 %v1101, 113
          %v1385 = vpop.permute.xlu0 %1384
          %1386 = vrot.lane.b32.xlu0 %v1103, 113
          %v1387 = vpop.permute.xlu0 %1386
          %1388 = vrot.lane.b32.xlu0 %v1105, 113
          %v1389 = vpop.permute.xlu0 %1388
          %1390 = vrot.lane.b32.xlu0 %v1107, 113
          %v1391 = vpop.permute.xlu0 %1390
          %v1392 = vsel %vm661, %v1377, %v1385
          %v1393 = vsel %vm661, %v1379, %v1387
          %v1394 = vsel %vm661, %v1381, %v1389
          %v1395 = vsel %vm661, %v1383, %v1391
          %v1396 = vsel %vm661, %v1385, %v1377
          %v1397 = vsel %vm661, %v1387, %v1379
          %v1398 = vsel %vm661, %v1389, %v1381
          %v1399 = vsel %vm661, %v1391, %v1383
          %v1400 = vld [vmem:[%s670] ss:$8 sm:$0x3]
          %v1402 = vlaneseq
          %v1403 = vshrl.u32 %v1402, 7
          %v1404 = vsub.s32 0, %v1403
          %v1405 = vrot.slane %v1400, %v1404
          %v1406 = vlaneseq
          %v1407 = vshrl.u32 %v1406, 7
          %v1408 = vsub.s32 1, %v1407
          %v1409 = vrot.slane %v1400, %v1408
          %v1412 = vmul.f32 %v1392, %v1405
          %v1413 = vmul.f32 %v1396, %v1409
          %v1414 = vmul.f32 %v1393, %v1405
          %v1415 = vmul.f32 %v1397, %v1409
          %v1416 = vmul.f32 %v1394, %v1405
          %v1417 = vmul.f32 %v1398, %v1409
          %v1418 = vmul.f32 %v1395, %v1405
          %v1419 = vmul.f32 %v1399, %v1409
          %1420 = vst [vmem:[#allocation2 + $0x180] sm:$0xff] %v1412
          %1421 = vst [vmem:[#allocation2 + $0x188] sm:$0xff] %v1413
          %1422 = vst [vmem:[#allocation2 + $0x190] sm:$0xff] %v1414
          %1423 = vst [vmem:[#allocation2 + $0x198] sm:$0xff] %v1415
          %1424 = vst [vmem:[#allocation2 + $0x1a0] sm:$0xff] %v1416
          %1425 = vst [vmem:[#allocation2 + $0x1a8] sm:$0xff] %v1417
          %1426 = vst [vmem:[#allocation2 + $0x1b0] sm:$0xff] %v1418
          %1427 = vst [vmem:[#allocation2 + $0x1b8] sm:$0xff] %v1419
          %1428 = vrot.lane.b32.xlu0 %v1100, 112
          %v1429 = vpop.permute.xlu0 %1428
          %1430 = vrot.lane.b32.xlu0 %v1102, 112
          %v1431 = vpop.permute.xlu0 %1430
          %1432 = vrot.lane.b32.xlu0 %v1104, 112
          %v1433 = vpop.permute.xlu0 %1432
          %1434 = vrot.lane.b32.xlu0 %v1106, 112
          %v1435 = vpop.permute.xlu0 %1434
          %1436 = vrot.lane.b32.xlu0 %v1101, 112
          %v1437 = vpop.permute.xlu0 %1436
          %1438 = vrot.lane.b32.xlu0 %v1103, 112
          %v1439 = vpop.permute.xlu0 %1438
          %1440 = vrot.lane.b32.xlu0 %v1105, 112
          %v1441 = vpop.permute.xlu0 %1440
          %1442 = vrot.lane.b32.xlu0 %v1107, 112
          %v1443 = vpop.permute.xlu0 %1442
          %v1444 = vsel %vm715, %v1429, %v1437
          %v1445 = vsel %vm715, %v1431, %v1439
          %v1446 = vsel %vm715, %v1433, %v1441
          %v1447 = vsel %vm715, %v1435, %v1443
          %v1448 = vsel %vm715, %v1437, %v1429
          %v1449 = vsel %vm715, %v1439, %v1431
          %v1450 = vsel %vm715, %v1441, %v1433
          %v1451 = vsel %vm715, %v1443, %v1435
          %v1452 = vld [vmem:[%s724] ss:$8 sm:$0x3]
          %v1454 = vlaneseq
          %v1455 = vshrl.u32 %v1454, 7
          %v1456 = vsub.s32 0, %v1455
          %v1457 = vrot.slane %v1452, %v1456
          %v1458 = vlaneseq
          %v1459 = vshrl.u32 %v1458, 7
          %v1460 = vsub.s32 1, %v1459
          %v1461 = vrot.slane %v1452, %v1460
          %v1464 = vmul.f32 %v1444, %v1457
          %v1465 = vmul.f32 %v1448, %v1461
          %v1466 = vmul.f32 %v1445, %v1457
          %v1467 = vmul.f32 %v1449, %v1461
          %v1468 = vmul.f32 %v1446, %v1457
          %v1469 = vmul.f32 %v1450, %v1461
          %v1470 = vmul.f32 %v1447, %v1457
          %v1471 = vmul.f32 %v1451, %v1461
          %1472 = vst [vmem:[#allocation2 + $0x1c0] sm:$0xff] %v1464
          %1473 = vst [vmem:[#allocation2 + $0x1c8] sm:$0xff] %v1465
          %1474 = vst [vmem:[#allocation2 + $0x1d0] sm:$0xff] %v1466
          %1475 = vst [vmem:[#allocation2 + $0x1d8] sm:$0xff] %v1467
          %1476 = vst [vmem:[#allocation2 + $0x1e0] sm:$0xff] %v1468
          %1477 = vst [vmem:[#allocation2 + $0x1e8] sm:$0xff] %v1469
          %1478 = vst [vmem:[#allocation2 + $0x1f0] sm:$0xff] %v1470
          %1479 = vst [vmem:[#allocation2 + $0x1f8] sm:$0xff] %v1471
          %1480 = vrot.lane.b32.xlu0 %v1100, 111
          %v1481 = vpop.permute.xlu0 %1480
          %1482 = vrot.lane.b32.xlu0 %v1102, 111
          %v1483 = vpop.permute.xlu0 %1482
          %1484 = vrot.lane.b32.xlu0 %v1104, 111
          %v1485 = vpop.permute.xlu0 %1484
          %1486 = vrot.lane.b32.xlu0 %v1106, 111
          %v1487 = vpop.permute.xlu0 %1486
          %1488 = vrot.lane.b32.xlu0 %v1101, 111
          %v1489 = vpop.permute.xlu0 %1488
          %1490 = vrot.lane.b32.xlu0 %v1103, 111
          %v1491 = vpop.permute.xlu0 %1490
          %1492 = vrot.lane.b32.xlu0 %v1105, 111
          %v1493 = vpop.permute.xlu0 %1492
          %1494 = vrot.lane.b32.xlu0 %v1107, 111
          %v1495 = vpop.permute.xlu0 %1494
          %v1496 = vsel %vm769, %v1481, %v1489
          %v1497 = vsel %vm769, %v1483, %v1491
          %v1498 = vsel %vm769, %v1485, %v1493
          %v1499 = vsel %vm769, %v1487, %v1495
          %v1500 = vsel %vm769, %v1489, %v1481
          %v1501 = vsel %vm769, %v1491, %v1483
          %v1502 = vsel %vm769, %v1493, %v1485
          %v1503 = vsel %vm769, %v1495, %v1487
          %v1504 = vld [vmem:[%s778] ss:$8 sm:$0x3]
          %v1506 = vlaneseq
          %v1507 = vshrl.u32 %v1506, 7
          %v1508 = vsub.s32 0, %v1507
          %v1509 = vrot.slane %v1504, %v1508
          %v1510 = vlaneseq
          %v1511 = vshrl.u32 %v1510, 7
          %v1512 = vsub.s32 1, %v1511
          %v1513 = vrot.slane %v1504, %v1512
          %v1516 = vmul.f32 %v1496, %v1509
          %v1517 = vmul.f32 %v1500, %v1513
          %v1518 = vmul.f32 %v1497, %v1509
          %v1519 = vmul.f32 %v1501, %v1513
          %v1520 = vmul.f32 %v1498, %v1509
          %v1521 = vmul.f32 %v1502, %v1513
          %v1522 = vmul.f32 %v1499, %v1509
          %v1523 = vmul.f32 %v1503, %v1513
          %1524 = vst [vmem:[#allocation2 + $0x200] sm:$0xff] %v1516
          %1525 = vst [vmem:[#allocation2 + $0x208] sm:$0xff] %v1517
          %1526 = vst [vmem:[#allocation2 + $0x210] sm:$0xff] %v1518
          %1527 = vst [vmem:[#allocation2 + $0x218] sm:$0xff] %v1519
          %1528 = vst [vmem:[#allocation2 + $0x220] sm:$0xff] %v1520
          %1529 = vst [vmem:[#allocation2 + $0x228] sm:$0xff] %v1521
          %1530 = vst [vmem:[#allocation2 + $0x230] sm:$0xff] %v1522
          %1531 = vst [vmem:[#allocation2 + $0x238] sm:$0xff] %v1523
          %v1532 = vld [vmem:[#allocation2] sm:$0xff]
          %v1533 = vld [vmem:[#allocation2 + $0x8] sm:$0xff]
          %v1534 = vld [vmem:[#allocation2 + $0x10] sm:$0xff]
          %v1535 = vld [vmem:[#allocation2 + $0x18] sm:$0xff]
          %v1536 = vld [vmem:[#allocation2 + $0x20] sm:$0xff]
          %v1537 = vld [vmem:[#allocation2 + $0x28] sm:$0xff]
          %v1538 = vld [vmem:[#allocation2 + $0x30] sm:$0xff]
          %v1539 = vld [vmem:[#allocation2 + $0x38] sm:$0xff]
          %v1540 = vld [vmem:[#allocation2 + $0x40] sm:$0xff]
          %v1541 = vld [vmem:[#allocation2 + $0x48] sm:$0xff]
          %v1542 = vld [vmem:[#allocation2 + $0x50] sm:$0xff]
          %v1543 = vld [vmem:[#allocation2 + $0x58] sm:$0xff]
          %v1544 = vld [vmem:[#allocation2 + $0x60] sm:$0xff]
          %v1545 = vld [vmem:[#allocation2 + $0x68] sm:$0xff]
          %v1546 = vld [vmem:[#allocation2 + $0x70] sm:$0xff]
          %v1547 = vld [vmem:[#allocation2 + $0x78] sm:$0xff]
          %v1548 = vld [vmem:[#allocation2 + $0x80] sm:$0xff]
          %v1549 = vld [vmem:[#allocation2 + $0x88] sm:$0xff]
          %v1550 = vld [vmem:[#allocation2 + $0x90] sm:$0xff]
          %v1551 = vld [vmem:[#allocation2 + $0x98] sm:$0xff]
          %v1552 = vld [vmem:[#allocation2 + $0xa0] sm:$0xff]
          %v1553 = vld [vmem:[#allocation2 + $0xa8] sm:$0xff]
          %v1554 = vld [vmem:[#allocation2 + $0xb0] sm:$0xff]
          %v1555 = vld [vmem:[#allocation2 + $0xb8] sm:$0xff]
          %v1556 = vld [vmem:[#allocation2 + $0xc0] sm:$0xff]
          %v1557 = vld [vmem:[#allocation2 + $0xc8] sm:$0xff]
          %v1558 = vld [vmem:[#allocation2 + $0xd0] sm:$0xff]
          %v1559 = vld [vmem:[#allocation2 + $0xd8] sm:$0xff]
          %v1560 = vld [vmem:[#allocation2 + $0xe0] sm:$0xff]
          %v1561 = vld [vmem:[#allocation2 + $0xe8] sm:$0xff]
          %v1562 = vld [vmem:[#allocation2 + $0xf0] sm:$0xff]
          %v1563 = vld [vmem:[#allocation2 + $0xf8] sm:$0xff]
          %v1564 = vld [vmem:[#allocation2 + $0x100] sm:$0xff]
          %v1565 = vld [vmem:[#allocation2 + $0x108] sm:$0xff]
          %v1566 = vld [vmem:[#allocation2 + $0x110] sm:$0xff]
          %v1567 = vld [vmem:[#allocation2 + $0x118] sm:$0xff]
          %v1568 = vld [vmem:[#allocation2 + $0x120] sm:$0xff]
          %v1569 = vld [vmem:[#allocation2 + $0x128] sm:$0xff]
          %v1570 = vld [vmem:[#allocation2 + $0x130] sm:$0xff]
          %v1571 = vld [vmem:[#allocation2 + $0x138] sm:$0xff]
          %v1572 = vld [vmem:[#allocation2 + $0x140] sm:$0xff]
          %v1573 = vld [vmem:[#allocation2 + $0x148] sm:$0xff]
          %v1574 = vld [vmem:[#allocation2 + $0x150] sm:$0xff]
          %v1575 = vld [vmem:[#allocation2 + $0x158] sm:$0xff]
          %v1576 = vld [vmem:[#allocation2 + $0x160] sm:$0xff]
          %v1577 = vld [vmem:[#allocation2 + $0x168] sm:$0xff]
          %v1578 = vld [vmem:[#allocation2 + $0x170] sm:$0xff]
          %v1579 = vld [vmem:[#allocation2 + $0x178] sm:$0xff]
          %v1580 = vld [vmem:[#allocation2 + $0x180] sm:$0xff]
          %v1581 = vld [vmem:[#allocation2 + $0x188] sm:$0xff]
          %v1582 = vld [vmem:[#allocation2 + $0x190] sm:$0xff]
          %v1583 = vld [vmem:[#allocation2 + $0x198] sm:$0xff]
          %v1584 = vld [vmem:[#allocation2 + $0x1a0] sm:$0xff]
          %v1585 = vld [vmem:[#allocation2 + $0x1a8] sm:$0xff]
          %v1586 = vld [vmem:[#allocation2 + $0x1b0] sm:$0xff]
          %v1587 = vld [vmem:[#allocation2 + $0x1b8] sm:$0xff]
          %v1588 = vld [vmem:[#allocation2 + $0x1c0] sm:$0xff]
          %v1589 = vld [vmem:[#allocation2 + $0x1c8] sm:$0xff]
          %v1590 = vld [vmem:[#allocation2 + $0x1d0] sm:$0xff]
          %v1591 = vld [vmem:[#allocation2 + $0x1d8] sm:$0xff]
          %v1592 = vld [vmem:[#allocation2 + $0x1e0] sm:$0xff]
          %v1593 = vld [vmem:[#allocation2 + $0x1e8] sm:$0xff]
          %v1594 = vld [vmem:[#allocation2 + $0x1f0] sm:$0xff]
          %v1595 = vld [vmem:[#allocation2 + $0x1f8] sm:$0xff]
          %v1596 = vld [vmem:[#allocation2 + $0x200] sm:$0xff]
          %v1597 = vld [vmem:[#allocation2 + $0x208] sm:$0xff]
          %v1598 = vld [vmem:[#allocation2 + $0x210] sm:$0xff]
          %v1599 = vld [vmem:[#allocation2 + $0x218] sm:$0xff]
          %v1600 = vld [vmem:[#allocation2 + $0x220] sm:$0xff]
          %v1601 = vld [vmem:[#allocation2 + $0x228] sm:$0xff]
          %v1602 = vld [vmem:[#allocation2 + $0x230] sm:$0xff]
          %v1603 = vld [vmem:[#allocation2 + $0x238] sm:$0xff]
          %v1605 = vsel %vm879, %v1090, 0
          %v1608 = vsel %vm879, %v1093, 0
          %v1611 = vsel %vm879, %v1096, 0
          %v1614 = vsel %vm879, %v1099, 0
          %1616 = vmatprep.subr.mxu0 %v1533
          %1617 = vmatpush1.msra.mxu0 %v1532
          %1618 = vmatprep.subr.mxu0 %v1535
          %1619 = vmatpush1.msra.mxu0 %v1534
          %1620 = vmatprep.subr.mxu0 %v1537
          %1621 = vmatpush1.msra.mxu0 %v1536
          %1622 = vmatprep.subr.mxu0 %v1539
          %1623 = vmatpush1.msra.mxu0 %v1538
          %1624 = vmatprep.subr.mxu0 %v1541
          %1625 = vmatpush1.msra.mxu0 %v1540
          %1626 = vmatprep.subr.mxu0 %v1543
          %1627 = vmatpush1.msra.mxu0 %v1542
          %1628 = vmatprep.subr.mxu0 %v1545
          %1629 = vmatpush1.msra.mxu0 %v1544
          %1630 = vmatprep.subr.mxu0 %v1547
          %1631 = vmatpush1.msra.mxu0 %v1546
          %1632 = vmatprep.subr.mxu0 %v1549
          %1633 = vmatpush1.msra.mxu0 %v1548
          %1634 = vmatprep.subr.mxu0 %v1551
          %1635 = vmatpush1.msra.mxu0 %v1550
          %1636 = vmatprep.subr.mxu0 %v1553
          %1637 = vmatpush1.msra.mxu0 %v1552
          %1638 = vmatprep.subr.mxu0 %v1555
          %1639 = vmatpush1.msra.mxu0 %v1554
          %1640 = vmatprep.subr.mxu0 %v1557
          %1641 = vmatpush1.msra.mxu0 %v1556
          %1642 = vmatprep.subr.mxu0 %v1559
          %1643 = vmatpush1.msra.mxu0 %v1558
          %1644 = vmatprep.subr.mxu0 %v1561
          %1645 = vmatpush1.msra.mxu0 %v1560
          %1646 = vmatprep.subr.mxu0 %v1563
          %1647 = vmatpush1.msra.mxu0 %v1562
          %1648 = vmatprep.subr.mxu0 %v1565
          %1649 = vmatpush1.msra.mxu0 %v1564
          %1650 = vmatprep.subr.mxu0 %v1567
          %1651 = vmatpush1.msra.mxu0 %v1566
          %1652 = vmatprep.subr.mxu0 %v1569
          %1653 = vmatpush1.msra.mxu0 %v1568
          %1654 = vmatprep.subr.mxu0 %v1571
          %1655 = vmatpush1.msra.mxu0 %v1570
          %1656 = vmatprep.subr.mxu0 %v1573
          %1657 = vmatpush1.msra.mxu0 %v1572
          %1658 = vmatprep.subr.mxu0 %v1575
          %1659 = vmatpush1.msra.mxu0 %v1574
          %1660 = vmatprep.subr.mxu0 %v1577
          %1661 = vmatpush1.msra.mxu0 %v1576
          %1662 = vmatprep.subr.mxu0 %v1579
          %1663 = vmatpush1.msra.mxu0 %v1578
          %1664 = vmatprep.subr.mxu0 %v1581
          %1665 = vmatpush1.msra.mxu0 %v1580
          %1666 = vmatprep.subr.mxu0 %v1583
          %1667 = vmatpush1.msra.mxu0 %v1582
          %1668 = vmatprep.subr.mxu0 %v1585
          %1669 = vmatpush1.msra.mxu0 %v1584
          %1670 = vmatprep.subr.mxu0 %v1587
          %1671 = vmatpush1.msra.mxu0 %v1586
          %1672 = vmatprep.subr.mxu0 %v1589
          %1673 = vmatpush1.msra.mxu0 %v1588
          %1674 = vmatprep.subr.mxu0 %v1591
          %1675 = vmatpush1.msra.mxu0 %v1590
          %1676 = vmatprep.subr.mxu0 %v1593
          %1677 = vmatpush1.msra.mxu0 %v1592
          %1678 = vmatprep.subr.mxu0 %v1595
          %1679 = vmatpush1.msra.mxu0 %v1594
          %1680 = vmatprep.mubr.f32.mxu0 %v1089
          %1681 = vmatmul.mubr.f32.gmra.mrb[0].mxu0 %v1088
          %v1682 = vpop.f32.mrb[0].mxu0
          %v1683 = vadd.f32 0.0, %v1682
          %v1684 = vpop.f32.mrb[0].mxu0
          %v1685 = vadd.f32 0.0, %v1684
          %1686 = vmatprep.mubr.f32.mxu0 %v1092
          %1687 = vmatmul.mubr.f32.gmra.mrb[0].mxu0 %v1091
          %v1688 = vpop.f32.mrb[0].mxu0
          %v1689 = vadd.f32 0.0, %v1688
          %v1690 = vpop.f32.mrb[0].mxu0
          %v1691 = vadd.f32 0.0, %v1690
          %1692 = vmatprep.mubr.f32.mxu0 %v1095
          %1693 = vmatmul.mubr.f32.gmra.mrb[0].mxu0 %v1094
          %v1694 = vpop.f32.mrb[0].mxu0
          %v1695 = vadd.f32 0.0, %v1694
          %v1696 = vpop.f32.mrb[0].mxu0
          %v1697 = vadd.f32 0.0, %v1696
          %1698 = vmatprep.mubr.f32.mxu0 %v1098
          %1699 = vmatmul.mubr.f32.gmra.mrb[0].mxu0 %v1097
          %v1700 = vpop.f32.mrb[0].mxu0
          %v1701 = vadd.f32 0.0, %v1700
          %v1702 = vpop.f32.mrb[0].mxu0
          %v1703 = vadd.f32 0.0, %v1702
          %1704 = vdwg.mxu0
          %1705 = vmatprep.subr.mxu0 %v1597
          %1706 = vmatpush1.msra.mxu0 %v1596
          %1707 = vmatprep.subr.mxu0 %v1599
          %1708 = vmatpush1.msra.mxu0 %v1598
          %1709 = vmatprep.subr.mxu0 %v1601
          %1710 = vmatpush1.msra.mxu0 %v1600
          %1711 = vmatprep.subr.mxu0 %v1603
          %1712 = vmatpush1.msra.mxu0 %v1602
          %1713 = vmatprep.subr.mxu0 0.0
          %1714 = vmatpush1.msra.mxu0 0.0
          %1715 = vmatprep.subr.mxu0 0.0
          %1716 = vmatpush1.msra.mxu0 0.0
          %1717 = vmatprep.subr.mxu0 0.0
          %1718 = vmatpush1.msra.mxu0 0.0
          %1719 = vmatprep.subr.mxu0 0.0
          %1720 = vmatpush1.msra.mxu0 0.0
          %1721 = vmatprep.subr.mxu0 0.0
          %1722 = vmatpush1.msra.mxu0 0.0
          %1723 = vmatprep.subr.mxu0 0.0
          %1724 = vmatpush1.msra.mxu0 0.0
          %1725 = vmatprep.subr.mxu0 0.0
          %1726 = vmatpush1.msra.mxu0 0.0
          %1727 = vmatprep.subr.mxu0 0.0
          %1728 = vmatpush1.msra.mxu0 0.0
          %1729 = vmatprep.subr.mxu0 0.0
          %1730 = vmatpush1.msra.mxu0 0.0
          %1731 = vmatprep.subr.mxu0 0.0
          %1732 = vmatpush1.msra.mxu0 0.0
          %1733 = vmatprep.subr.mxu0 0.0
          %1734 = vmatpush1.msra.mxu0 0.0
          %1735 = vmatprep.subr.mxu0 0.0
          %1736 = vmatpush1.msra.mxu0 0.0
          %1737 = vmatprep.subr.mxu0 0.0
          %1738 = vmatpush1.msra.mxu0 0.0
          %1739 = vmatprep.subr.mxu0 0.0
          %1740 = vmatpush1.msra.mxu0 0.0
          %1741 = vmatprep.subr.mxu0 0.0
          %1742 = vmatpush1.msra.mxu0 0.0
          %1743 = vmatprep.subr.mxu0 0.0
          %1744 = vmatpush1.msra.mxu0 0.0
          %1745 = vmatprep.subr.mxu0 0.0
          %1746 = vmatpush1.msra.mxu0 0.0
          %1747 = vmatprep.subr.mxu0 0.0
          %1748 = vmatpush1.msra.mxu0 0.0
          %1749 = vmatprep.subr.mxu0 0.0
          %1750 = vmatpush1.msra.mxu0 0.0
          %1751 = vmatprep.subr.mxu0 0.0
          %1752 = vmatpush1.msra.mxu0 0.0
          %1753 = vmatprep.subr.mxu0 0.0
          %1754 = vmatpush1.msra.mxu0 0.0
          %1755 = vmatprep.subr.mxu0 0.0
          %1756 = vmatpush1.msra.mxu0 0.0
          %1757 = vmatprep.subr.mxu0 0.0
          %1758 = vmatpush1.msra.mxu0 0.0
          %1759 = vmatprep.subr.mxu0 0.0
          %1760 = vmatpush1.msra.mxu0 0.0
          %1761 = vmatprep.subr.mxu0 0.0
          %1762 = vmatpush1.msra.mxu0 0.0
          %1763 = vmatprep.subr.mxu0 0.0
          %1764 = vmatpush1.msra.mxu0 0.0
          %1765 = vmatprep.subr.mxu0 0.0
          %1766 = vmatpush1.msra.mxu0 0.0
          %1767 = vmatprep.subr.mxu0 0.0
          %1768 = vmatpush1.msra.mxu0 0.0
          %1769 = vmatprep.mubr.f32.mxu0 0.0
          %1770 = vmatmul.mubr.f32.gmra.mrb[0].mxu0 %v1605
          %v1771 = vpop.f32.mrb[0].mxu0
          %v1772 = vadd.f32 %v1683, %v1771
          %v1773 = vpop.f32.mrb[0].mxu0
          %v1774 = vadd.f32 %v1685, %v1773
          %1775 = vmatprep.mubr.f32.mxu0 0.0
          %1776 = vmatmul.mubr.f32.gmra.mrb[0].mxu0 %v1608
          %v1777 = vpop.f32.mrb[0].mxu0
          %v1778 = vadd.f32 %v1689, %v1777
          %v1779 = vpop.f32.mrb[0].mxu0
          %v1780 = vadd.f32 %v1691, %v1779
          %1781 = vmatprep.mubr.f32.mxu0 0.0
          %1782 = vmatmul.mubr.f32.gmra.mrb[0].mxu0 %v1611
          %v1783 = vpop.f32.mrb[0].mxu0
          %v1784 = vadd.f32 %v1695, %v1783
          %v1785 = vpop.f32.mrb[0].mxu0
          %v1786 = vadd.f32 %v1697, %v1785
          %1787 = vmatprep.mubr.f32.mxu0 0.0
          %1788 = vmatmul.mubr.f32.gmra.mrb[0].mxu0 %v1614
          %v1789 = vpop.f32.mrb[0].mxu0
          %v1790 = vadd.f32 %v1701, %v1789
          %v1791 = vpop.f32.mrb[0].mxu0
          %v1792 = vadd.f32 %v1703, %v1791
          %1793 = vdwg.mxu0
          %1794 = vst [vmem:[#allocation4] sm:$0xff] %v1772
          %1795 = vst [vmem:[#allocation4 + $0x8] sm:$0xff] %v1774
          %1796 = vst [vmem:[#allocation4 + $0x10] sm:$0xff] %v1778
          %1797 = vst [vmem:[#allocation4 + $0x18] sm:$0xff] %v1780
          %1798 = vst [vmem:[#allocation4 + $0x20] sm:$0xff] %v1784
          %1799 = vst [vmem:[#allocation4 + $0x28] sm:$0xff] %v1786
          %1800 = vst [vmem:[#allocation4 + $0x30] sm:$0xff] %v1790
          %1801 = vst [vmem:[#allocation4 + $0x38] sm:$0xff] %v1792
          %v1802 = vld [vmem:[#allocation4] sm:$0xff]
          %v1803 = vld [vmem:[#allocation4 + $0x8] sm:$0xff]
          %v1804 = vld [vmem:[#allocation4 + $0x10] sm:$0xff]
          %v1805 = vld [vmem:[#allocation4 + $0x18] sm:$0xff]
          %v1806 = vld [vmem:[#allocation4 + $0x20] sm:$0xff]
          %v1807 = vld [vmem:[#allocation4 + $0x28] sm:$0xff]
          %v1808 = vld [vmem:[#allocation4 + $0x30] sm:$0xff]
          %v1809 = vld [vmem:[#allocation4 + $0x38] sm:$0xff]
          %v1810 = vadd.f32 %v1802, %v1803
          %1811 = vadd.xlane.f32.xlu0 %v1810
          %v1812 = vpop.xlane.xlu0 %1811
          %v1813 = vadd.f32 %v1804, %v1805
          %1814 = vadd.xlane.f32.xlu0 %v1813
          %v1815 = vpop.xlane.xlu0 %1814
          %v1816 = vadd.f32 %v1806, %v1807
          %1817 = vadd.xlane.f32.xlu0 %v1816
          %v1818 = vpop.xlane.xlu0 %1817
          %v1819 = vadd.f32 %v1808, %v1809
          %1820 = vadd.xlane.f32.xlu0 %v1819
          %v1821 = vpop.xlane.xlu0 %1820
          %v1822 = vrcp.pop 256.0
          %v1823 = vmul.f32 %v1812, %v1822
          %v1824 = vmul.f32 %v1815, %v1822
          %v1825 = vmul.f32 %v1818, %v1822
          %v1826 = vmul.f32 %v1821, %v1822
          %s1827 = smul.u32 %s338, 32
          %s1828 = scalar_lea.vmem %s4, %s1827
          %v1829 = vld [vmem:[%s1828] sm:$0xff]
          %v1830 = vld [vmem:[%s1828 + $0x8] sm:$0xff]
          %v1831 = vld [vmem:[%s1828 + $0x10] sm:$0xff]
          %v1832 = vld [vmem:[%s1828 + $0x18] sm:$0xff]
          %v1833 = vmul.f32 %v1829, %v1823
          %v1834 = vmul.f32 %v1830, %v1824
          %v1835 = vmul.f32 %v1831, %v1825
          %v1836 = vmul.f32 %v1832, %v1826
          %vm1837 = vcmask 64512
          %v1838 = vsel %vm1837, %v1833, 0.0
          %v1839 = vsel %vm1837, %v1834, 0.0
          %v1840 = vadd.f32 %v1838, %v1839
          %v1841 = vsel %vm1837, %v1835, 0.0
          %v1842 = vadd.f32 %v1840, %v1841
          %v1843 = vsel %vm1837, %v1836, 0.0
          %v1844 = vadd.f32 %v1842, %v1843
          %v1845 = vrot.slane %v1844, 4
          %v1846 = vadd.f32 %v1844, %v1845
          %v1847 = vrot.slane %v1846, 2
          %v1848 = vadd.f32 %v1846, %v1847
          %v1849 = vrot.slane %v1848, 1
          %v1850 = vadd.f32 %v1848, %v1849
          %v1851 = vmax.f32 %v1850, 0.0
          %s1852 = scalar_lea.vmem %s5, %s1827
          %v1853 = vld [vmem:[%s1852] sm:$0xff]
          %v1854 = vld [vmem:[%s1852 + $0x8] sm:$0xff]
          %v1855 = vld [vmem:[%s1852 + $0x10] sm:$0xff]
          %v1856 = vld [vmem:[%s1852 + $0x18] sm:$0xff]
          %v1857 = vmul.f32 %v1853, %v1851
          %v1858 = vmul.f32 %v1854, %v1851
          %v1859 = vmul.f32 %v1855, %v1851
          %v1860 = vmul.f32 %v1856, %v1851
          %v1861 = vsel %vm1837, %v1857, 0.0
          %1862 = vadd.xlane.f32.xlu0 %v1861
          %v1863 = vpop.xlane.xlu0 %1862
          %v1864 = vsel %vm1837, %v1858, 0.0
          %1865 = vadd.xlane.f32.xlu0 %v1864
          %v1866 = vpop.xlane.xlu0 %1865
          %v1867 = vsel %vm1837, %v1859, 0.0
          %1868 = vadd.xlane.f32.xlu0 %v1867
          %v1869 = vpop.xlane.xlu0 %1868
          %v1870 = vsel %vm1837, %v1860, 0.0
          %1871 = vadd.xlane.f32.xlu0 %v1870
          %v1872 = vpop.xlane.xlu0 %1871
          %v1873 = vsub.f32 0.0, %v1863
          %v1874 = vsub.f32 0.0, %v1866
          %v1875 = vsub.f32 0.0, %v1869
          %v1876 = vsub.f32 0.0, %v1872
          %v1877 = vmul.f32 %v1873, 1.442695
          %v1878 = vpow.pop %v1877
          %v1879 = vmul.f32 %v1874, 1.442695
          %v1880 = vpow.pop %v1879
          %v1881 = vmul.f32 %v1875, 1.442695
          %v1882 = vpow.pop %v1881
          %v1883 = vmul.f32 %v1876, 1.442695
          %v1884 = vpow.pop %v1883
          %v1885 = vadd.f32 %v1878, 1.0
          %v1886 = vadd.f32 %v1880, 1.0
          %v1887 = vadd.f32 %v1882, 1.0
          %v1888 = vadd.f32 %v1884, 1.0
          %v1889 = vrcp.pop %v1885
          %v1890 = vmul.f32 1.0, %v1889
          %v1891 = vrcp.pop %v1886
          %v1892 = vmul.f32 1.0, %v1891
          %v1893 = vrcp.pop %v1887
          %v1894 = vmul.f32 1.0, %v1893
          %v1895 = vrcp.pop %v1888
          %v1896 = vmul.f32 1.0, %v1895
          %v1897 = vmul.f32 %v1802, %v1890
          %v1898 = vmul.f32 %v1803, %v1890
          %v1899 = vmul.f32 %v1804, %v1892
          %v1900 = vmul.f32 %v1805, %v1892
          %v1901 = vmul.f32 %v1806, %v1894
          %v1902 = vmul.f32 %v1807, %v1894
          %v1903 = vmul.f32 %v1808, %v1896
          %v1904 = vmul.f32 %v1809, %v1896
          %v1905 = vld [vmem:[#allocation3] sm:$0xff]
          %v1906 = vld [vmem:[#allocation3 + $0x8] sm:$0xff]
          %v1907 = vld [vmem:[#allocation3 + $0x10] sm:$0xff]
          %v1908 = vld [vmem:[#allocation3 + $0x18] sm:$0xff]
          %v1909 = vld [vmem:[#allocation3 + $0x20] sm:$0xff]
          %v1910 = vld [vmem:[#allocation3 + $0x28] sm:$0xff]
          %v1911 = vld [vmem:[#allocation3 + $0x30] sm:$0xff]
          %v1912 = vld [vmem:[#allocation3 + $0x38] sm:$0xff]
          %v1913 = vadd.f32 %v1897, %v1905
          %v1914 = vadd.f32 %v1898, %v1906
          %v1915 = vadd.f32 %v1899, %v1907
          %v1916 = vadd.f32 %v1900, %v1908
          %v1917 = vadd.f32 %v1901, %v1909
          %v1918 = vadd.f32 %v1902, %v1910
          %v1919 = vadd.f32 %v1903, %v1911
          %v1920 = vadd.f32 %v1904, %v1912
          %1921 = vst [vmem:[#allocation3] sm:$0xff] %v1913
          %1922 = vst [vmem:[#allocation3 + $0x8] sm:$0xff] %v1914
          %1923 = vst [vmem:[#allocation3 + $0x10] sm:$0xff] %v1915
          %1924 = vst [vmem:[#allocation3 + $0x18] sm:$0xff] %v1916
          %1925 = vst [vmem:[#allocation3 + $0x20] sm:$0xff] %v1917
          %1926 = vst [vmem:[#allocation3 + $0x28] sm:$0xff] %v1918
          %1927 = vst [vmem:[#allocation3 + $0x30] sm:$0xff] %v1919
          %1928 = vst [vmem:[#allocation3 + $0x38] sm:$0xff] %v1920
        $region65: #{tpu_custom_call.1} parent=47 // loop_footer
          %s342 = sadd.s32 1, %s338
        $region66: #{tpu_custom_call.1} parent=47 // loop_footer_branch
          %337 = sbr.rel target = $region62
        $region67: #{tpu_custom_call.1} parent=47 // loop_exit
          _
        %v1929 = vld [vmem:[#allocation10] sm:$0xff]
        %v1930 = vld [vmem:[#allocation10 + $0x8] sm:$0xff]
        %v1931 = vld [vmem:[#allocation10 + $0x10] sm:$0xff]
        %v1932 = vld [vmem:[#allocation10 + $0x18] sm:$0xff]
        %v1933 = vld [vmem:[#allocation10 + $0x20] sm:$0xff]
        %v1934 = vld [vmem:[#allocation10 + $0x28] sm:$0xff]
        %v1935 = vld [vmem:[#allocation10 + $0x30] sm:$0xff]
        %v1936 = vld [vmem:[#allocation10 + $0x38] sm:$0xff]
        %v1937 = vld [vmem:[#allocation10 + $0x40] sm:$0xff]
        %v1938 = vld [vmem:[#allocation10 + $0x48] sm:$0xff]
        %v1939 = vld [vmem:[#allocation10 + $0x50] sm:$0xff]
        %v1940 = vld [vmem:[#allocation10 + $0x58] sm:$0xff]
        %v1941 = vld [vmem:[#allocation3] sm:$0xff]
        %v1942 = vld [vmem:[#allocation3 + $0x8] sm:$0xff]
        %v1943 = vld [vmem:[#allocation3 + $0x10] sm:$0xff]
        %v1944 = vld [vmem:[#allocation3 + $0x18] sm:$0xff]
        %v1945 = vld [vmem:[#allocation3 + $0x20] sm:$0xff]
        %v1946 = vld [vmem:[#allocation3 + $0x28] sm:$0xff]
        %v1947 = vld [vmem:[#allocation3 + $0x30] sm:$0xff]
        %v1948 = vld [vmem:[#allocation3 + $0x38] sm:$0xff]
        %1949 = vrot.lane.b32.xlu0 %v1941, 17
        %v1950 = vpop.permute.xlu0 %1949
        %1951 = vrot.lane.b32.xlu0 %v1943, 17
        %v1952 = vpop.permute.xlu0 %1951
        %1953 = vrot.lane.b32.xlu0 %v1945, 17
        %v1954 = vpop.permute.xlu0 %1953
        %1955 = vrot.lane.b32.xlu0 %v1947, 17
        %v1956 = vpop.permute.xlu0 %1955
        %1957 = vrot.lane.b32.xlu0 %v1942, 17
        %v1958 = vpop.permute.xlu0 %1957
        %1959 = vrot.lane.b32.xlu0 %v1944, 17
        %v1960 = vpop.permute.xlu0 %1959
        %1961 = vrot.lane.b32.xlu0 %v1946, 17
        %v1962 = vpop.permute.xlu0 %1961
        %1963 = vrot.lane.b32.xlu0 %v1948, 17
        %v1964 = vpop.permute.xlu0 %1963
        %v1965 = vlaneseq
        %v1966 = vand.u32 %v1965, 127
        %vm1967 = vcmp.lt.s32.totalorder %v1966, 17
        %v1968 = vsel %vm1967, %v1950, %v1958
        %v1969 = vsel %vm1967, %v1952, %v1960
        %v1970 = vsel %vm1967, %v1954, %v1962
        %v1971 = vsel %vm1967, %v1956, %v1964
        %v1972 = vsel %vm1967, %v1958, %v1950
        %v1973 = vsel %vm1967, %v1960, %v1952
        %v1974 = vsel %vm1967, %v1962, %v1954
        %v1975 = vsel %vm1967, %v1964, %v1956
        %v1976 = vld [vmem:[%s1] ss:$8 sm:$0x3]
        %v1978 = vlaneseq
        %v1979 = vshrl.u32 %v1978, 7
        %v1980 = vsub.s32 0, %v1979
        %v1981 = vrot.slane %v1976, %v1980
        %v1982 = vlaneseq
        %v1983 = vshrl.u32 %v1982, 7
        %v1984 = vsub.s32 1, %v1983
        %v1985 = vrot.slane %v1976, %v1984
        %v1988 = vmul.f32 %v1972, %v1981
        %v1989 = vmul.f32 %v1968, %v1985
        %v1990 = vmul.f32 %v1973, %v1981
        %v1991 = vmul.f32 %v1969, %v1985
        %v1992 = vmul.f32 %v1974, %v1981
        %v1993 = vmul.f32 %v1970, %v1985
        %v1994 = vmul.f32 %v1975, %v1981
        %v1995 = vmul.f32 %v1971, %v1985
        %1996 = vst [vmem:[#allocation2] sm:$0xff] %v1988
        %1997 = vst [vmem:[#allocation2 + $0x8] sm:$0xff] %v1989
        %1998 = vst [vmem:[#allocation2 + $0x10] sm:$0xff] %v1990
        %1999 = vst [vmem:[#allocation2 + $0x18] sm:$0xff] %v1991
        %2000 = vst [vmem:[#allocation2 + $0x20] sm:$0xff] %v1992
        %2001 = vst [vmem:[#allocation2 + $0x28] sm:$0xff] %v1993
        %2002 = vst [vmem:[#allocation2 + $0x30] sm:$0xff] %v1994
        %2003 = vst [vmem:[#allocation2 + $0x38] sm:$0xff] %v1995
        %2004 = vrot.lane.b32.xlu0 %v1941, 16
        %v2005 = vpop.permute.xlu0 %2004
        %2006 = vrot.lane.b32.xlu0 %v1943, 16
        %v2007 = vpop.permute.xlu0 %2006
        %2008 = vrot.lane.b32.xlu0 %v1945, 16
        %v2009 = vpop.permute.xlu0 %2008
        %2010 = vrot.lane.b32.xlu0 %v1947, 16
        %v2011 = vpop.permute.xlu0 %2010
        %2012 = vrot.lane.b32.xlu0 %v1942, 16
        %v2013 = vpop.permute.xlu0 %2012
        %2014 = vrot.lane.b32.xlu0 %v1944, 16
        %v2015 = vpop.permute.xlu0 %2014
        %2016 = vrot.lane.b32.xlu0 %v1946, 16
        %v2017 = vpop.permute.xlu0 %2016
        %2018 = vrot.lane.b32.xlu0 %v1948, 16
        %v2019 = vpop.permute.xlu0 %2018
        %vm2020 = vcmp.lt.s32.totalorder %v1966, 16
        %v2021 = vsel %vm2020, %v2005, %v2013
        %v2022 = vsel %vm2020, %v2007, %v2015
        %v2023 = vsel %vm2020, %v2009, %v2017
        %v2024 = vsel %vm2020, %v2011, %v2019
        %v2025 = vsel %vm2020, %v2013, %v2005
        %v2026 = vsel %vm2020, %v2015, %v2007
        %v2027 = vsel %vm2020, %v2017, %v2009
        %v2028 = vsel %vm2020, %v2019, %v2011
        %s2029 = scalar_lea.vmem %s1, 1
        %v2030 = vld [vmem:[%s2029] ss:$8 sm:$0x3]
        %v2032 = vlaneseq
        %v2033 = vshrl.u32 %v2032, 7
        %v2034 = vsub.s32 0, %v2033
        %v2035 = vrot.slane %v2030, %v2034
        %v2036 = vlaneseq
        %v2037 = vshrl.u32 %v2036, 7
        %v2038 = vsub.s32 1, %v2037
        %v2039 = vrot.slane %v2030, %v2038
        %v2042 = vmul.f32 %v2025, %v2035
        %v2043 = vmul.f32 %v2021, %v2039
        %v2044 = vmul.f32 %v2026, %v2035
        %v2045 = vmul.f32 %v2022, %v2039
        %v2046 = vmul.f32 %v2027, %v2035
        %v2047 = vmul.f32 %v2023, %v2039
        %v2048 = vmul.f32 %v2028, %v2035
        %v2049 = vmul.f32 %v2024, %v2039
        %2050 = vst [vmem:[#allocation2 + $0x40] sm:$0xff] %v2042
        %2051 = vst [vmem:[#allocation2 + $0x48] sm:$0xff] %v2043
        %2052 = vst [vmem:[#allocation2 + $0x50] sm:$0xff] %v2044
        %2053 = vst [vmem:[#allocation2 + $0x58] sm:$0xff] %v2045
        %2054 = vst [vmem:[#allocation2 + $0x60] sm:$0xff] %v2046
        %2055 = vst [vmem:[#allocation2 + $0x68] sm:$0xff] %v2047
        %2056 = vst [vmem:[#allocation2 + $0x70] sm:$0xff] %v2048
        %2057 = vst [vmem:[#allocation2 + $0x78] sm:$0xff] %v2049
        %2058 = vrot.lane.b32.xlu0 %v1941, 15
        %v2059 = vpop.permute.xlu0 %2058
        %2060 = vrot.lane.b32.xlu0 %v1943, 15
        %v2061 = vpop.permute.xlu0 %2060
        %2062 = vrot.lane.b32.xlu0 %v1945, 15
        %v2063 = vpop.permute.xlu0 %2062
        %2064 = vrot.lane.b32.xlu0 %v1947, 15
        %v2065 = vpop.permute.xlu0 %2064
        %2066 = vrot.lane.b32.xlu0 %v1942, 15
        %v2067 = vpop.permute.xlu0 %2066
        %2068 = vrot.lane.b32.xlu0 %v1944, 15
        %v2069 = vpop.permute.xlu0 %2068
        %2070 = vrot.lane.b32.xlu0 %v1946, 15
        %v2071 = vpop.permute.xlu0 %2070
        %2072 = vrot.lane.b32.xlu0 %v1948, 15
        %v2073 = vpop.permute.xlu0 %2072
        %vm2074 = vcmp.lt.s32.totalorder %v1966, 15
        %v2075 = vsel %vm2074, %v2059, %v2067
        %v2076 = vsel %vm2074, %v2061, %v2069
        %v2077 = vsel %vm2074, %v2063, %v2071
        %v2078 = vsel %vm2074, %v2065, %v2073
        %v2079 = vsel %vm2074, %v2067, %v2059
        %v2080 = vsel %vm2074, %v2069, %v2061
        %v2081 = vsel %vm2074, %v2071, %v2063
        %v2082 = vsel %vm2074, %v2073, %v2065
        %s2083 = scalar_lea.vmem %s1, 2
        %v2084 = vld [vmem:[%s2083] ss:$8 sm:$0x3]
        %v2086 = vlaneseq
        %v2087 = vshrl.u32 %v2086, 7
        %v2088 = vsub.s32 0, %v2087
        %v2089 = vrot.slane %v2084, %v2088
        %v2090 = vlaneseq
        %v2091 = vshrl.u32 %v2090, 7
        %v2092 = vsub.s32 1, %v2091
        %v2093 = vrot.slane %v2084, %v2092
        %v2096 = vmul.f32 %v2079, %v2089
        %v2097 = vmul.f32 %v2075, %v2093
        %v2098 = vmul.f32 %v2080, %v2089
        %v2099 = vmul.f32 %v2076, %v2093
        %v2100 = vmul.f32 %v2081, %v2089
        %v2101 = vmul.f32 %v2077, %v2093
        %v2102 = vmul.f32 %v2082, %v2089
        %v2103 = vmul.f32 %v2078, %v2093
        %2104 = vst [vmem:[#allocation2 + $0x80] sm:$0xff] %v2096
        %2105 = vst [vmem:[#allocation2 + $0x88] sm:$0xff] %v2097
        %2106 = vst [vmem:[#allocation2 + $0x90] sm:$0xff] %v2098
        %2107 = vst [vmem:[#allocation2 + $0x98] sm:$0xff] %v2099
        %2108 = vst [vmem:[#allocation2 + $0xa0] sm:$0xff] %v2100
        %2109 = vst [vmem:[#allocation2 + $0xa8] sm:$0xff] %v2101
        %2110 = vst [vmem:[#allocation2 + $0xb0] sm:$0xff] %v2102
        %2111 = vst [vmem:[#allocation2 + $0xb8] sm:$0xff] %v2103
        %2112 = vrot.lane.b32.xlu0 %v1941, 1
        %v2113 = vpop.permute.xlu0 %2112
        %2114 = vrot.lane.b32.xlu0 %v1943, 1
        %v2115 = vpop.permute.xlu0 %2114
        %2116 = vrot.lane.b32.xlu0 %v1945, 1
        %v2117 = vpop.permute.xlu0 %2116
        %2118 = vrot.lane.b32.xlu0 %v1947, 1
        %v2119 = vpop.permute.xlu0 %2118
        %2120 = vrot.lane.b32.xlu0 %v1942, 1
        %v2121 = vpop.permute.xlu0 %2120
        %2122 = vrot.lane.b32.xlu0 %v1944, 1
        %v2123 = vpop.permute.xlu0 %2122
        %2124 = vrot.lane.b32.xlu0 %v1946, 1
        %v2125 = vpop.permute.xlu0 %2124
        %2126 = vrot.lane.b32.xlu0 %v1948, 1
        %v2127 = vpop.permute.xlu0 %2126
        %vm2128 = vcmp.lt.s32.totalorder %v1966, 1
        %v2129 = vsel %vm2128, %v2113, %v2121
        %v2130 = vsel %vm2128, %v2115, %v2123
        %v2131 = vsel %vm2128, %v2117, %v2125
        %v2132 = vsel %vm2128, %v2119, %v2127
        %v2133 = vsel %vm2128, %v2121, %v2113
        %v2134 = vsel %vm2128, %v2123, %v2115
        %v2135 = vsel %vm2128, %v2125, %v2117
        %v2136 = vsel %vm2128, %v2127, %v2119
        %s2137 = scalar_lea.vmem %s1, 3
        %v2138 = vld [vmem:[%s2137] ss:$8 sm:$0x3]
        %v2140 = vlaneseq
        %v2141 = vshrl.u32 %v2140, 7
        %v2142 = vsub.s32 0, %v2141
        %v2143 = vrot.slane %v2138, %v2142
        %v2144 = vlaneseq
        %v2145 = vshrl.u32 %v2144, 7
        %v2146 = vsub.s32 1, %v2145
        %v2147 = vrot.slane %v2138, %v2146
        %v2150 = vmul.f32 %v2133, %v2143
        %v2151 = vmul.f32 %v2129, %v2147
        %v2152 = vmul.f32 %v2134, %v2143
        %v2153 = vmul.f32 %v2130, %v2147
        %v2154 = vmul.f32 %v2135, %v2143
        %v2155 = vmul.f32 %v2131, %v2147
        %v2156 = vmul.f32 %v2136, %v2143
        %v2157 = vmul.f32 %v2132, %v2147
        %2158 = vst [vmem:[#allocation2 + $0xc0] sm:$0xff] %v2150
        %2159 = vst [vmem:[#allocation2 + $0xc8] sm:$0xff] %v2151
        %2160 = vst [vmem:[#allocation2 + $0xd0] sm:$0xff] %v2152
        %2161 = vst [vmem:[#allocation2 + $0xd8] sm:$0xff] %v2153
        %2162 = vst [vmem:[#allocation2 + $0xe0] sm:$0xff] %v2154
        %2163 = vst [vmem:[#allocation2 + $0xe8] sm:$0xff] %v2155
        %2164 = vst [vmem:[#allocation2 + $0xf0] sm:$0xff] %v2156
        %2165 = vst [vmem:[#allocation2 + $0xf8] sm:$0xff] %v2157
        %2166 = vst [vmem:[#allocation2 + $0x100] sm:$0xff] %v1941
        %2167 = vst [vmem:[#allocation2 + $0x108] sm:$0xff] %v1942
        %2168 = vst [vmem:[#allocation2 + $0x110] sm:$0xff] %v1943
        %2169 = vst [vmem:[#allocation2 + $0x118] sm:$0xff] %v1944
        %2170 = vst [vmem:[#allocation2 + $0x120] sm:$0xff] %v1945
        %2171 = vst [vmem:[#allocation2 + $0x128] sm:$0xff] %v1946
        %2172 = vst [vmem:[#allocation2 + $0x130] sm:$0xff] %v1947
        %2173 = vst [vmem:[#allocation2 + $0x138] sm:$0xff] %v1948
        %2174 = vrot.lane.b32.xlu0 %v1941, 127
        %v2175 = vpop.permute.xlu0 %2174
        %2176 = vrot.lane.b32.xlu0 %v1943, 127
        %v2177 = vpop.permute.xlu0 %2176
        %2178 = vrot.lane.b32.xlu0 %v1945, 127
        %v2179 = vpop.permute.xlu0 %2178
        %2180 = vrot.lane.b32.xlu0 %v1947, 127
        %v2181 = vpop.permute.xlu0 %2180
        %2182 = vrot.lane.b32.xlu0 %v1942, 127
        %v2183 = vpop.permute.xlu0 %2182
        %2184 = vrot.lane.b32.xlu0 %v1944, 127
        %v2185 = vpop.permute.xlu0 %2184
        %2186 = vrot.lane.b32.xlu0 %v1946, 127
        %v2187 = vpop.permute.xlu0 %2186
        %2188 = vrot.lane.b32.xlu0 %v1948, 127
        %v2189 = vpop.permute.xlu0 %2188
        %vm2190 = vcmp.lt.s32.totalorder %v1966, 127
        %v2191 = vsel %vm2190, %v2175, %v2183
        %v2192 = vsel %vm2190, %v2177, %v2185
        %v2193 = vsel %vm2190, %v2179, %v2187
        %v2194 = vsel %vm2190, %v2181, %v2189
        %v2195 = vsel %vm2190, %v2183, %v2175
        %v2196 = vsel %vm2190, %v2185, %v2177
        %v2197 = vsel %vm2190, %v2187, %v2179
        %v2198 = vsel %vm2190, %v2189, %v2181
        %s2199 = scalar_lea.vmem %s1, 5
        %v2200 = vld [vmem:[%s2199] ss:$8 sm:$0x3]
        %v2202 = vlaneseq
        %v2203 = vshrl.u32 %v2202, 7
        %v2204 = vsub.s32 0, %v2203
        %v2205 = vrot.slane %v2200, %v2204
        %v2206 = vlaneseq
        %v2207 = vshrl.u32 %v2206, 7
        %v2208 = vsub.s32 1, %v2207
        %v2209 = vrot.slane %v2200, %v2208
        %v2212 = vmul.f32 %v2191, %v2205
        %v2213 = vmul.f32 %v2195, %v2209
        %v2214 = vmul.f32 %v2192, %v2205
        %v2215 = vmul.f32 %v2196, %v2209
        %v2216 = vmul.f32 %v2193, %v2205
        %v2217 = vmul.f32 %v2197, %v2209
        %v2218 = vmul.f32 %v2194, %v2205
        %v2219 = vmul.f32 %v2198, %v2209
        %2220 = vst [vmem:[#allocation2 + $0x140] sm:$0xff] %v2212
        %2221 = vst [vmem:[#allocation2 + $0x148] sm:$0xff] %v2213
        %2222 = vst [vmem:[#allocation2 + $0x150] sm:$0xff] %v2214
        %2223 = vst [vmem:[#allocation2 + $0x158] sm:$0xff] %v2215
        %2224 = vst [vmem:[#allocation2 + $0x160] sm:$0xff] %v2216
        %2225 = vst [vmem:[#allocation2 + $0x168] sm:$0xff] %v2217
        %2226 = vst [vmem:[#allocation2 + $0x170] sm:$0xff] %v2218
        %2227 = vst [vmem:[#allocation2 + $0x178] sm:$0xff] %v2219
        %2228 = vrot.lane.b32.xlu0 %v1941, 113
        %v2229 = vpop.permute.xlu0 %2228
        %2230 = vrot.lane.b32.xlu0 %v1943, 113
        %v2231 = vpop.permute.xlu0 %2230
        %2232 = vrot.lane.b32.xlu0 %v1945, 113
        %v2233 = vpop.permute.xlu0 %2232
        %2234 = vrot.lane.b32.xlu0 %v1947, 113
        %v2235 = vpop.permute.xlu0 %2234
        %2236 = vrot.lane.b32.xlu0 %v1942, 113
        %v2237 = vpop.permute.xlu0 %2236
        %2238 = vrot.lane.b32.xlu0 %v1944, 113
        %v2239 = vpop.permute.xlu0 %2238
        %2240 = vrot.lane.b32.xlu0 %v1946, 113
        %v2241 = vpop.permute.xlu0 %2240
        %2242 = vrot.lane.b32.xlu0 %v1948, 113
        %v2243 = vpop.permute.xlu0 %2242
        %vm2244 = vcmp.lt.s32.totalorder %v1966, 113
        %v2245 = vsel %vm2244, %v2229, %v2237
        %v2246 = vsel %vm2244, %v2231, %v2239
        %v2247 = vsel %vm2244, %v2233, %v2241
        %v2248 = vsel %vm2244, %v2235, %v2243
        %v2249 = vsel %vm2244, %v2237, %v2229
        %v2250 = vsel %vm2244, %v2239, %v2231
        %v2251 = vsel %vm2244, %v2241, %v2233
        %v2252 = vsel %vm2244, %v2243, %v2235
        %s2253 = scalar_lea.vmem %s1, 6
        %v2254 = vld [vmem:[%s2253] ss:$8 sm:$0x3]
        %v2256 = vlaneseq
        %v2257 = vshrl.u32 %v2256, 7
        %v2258 = vsub.s32 0, %v2257
        %v2259 = vrot.slane %v2254, %v2258
        %v2260 = vlaneseq
        %v2261 = vshrl.u32 %v2260, 7
        %v2262 = vsub.s32 1, %v2261
        %v2263 = vrot.slane %v2254, %v2262
        %v2266 = vmul.f32 %v2245, %v2259
        %v2267 = vmul.f32 %v2249, %v2263
        %v2268 = vmul.f32 %v2246, %v2259
        %v2269 = vmul.f32 %v2250, %v2263
        %v2270 = vmul.f32 %v2247, %v2259
        %v2271 = vmul.f32 %v2251, %v2263
        %v2272 = vmul.f32 %v2248, %v2259
        %v2273 = vmul.f32 %v2252, %v2263
        %2274 = vst [vmem:[#allocation2 + $0x180] sm:$0xff] %v2266
        %2275 = vst [vmem:[#allocation2 + $0x188] sm:$0xff] %v2267
        %2276 = vst [vmem:[#allocation2 + $0x190] sm:$0xff] %v2268
        %2277 = vst [vmem:[#allocation2 + $0x198] sm:$0xff] %v2269
        %2278 = vst [vmem:[#allocation2 + $0x1a0] sm:$0xff] %v2270
        %2279 = vst [vmem:[#allocation2 + $0x1a8] sm:$0xff] %v2271
        %2280 = vst [vmem:[#allocation2 + $0x1b0] sm:$0xff] %v2272
        %2281 = vst [vmem:[#allocation2 + $0x1b8] sm:$0xff] %v2273
        %2282 = vrot.lane.b32.xlu0 %v1941, 112
        %v2283 = vpop.permute.xlu0 %2282
        %2284 = vrot.lane.b32.xlu0 %v1943, 112
        %v2285 = vpop.permute.xlu0 %2284
        %2286 = vrot.lane.b32.xlu0 %v1945, 112
        %v2287 = vpop.permute.xlu0 %2286
        %2288 = vrot.lane.b32.xlu0 %v1947, 112
        %v2289 = vpop.permute.xlu0 %2288
        %2290 = vrot.lane.b32.xlu0 %v1942, 112
        %v2291 = vpop.permute.xlu0 %2290
        %2292 = vrot.lane.b32.xlu0 %v1944, 112
        %v2293 = vpop.permute.xlu0 %2292
        %2294 = vrot.lane.b32.xlu0 %v1946, 112
        %v2295 = vpop.permute.xlu0 %2294
        %2296 = vrot.lane.b32.xlu0 %v1948, 112
        %v2297 = vpop.permute.xlu0 %2296
        %vm2298 = vcmp.lt.s32.totalorder %v1966, 112
        %v2299 = vsel %vm2298, %v2283, %v2291
        %v2300 = vsel %vm2298, %v2285, %v2293
        %v2301 = vsel %vm2298, %v2287, %v2295
        %v2302 = vsel %vm2298, %v2289, %v2297
        %v2303 = vsel %vm2298, %v2291, %v2283
        %v2304 = vsel %vm2298, %v2293, %v2285
        %v2305 = vsel %vm2298, %v2295, %v2287
        %v2306 = vsel %vm2298, %v2297, %v2289
        %s2307 = scalar_lea.vmem %s1, 7
        %v2308 = vld [vmem:[%s2307] ss:$8 sm:$0x3]
        %v2310 = vlaneseq
        %v2311 = vshrl.u32 %v2310, 7
        %v2312 = vsub.s32 0, %v2311
        %v2313 = vrot.slane %v2308, %v2312
        %v2314 = vlaneseq
        %v2315 = vshrl.u32 %v2314, 7
        %v2316 = vsub.s32 1, %v2315
        %v2317 = vrot.slane %v2308, %v2316
        %v2320 = vmul.f32 %v2299, %v2313
        %v2321 = vmul.f32 %v2303, %v2317
        %v2322 = vmul.f32 %v2300, %v2313
        %v2323 = vmul.f32 %v2304, %v2317
        %v2324 = vmul.f32 %v2301, %v2313
        %v2325 = vmul.f32 %v2305, %v2317
        %v2326 = vmul.f32 %v2302, %v2313
        %v2327 = vmul.f32 %v2306, %v2317
        %2328 = vst [vmem:[#allocation2 + $0x1c0] sm:$0xff] %v2320
        %2329 = vst [vmem:[#allocation2 + $0x1c8] sm:$0xff] %v2321
        %2330 = vst [vmem:[#allocation2 + $0x1d0] sm:$0xff] %v2322
        %2331 = vst [vmem:[#allocation2 + $0x1d8] sm:$0xff] %v2323
        %2332 = vst [vmem:[#allocation2 + $0x1e0] sm:$0xff] %v2324
        %2333 = vst [vmem:[#allocation2 + $0x1e8] sm:$0xff] %v2325
        %2334 = vst [vmem:[#allocation2 + $0x1f0] sm:$0xff] %v2326
        %2335 = vst [vmem:[#allocation2 + $0x1f8] sm:$0xff] %v2327
        %2336 = vrot.lane.b32.xlu0 %v1941, 111
        %v2337 = vpop.permute.xlu0 %2336
        %2338 = vrot.lane.b32.xlu0 %v1943, 111
        %v2339 = vpop.permute.xlu0 %2338
        %2340 = vrot.lane.b32.xlu0 %v1945, 111
        %v2341 = vpop.permute.xlu0 %2340
        %2342 = vrot.lane.b32.xlu0 %v1947, 111
        %v2343 = vpop.permute.xlu0 %2342
        %2344 = vrot.lane.b32.xlu0 %v1942, 111
        %v2345 = vpop.permute.xlu0 %2344
        %2346 = vrot.lane.b32.xlu0 %v1944, 111
        %v2347 = vpop.permute.xlu0 %2346
        %2348 = vrot.lane.b32.xlu0 %v1946, 111
        %v2349 = vpop.permute.xlu0 %2348
        %2350 = vrot.lane.b32.xlu0 %v1948, 111
        %v2351 = vpop.permute.xlu0 %2350
        %vm2352 = vcmp.lt.s32.totalorder %v1966, 111
        %v2353 = vsel %vm2352, %v2337, %v2345
        %v2354 = vsel %vm2352, %v2339, %v2347
        %v2355 = vsel %vm2352, %v2341, %v2349
        %v2356 = vsel %vm2352, %v2343, %v2351
        %v2357 = vsel %vm2352, %v2345, %v2337
        %v2358 = vsel %vm2352, %v2347, %v2339
        %v2359 = vsel %vm2352, %v2349, %v2341
        %v2360 = vsel %vm2352, %v2351, %v2343
        %s2361 = scalar_lea.vmem %s1, 16
        %v2362 = vld [vmem:[%s2361] ss:$8 sm:$0x3]
        %v2364 = vlaneseq
        %v2365 = vshrl.u32 %v2364, 7
        %v2366 = vsub.s32 0, %v2365
        %v2367 = vrot.slane %v2362, %v2366
        %v2368 = vlaneseq
        %v2369 = vshrl.u32 %v2368, 7
        %v2370 = vsub.s32 1, %v2369
        %v2371 = vrot.slane %v2362, %v2370
        %v2374 = vmul.f32 %v2353, %v2367
        %v2375 = vmul.f32 %v2357, %v2371
        %v2376 = vmul.f32 %v2354, %v2367
        %v2377 = vmul.f32 %v2358, %v2371
        %v2378 = vmul.f32 %v2355, %v2367
        %v2379 = vmul.f32 %v2359, %v2371
        %v2380 = vmul.f32 %v2356, %v2367
        %v2381 = vmul.f32 %v2360, %v2371
        %2382 = vst [vmem:[#allocation2 + $0x200] sm:$0xff] %v2374
        %2383 = vst [vmem:[#allocation2 + $0x208] sm:$0xff] %v2375
        %2384 = vst [vmem:[#allocation2 + $0x210] sm:$0xff] %v2376
        %2385 = vst [vmem:[#allocation2 + $0x218] sm:$0xff] %v2377
        %2386 = vst [vmem:[#allocation2 + $0x220] sm:$0xff] %v2378
        %2387 = vst [vmem:[#allocation2 + $0x228] sm:$0xff] %v2379
        %2388 = vst [vmem:[#allocation2 + $0x230] sm:$0xff] %v2380
        %2389 = vst [vmem:[#allocation2 + $0x238] sm:$0xff] %v2381
        %v2390 = vld [vmem:[#allocation2] sm:$0xff]
        %v2391 = vld [vmem:[#allocation2 + $0x8] sm:$0xff]
        %v2392 = vld [vmem:[#allocation2 + $0x10] sm:$0xff]
        %v2393 = vld [vmem:[#allocation2 + $0x18] sm:$0xff]
        %v2394 = vld [vmem:[#allocation2 + $0x20] sm:$0xff]
        %v2395 = vld [vmem:[#allocation2 + $0x28] sm:$0xff]
        %v2396 = vld [vmem:[#allocation2 + $0x30] sm:$0xff]
        %v2397 = vld [vmem:[#allocation2 + $0x38] sm:$0xff]
        %v2398 = vld [vmem:[#allocation2 + $0x40] sm:$0xff]
        %v2399 = vld [vmem:[#allocation2 + $0x48] sm:$0xff]
        %v2400 = vld [vmem:[#allocation2 + $0x50] sm:$0xff]
        %v2401 = vld [vmem:[#allocation2 + $0x58] sm:$0xff]
        %v2402 = vld [vmem:[#allocation2 + $0x60] sm:$0xff]
        %v2403 = vld [vmem:[#allocation2 + $0x68] sm:$0xff]
        %v2404 = vld [vmem:[#allocation2 + $0x70] sm:$0xff]
        %v2405 = vld [vmem:[#allocation2 + $0x78] sm:$0xff]
        %v2406 = vld [vmem:[#allocation2 + $0x80] sm:$0xff]
        %v2407 = vld [vmem:[#allocation2 + $0x88] sm:$0xff]
        %v2408 = vld [vmem:[#allocation2 + $0x90] sm:$0xff]
        %v2409 = vld [vmem:[#allocation2 + $0x98] sm:$0xff]
        %v2410 = vld [vmem:[#allocation2 + $0xa0] sm:$0xff]
        %v2411 = vld [vmem:[#allocation2 + $0xa8] sm:$0xff]
        %v2412 = vld [vmem:[#allocation2 + $0xb0] sm:$0xff]
        %v2413 = vld [vmem:[#allocation2 + $0xb8] sm:$0xff]
        %v2414 = vld [vmem:[#allocation2 + $0xc0] sm:$0xff]
        %v2415 = vld [vmem:[#allocation2 + $0xc8] sm:$0xff]
        %v2416 = vld [vmem:[#allocation2 + $0xd0] sm:$0xff]
        %v2417 = vld [vmem:[#allocation2 + $0xd8] sm:$0xff]
        %v2418 = vld [vmem:[#allocation2 + $0xe0] sm:$0xff]
        %v2419 = vld [vmem:[#allocation2 + $0xe8] sm:$0xff]
        %v2420 = vld [vmem:[#allocation2 + $0xf0] sm:$0xff]
        %v2421 = vld [vmem:[#allocation2 + $0xf8] sm:$0xff]
        %v2422 = vld [vmem:[#allocation2 + $0x100] sm:$0xff]
        %v2423 = vld [vmem:[#allocation2 + $0x108] sm:$0xff]
        %v2424 = vld [vmem:[#allocation2 + $0x110] sm:$0xff]
        %v2425 = vld [vmem:[#allocation2 + $0x118] sm:$0xff]
        %v2426 = vld [vmem:[#allocation2 + $0x120] sm:$0xff]
        %v2427 = vld [vmem:[#allocation2 + $0x128] sm:$0xff]
        %v2428 = vld [vmem:[#allocation2 + $0x130] sm:$0xff]
        %v2429 = vld [vmem:[#allocation2 + $0x138] sm:$0xff]
        %v2430 = vld [vmem:[#allocation2 + $0x140] sm:$0xff]
        %v2431 = vld [vmem:[#allocation2 + $0x148] sm:$0xff]
        %v2432 = vld [vmem:[#allocation2 + $0x150] sm:$0xff]
        %v2433 = vld [vmem:[#allocation2 + $0x158] sm:$0xff]
        %v2434 = vld [vmem:[#allocation2 + $0x160] sm:$0xff]
        %v2435 = vld [vmem:[#allocation2 + $0x168] sm:$0xff]
        %v2436 = vld [vmem:[#allocation2 + $0x170] sm:$0xff]
        %v2437 = vld [vmem:[#allocation2 + $0x178] sm:$0xff]
        %v2438 = vld [vmem:[#allocation2 + $0x180] sm:$0xff]
        %v2439 = vld [vmem:[#allocation2 + $0x188] sm:$0xff]
        %v2440 = vld [vmem:[#allocation2 + $0x190] sm:$0xff]
        %v2441 = vld [vmem:[#allocation2 + $0x198] sm:$0xff]
        %v2442 = vld [vmem:[#allocation2 + $0x1a0] sm:$0xff]
        %v2443 = vld [vmem:[#allocation2 + $0x1a8] sm:$0xff]
        %v2444 = vld [vmem:[#allocation2 + $0x1b0] sm:$0xff]
        %v2445 = vld [vmem:[#allocation2 + $0x1b8] sm:$0xff]
        %v2446 = vld [vmem:[#allocation2 + $0x1c0] sm:$0xff]
        %v2447 = vld [vmem:[#allocation2 + $0x1c8] sm:$0xff]
        %v2448 = vld [vmem:[#allocation2 + $0x1d0] sm:$0xff]
        %v2449 = vld [vmem:[#allocation2 + $0x1d8] sm:$0xff]
        %v2450 = vld [vmem:[#allocation2 + $0x1e0] sm:$0xff]
        %v2451 = vld [vmem:[#allocation2 + $0x1e8] sm:$0xff]
        %v2452 = vld [vmem:[#allocation2 + $0x1f0] sm:$0xff]
        %v2453 = vld [vmem:[#allocation2 + $0x1f8] sm:$0xff]
        %v2454 = vld [vmem:[#allocation2 + $0x200] sm:$0xff]
        %v2455 = vld [vmem:[#allocation2 + $0x208] sm:$0xff]
        %v2456 = vld [vmem:[#allocation2 + $0x210] sm:$0xff]
        %v2457 = vld [vmem:[#allocation2 + $0x218] sm:$0xff]
        %v2458 = vld [vmem:[#allocation2 + $0x220] sm:$0xff]
        %v2459 = vld [vmem:[#allocation2 + $0x228] sm:$0xff]
        %v2460 = vld [vmem:[#allocation2 + $0x230] sm:$0xff]
        %v2461 = vld [vmem:[#allocation2 + $0x238] sm:$0xff]
        %vm2462 = vcmask 261120
        %v2464 = vsel %vm2462, %v1931, 0
        %v2467 = vsel %vm2462, %v1934, 0
        %v2470 = vsel %vm2462, %v1937, 0
        %v2473 = vsel %vm2462, %v1940, 0
        %2475 = vmatprep.subr.mxu0 %v2391
        %2476 = vmatpush1.msra.mxu0 %v2390
        %2477 = vmatprep.subr.mxu0 %v2393
        %2478 = vmatpush1.msra.mxu0 %v2392
        %2479 = vmatprep.subr.mxu0 %v2395
        %2480 = vmatpush1.msra.mxu0 %v2394
        %2481 = vmatprep.subr.mxu0 %v2397
        %2482 = vmatpush1.msra.mxu0 %v2396
        %2483 = vmatprep.subr.mxu0 %v2399
        %2484 = vmatpush1.msra.mxu0 %v2398
        %2485 = vmatprep.subr.mxu0 %v2401
        %2486 = vmatpush1.msra.mxu0 %v2400
        %2487 = vmatprep.subr.mxu0 %v2403
        %2488 = vmatpush1.msra.mxu0 %v2402
        %2489 = vmatprep.subr.mxu0 %v2405
        %2490 = vmatpush1.msra.mxu0 %v2404
        %2491 = vmatprep.subr.mxu0 %v2407
        %2492 = vmatpush1.msra.mxu0 %v2406
        %2493 = vmatprep.subr.mxu0 %v2409
        %2494 = vmatpush1.msra.mxu0 %v2408
        %2495 = vmatprep.subr.mxu0 %v2411
        %2496 = vmatpush1.msra.mxu0 %v2410
        %2497 = vmatprep.subr.mxu0 %v2413
        %2498 = vmatpush1.msra.mxu0 %v2412
        %2499 = vmatprep.subr.mxu0 %v2415
        %2500 = vmatpush1.msra.mxu0 %v2414
        %2501 = vmatprep.subr.mxu0 %v2417
        %2502 = vmatpush1.msra.mxu0 %v2416
        %2503 = vmatprep.subr.mxu0 %v2419
        %2504 = vmatpush1.msra.mxu0 %v2418
        %2505 = vmatprep.subr.mxu0 %v2421
        %2506 = vmatpush1.msra.mxu0 %v2420
        %2507 = vmatprep.subr.mxu0 %v2423
        %2508 = vmatpush1.msra.mxu0 %v2422
        %2509 = vmatprep.subr.mxu0 %v2425
        %2510 = vmatpush1.msra.mxu0 %v2424
        %2511 = vmatprep.subr.mxu0 %v2427
        %2512 = vmatpush1.msra.mxu0 %v2426
        %2513 = vmatprep.subr.mxu0 %v2429
        %2514 = vmatpush1.msra.mxu0 %v2428
        %2515 = vmatprep.subr.mxu0 %v2431
        %2516 = vmatpush1.msra.mxu0 %v2430
        %2517 = vmatprep.subr.mxu0 %v2433
        %2518 = vmatpush1.msra.mxu0 %v2432
        %2519 = vmatprep.subr.mxu0 %v2435
        %2520 = vmatpush1.msra.mxu0 %v2434
        %2521 = vmatprep.subr.mxu0 %v2437
        %2522 = vmatpush1.msra.mxu0 %v2436
        %2523 = vmatprep.subr.mxu0 %v2439
        %2524 = vmatpush1.msra.mxu0 %v2438
        %2525 = vmatprep.subr.mxu0 %v2441
        %2526 = vmatpush1.msra.mxu0 %v2440
        %2527 = vmatprep.subr.mxu0 %v2443
        %2528 = vmatpush1.msra.mxu0 %v2442
        %2529 = vmatprep.subr.mxu0 %v2445
        %2530 = vmatpush1.msra.mxu0 %v2444
        %2531 = vmatprep.subr.mxu0 %v2447
        %2532 = vmatpush1.msra.mxu0 %v2446
        %2533 = vmatprep.subr.mxu0 %v2449
        %2534 = vmatpush1.msra.mxu0 %v2448
        %2535 = vmatprep.subr.mxu0 %v2451
        %2536 = vmatpush1.msra.mxu0 %v2450
        %2537 = vmatprep.subr.mxu0 %v2453
        %2538 = vmatpush1.msra.mxu0 %v2452
        %2539 = vmatprep.mubr.f32.mxu0 %v1930
        %2540 = vmatmul.mubr.f32.gmra.mrb[0].mxu0 %v1929
        %v2541 = vpop.f32.mrb[0].mxu0
        %v2542 = vadd.f32 0.0, %v2541
        %v2543 = vpop.f32.mrb[0].mxu0
        %v2544 = vadd.f32 0.0, %v2543
        %2545 = vmatprep.mubr.f32.mxu0 %v1933
        %2546 = vmatmul.mubr.f32.gmra.mrb[0].mxu0 %v1932
        %v2547 = vpop.f32.mrb[0].mxu0
        %v2548 = vadd.f32 0.0, %v2547
        %v2549 = vpop.f32.mrb[0].mxu0
        %v2550 = vadd.f32 0.0, %v2549
        %2551 = vmatprep.mubr.f32.mxu0 %v1936
        %2552 = vmatmul.mubr.f32.gmra.mrb[0].mxu0 %v1935
        %v2553 = vpop.f32.mrb[0].mxu0
        %v2554 = vadd.f32 0.0, %v2553
        %v2555 = vpop.f32.mrb[0].mxu0
        %v2556 = vadd.f32 0.0, %v2555
        %2557 = vmatprep.mubr.f32.mxu0 %v1939
        %2558 = vmatmul.mubr.f32.gmra.mrb[0].mxu0 %v1938
        %v2559 = vpop.f32.mrb[0].mxu0
        %v2560 = vadd.f32 0.0, %v2559
        %v2561 = vpop.f32.mrb[0].mxu0
        %v2562 = vadd.f32 0.0, %v2561
        %2563 = vdwg.mxu0
        %2564 = vmatprep.subr.mxu0 %v2455
        %2565 = vmatpush1.msra.mxu0 %v2454
        %2566 = vmatprep.subr.mxu0 %v2457
        %2567 = vmatpush1.msra.mxu0 %v2456
        %2568 = vmatprep.subr.mxu0 %v2459
        %2569 = vmatpush1.msra.mxu0 %v2458
        %2570 = vmatprep.subr.mxu0 %v2461
        %2571 = vmatpush1.msra.mxu0 %v2460
        %2572 = vmatprep.subr.mxu0 0.0
        %2573 = vmatpush1.msra.mxu0 0.0
        %2574 = vmatprep.subr.mxu0 0.0
        %2575 = vmatpush1.msra.mxu0 0.0
        %2576 = vmatprep.subr.mxu0 0.0
        %2577 = vmatpush1.msra.mxu0 0.0
        %2578 = vmatprep.subr.mxu0 0.0
        %2579 = vmatpush1.msra.mxu0 0.0
        %2580 = vmatprep.subr.mxu0 0.0
        %2581 = vmatpush1.msra.mxu0 0.0
        %2582 = vmatprep.subr.mxu0 0.0
        %2583 = vmatpush1.msra.mxu0 0.0
        %2584 = vmatprep.subr.mxu0 0.0
        %2585 = vmatpush1.msra.mxu0 0.0
        %2586 = vmatprep.subr.mxu0 0.0
        %2587 = vmatpush1.msra.mxu0 0.0
        %2588 = vmatprep.subr.mxu0 0.0
        %2589 = vmatpush1.msra.mxu0 0.0
        %2590 = vmatprep.subr.mxu0 0.0
        %2591 = vmatpush1.msra.mxu0 0.0
        %2592 = vmatprep.subr.mxu0 0.0
        %2593 = vmatpush1.msra.mxu0 0.0
        %2594 = vmatprep.subr.mxu0 0.0
        %2595 = vmatpush1.msra.mxu0 0.0
        %2596 = vmatprep.subr.mxu0 0.0
        %2597 = vmatpush1.msra.mxu0 0.0
        %2598 = vmatprep.subr.mxu0 0.0
        %2599 = vmatpush1.msra.mxu0 0.0
        %2600 = vmatprep.subr.mxu0 0.0
        %2601 = vmatpush1.msra.mxu0 0.0
        %2602 = vmatprep.subr.mxu0 0.0
        %2603 = vmatpush1.msra.mxu0 0.0
        %2604 = vmatprep.subr.mxu0 0.0
        %2605 = vmatpush1.msra.mxu0 0.0
        %2606 = vmatprep.subr.mxu0 0.0
        %2607 = vmatpush1.msra.mxu0 0.0
        %2608 = vmatprep.subr.mxu0 0.0
        %2609 = vmatpush1.msra.mxu0 0.0
        %2610 = vmatprep.subr.mxu0 0.0
        %2611 = vmatpush1.msra.mxu0 0.0
        %2612 = vmatprep.subr.mxu0 0.0
        %2613 = vmatpush1.msra.mxu0 0.0
        %2614 = vmatprep.subr.mxu0 0.0
        %2615 = vmatpush1.msra.mxu0 0.0
        %2616 = vmatprep.subr.mxu0 0.0
        %2617 = vmatpush1.msra.mxu0 0.0
        %2618 = vmatprep.subr.mxu0 0.0
        %2619 = vmatpush1.msra.mxu0 0.0
        %2620 = vmatprep.subr.mxu0 0.0
        %2621 = vmatpush1.msra.mxu0 0.0
        %2622 = vmatprep.subr.mxu0 0.0
        %2623 = vmatpush1.msra.mxu0 0.0
        %2624 = vmatprep.subr.mxu0 0.0
        %2625 = vmatpush1.msra.mxu0 0.0
        %2626 = vmatprep.subr.mxu0 0.0
        %2627 = vmatpush1.msra.mxu0 0.0
        %2628 = vmatprep.mubr.f32.mxu0 0.0
        %2629 = vmatmul.mubr.f32.gmra.mrb[0].mxu0 %v2464
        %v2630 = vpop.f32.mrb[0].mxu0
        %v2631 = vadd.f32 %v2542, %v2630
        %v2632 = vpop.f32.mrb[0].mxu0
        %v2633 = vadd.f32 %v2544, %v2632
        %2634 = vmatprep.mubr.f32.mxu0 0.0
        %2635 = vmatmul.mubr.f32.gmra.mrb[0].mxu0 %v2467
        %v2636 = vpop.f32.mrb[0].mxu0
        %v2637 = vadd.f32 %v2548, %v2636
        %v2638 = vpop.f32.mrb[0].mxu0
        %v2639 = vadd.f32 %v2550, %v2638
        %2640 = vmatprep.mubr.f32.mxu0 0.0
        %2641 = vmatmul.mubr.f32.gmra.mrb[0].mxu0 %v2470
        %v2642 = vpop.f32.mrb[0].mxu0
        %v2643 = vadd.f32 %v2554, %v2642
        %v2644 = vpop.f32.mrb[0].mxu0
        %v2645 = vadd.f32 %v2556, %v2644
        %2646 = vmatprep.mubr.f32.mxu0 0.0
        %2647 = vmatmul.mubr.f32.gmra.mrb[0].mxu0 %v2473
        %v2648 = vpop.f32.mrb[0].mxu0
        %v2649 = vadd.f32 %v2560, %v2648
        %v2650 = vpop.f32.mrb[0].mxu0
        %v2651 = vadd.f32 %v2562, %v2650
        %2652 = vdwg.mxu0
        %2653 = vst [vmem:[#allocation4] sm:$0xff] %v2631
        %2654 = vst [vmem:[#allocation4 + $0x8] sm:$0xff] %v2633
        %2655 = vst [vmem:[#allocation4 + $0x10] sm:$0xff] %v2637
        %2656 = vst [vmem:[#allocation4 + $0x18] sm:$0xff] %v2639
        %2657 = vst [vmem:[#allocation4 + $0x20] sm:$0xff] %v2643
        %2658 = vst [vmem:[#allocation4 + $0x28] sm:$0xff] %v2645
        %2659 = vst [vmem:[#allocation4 + $0x30] sm:$0xff] %v2649
        %2660 = vst [vmem:[#allocation4 + $0x38] sm:$0xff] %v2651
        %v2661 = vld [vmem:[#allocation4] sm:$0xff]
        %v2662 = vld [vmem:[#allocation4 + $0x8] sm:$0xff]
        %v2663 = vld [vmem:[#allocation4 + $0x10] sm:$0xff]
        %v2664 = vld [vmem:[#allocation4 + $0x18] sm:$0xff]
        %v2665 = vld [vmem:[#allocation4 + $0x20] sm:$0xff]
        %v2666 = vld [vmem:[#allocation4 + $0x28] sm:$0xff]
        %v2667 = vld [vmem:[#allocation4 + $0x30] sm:$0xff]
        %v2668 = vld [vmem:[#allocation4 + $0x38] sm:$0xff]
        %v2669 = vld [vmem:[%s320] sm:$0xff]
        %v2670 = vld [vmem:[%s320 + $0x8] sm:$0xff]
        %v2671 = vld [vmem:[%s320 + $0x10] sm:$0xff]
        %v2672 = vld [vmem:[%s320 + $0x18] sm:$0xff]
        %v2673 = vld [vmem:[%s320 + $0x20] sm:$0xff]
        %v2674 = vld [vmem:[%s320 + $0x28] sm:$0xff]
        %v2675 = vld [vmem:[%s320 + $0x30] sm:$0xff]
        %v2676 = vld [vmem:[%s320 + $0x38] sm:$0xff]
        %v2677 = vadd.f32 %v2661, %v2669
        %v2678 = vadd.f32 %v2662, %v2670
        %v2679 = vadd.f32 %v2663, %v2671
        %v2680 = vadd.f32 %v2664, %v2672
        %v2681 = vadd.f32 %v2665, %v2673
        %v2682 = vadd.f32 %v2666, %v2674
        %v2683 = vadd.f32 %v2667, %v2675
        %v2684 = vadd.f32 %v2668, %v2676
        %2685 = vst [vmem:[%s315] sm:$0xff] %v2677
        %2686 = vst [vmem:[%s315 + $0x8] sm:$0xff] %v2678
        %2687 = vst [vmem:[%s315 + $0x10] sm:$0xff] %v2679
        %2688 = vst [vmem:[%s315 + $0x18] sm:$0xff] %v2680
        %2689 = vst [vmem:[%s315 + $0x20] sm:$0xff] %v2681
        %2690 = vst [vmem:[%s315 + $0x28] sm:$0xff] %v2682
        %2691 = vst [vmem:[%s315 + $0x30] sm:$0xff] %v2683
        %2692 = vst [vmem:[%s315 + $0x38] sm:$0xff] %v2684
        %s2693 = sand.u32 %s183, 1
        %s2694 = scalar_lea.sflag [#allocation7], %s2693
        %s2695 = sand.u32 %s183, 1
        %s2696 = smul.addr %s2695, 64
        %s2697 = scalar_lea.vmem [#allocation11], %s2696
        // Predicated region
        $region68: #{tpu_custom_call.1} parent=47 // pred_check
          %p2698 = pneg %p193
        $region69: #{tpu_custom_call.1} parent=47 // pred_check_branch
          %2700 = sbr.rel (%p2698) target = $region71
        $region70: #{tpu_custom_call.1} parent=47 // pred_region
          %s2702 = ssub.s32 1024, 1024
          %2703 = vsyncadd %s2694, %s2702
          %s2704 = smul.addr %s23, 8
          %s2705 = smul.addr %s2704, 128
          %s2706 = scalar_lea.hbm %s7, %s2705
          %s2707 = sshll.u32 %s2697, 4
          %s2708 = int_to_ptr.vmem [resolvable:$true] %s2707
          %2713 = dma.vmem_to_hbm [thread:$0]  %s2708, 1024, %s2706, %s2694, 256, 256, 16
        $region71: #{tpu_custom_call.1} parent=47 // pred_fallthru
          _
      $region48: #{tpu_custom_call.1} parent=5 // pred_fallthru
        _
      %p2714 = scmp.le.s32.totalorder 2, %s18
      // Predicated region
      $region72: #{tpu_custom_call.1} parent=5 // pred_check
        %p2715 = pneg %p2714
      $region73: #{tpu_custom_call.1} parent=5 // pred_check_branch
        %2717 = sbr.rel (%p2715) target = $region75
      $region74: #{tpu_custom_call.1} parent=5 // pred_region
        %s2718 = ssub.s32 %s18, 2
        // Predicated region
        $region76: #{tpu_custom_call.1} parent=74 // pred_check
          %p2719 = pneg %p199
        $region77: #{tpu_custom_call.1} parent=74 // pred_check_branch
          %2721 = sbr.rel (%p2719) target = $region79
        $region78: #{tpu_custom_call.1} parent=74 // pred_region
          %s2722 = sand.u32 %s184, 1
          %s2723 = scalar_lea.sflag [#allocation7], %s2722
          %s2724 = sand.u32 %s184, 1
          %s2725 = smul.addr %s2724, 64
          %s2726 = scalar_lea.vmem [#allocation11], %s2725
          %2727 = dma.done %s2723, 1024
        $region79: #{tpu_custom_call.1} parent=74 // pred_fallthru
          _
      $region75: #{tpu_custom_call.1} parent=5 // pred_fallthru
        _
    $region6: #{tpu_custom_call.1} parent=1 // loop_footer
      %s22 = sadd.s32 1, %s18
    $region7: #{tpu_custom_call.1} parent=1 // loop_footer_branch
      %17 = sbr.rel target = $region3
    $region8: #{tpu_custom_call.1} parent=1 // loop_exit
      _
    %2728 = vsyncpa [#allocation6], 1
    %s2729 = scalar_lea.sflag [#allocation6], 1
    %2730 = vsyncpa %s2729, 1
    %2731 = vsyncpa [#allocation9], 1
    %2732 = vsyncpa [#allocation7], 1
    %s2733 = scalar_lea.sflag [#allocation7], 1
    %2734 = vsyncpa %s2733, 1

</llo_original>
